<compile_context>
chip_gen: v7x
topology: tpu7x:2x2x1
jax: 0.10.0
libtpu: 0.0.40
codegen_flags: <defaults>
</compile_context>

<pallas_src>
import jax
import jax.numpy as jnp
from jax.experimental import pallas as pl
from jax.experimental.pallas import tpu as pltpu

IN_FEATURES = 2048
OUT_FEATURES = 4096


def _linear_kernel(x_ref, w_ref, b_ref, o_ref):
    # x_ref: (tm, K) compute-dtype, w_ref: (K, tn) compute-dtype,
    # b_ref: (1, tn) f32, o_ref: (tm, tn) out-dtype.
    acc = jnp.dot(x_ref[...], w_ref[...], preferred_element_type=jnp.float32)
    o_ref[...] = (acc + b_ref[...]).astype(o_ref.dtype)


def prepare_params(weight, bias, *, compute_dtype=jnp.bfloat16):
    """One-time parameter prep (amortized to zero across calls).

    weight: PyTorch-layout (out_features, in_features) = (4096, 2048).
    Returns (w_t, b2d) with w_t = (K, N) in compute_dtype, b2d = (1, N) f32.
    """
    assert weight.shape == (OUT_FEATURES, IN_FEATURES), weight.shape
    assert bias.shape == (OUT_FEATURES,), bias.shape
    w_t = jnp.asarray(weight.T, dtype=compute_dtype)          # (K, N)
    b2d = jnp.asarray(bias, dtype=jnp.float32).reshape(1, OUT_FEATURES)
    return w_t, b2d


def mlp_forward(
    x,
    w_t,
    b2d,
    *,
    tn=1024,
    tm_max=512,
    compute_dtype=jnp.bfloat16,
    vmem_limit_bytes=48 * 1024 * 1024,
):
    """y = x.view(-1, 2048) @ W.T + b  (PyTorch nn.Linear semantics).

    w_t is the pre-transposed (K, N) weight from prepare_params; b2d is (1, N).
    """
    x2d = x.reshape(-1, IN_FEATURES)
    M = x2d.shape[0]
    K = IN_FEATURES
    N = OUT_FEATURES

    assert w_t.shape == (K, N), w_t.shape
    assert b2d.shape == (1, N), b2d.shape
    assert N % tn == 0, f"tn={tn} must divide N={N}"
    assert K % 128 == 0, f"K={K} must be lane-aligned"

    out_dtype = x.dtype
    # Single cheap cast pass over x (tiny vs the weight stream); halves the
    # in-kernel x re-reads and keeps both MXU operands in the native dtype.
    x2d = x2d.astype(compute_dtype)
    w_t = w_t.astype(compute_dtype)  # no-op when prepare_params already cast

    # M tiling: one full-extent block for small batches, else 512-row tiles.
    # tm=512 is sublane-aligned, so the ragged last block (if any) is legal and
    # Pallas masks its out-of-bounds output rows on store.
    tm = M if M <= tm_max else tm_max

    # Weight (N) axis OUTERMOST, M axis innermost: the weight / bias block
    # indices are constant across the inner loop, so Pallas skips their re-DMA.
    grid = (N // tn, pl.cdiv(M, tm))

    out = pl.pallas_call(
        _linear_kernel,
        out_shape=jax.ShapeDtypeStruct((M, N), out_dtype),
        grid_spec=pltpu.PrefetchScalarGridSpec(
            num_scalar_prefetch=0,
            grid=grid,
            in_specs=[
                # x tile: (tm, K) -- changes every inner step (small operand).
                pl.BlockSpec((tm, K), lambda j, i: (i, 0)),
                # weight tile: (K, tn) -- constant across the inner M loop.
                pl.BlockSpec((K, tn), lambda j, i: (0, j)),
                # bias tile: (1, tn) -- constant across the inner M loop.
                pl.BlockSpec((1, tn), lambda j, i: (0, j)),
            ],
            out_specs=pl.BlockSpec((tm, tn), lambda j, i: (i, j)),
        ),
        compiler_params=pltpu.CompilerParams(
            # N axis "parallel" so a v7x 2-core split partitions the weight;
            # inner M axis "arbitrary". No-op on single-core v5e/v6e.
            dimension_semantics=("parallel", "arbitrary"),
            vmem_limit_bytes=vmem_limit_bytes,
        ),
    )(x2d, w_t, b2d)

    return out


def reference_forward(x, weight, bias):
    x2d = x.reshape(-1, IN_FEATURES)
    return x2d @ weight.T + bias


if __name__ == "__main__":
    key = jax.random.PRNGKey(0)
    kx, kw, kb = jax.random.split(key, 3)

    # Deterministic parameter init (shapes from nn.Linear(2048, 4096)).
    bound = 1.0 / (IN_FEATURES ** 0.5)
    weight = jax.random.uniform(
        kw, (OUT_FEATURES, IN_FEATURES), jnp.float32, -bound, bound
    )
    bias = jax.random.uniform(kb, (OUT_FEATURES,), jnp.float32, -bound, bound)

    # Small input: (2, 2, 2048) -> view(-1, 2048) -> (4, 2048)
    x = jax.random.normal(kx, (2, 2, IN_FEATURES), jnp.float32)

    # One-time parameter prep (transpose + bf16 cast), then the kernel call.
    w_t, b2d = prepare_params(weight, bias)
    y = mlp_forward(x, w_t, b2d)
    jax.block_until_ready(y)

    y_ref = reference_forward(x, weight, bias)
    assert y.shape == (4, OUT_FEATURES), y.shape
    # bf16 operands with f32 accumulation over K=2048: observed error is a few
    # 1e-3 on ~unit-magnitude outputs, so 5e-2 tolerance is a comfortable bound.
    assert jnp.allclose(y.astype(jnp.float32), y_ref, atol=5e-2, rtol=5e-2), (
        "mismatch vs reference"
    )

    print("KERNEL_OK")
</pallas_src>

<mosaic_0001>
module attributes {stable_mosaic.version = 11 : i64} {
  func.func @_linear_kernel(%arg0: i32, %arg1: i32, %arg2: memref<4x2048xbf16, #tpu.memory_space<vmem>>, %arg3: memref<2048x1024xbf16, #tpu.memory_space<vmem>>, %arg4: memref<1x1024xf32, #tpu.memory_space<vmem>>, %arg5: memref<4x1024xf32, #tpu.memory_space<vmem>>) attributes {dimension_semantics = [#tpu.dimension_semantics<parallel>, #tpu.dimension_semantics<arbitrary>], iteration_bounds = array<i64: 4, 1>, scalar_prefetch = 0 : i64, scratch_operands = 0 : i64, tpu.core_type = #tpu.core_type<tc>, window_params = [{transform_indices = @transform_0, window_bounds = array<i64: 4, 2048>}, {transform_indices = @transform_1, window_bounds = array<i64: 2048, 1024>}, {transform_indices = @transform_2, window_bounds = array<i64: 1, 1024>}, {transform_indices = @transform_3, window_bounds = array<i64: 4, 1024>}]} {
    %c0 = arith.constant 0 : index
    %c0_0 = arith.constant 0 : index
    %0 = vector.load %arg2[%c0, %c0_0] : memref<4x2048xbf16, #tpu.memory_space<vmem>>, vector<4x2048xbf16>
    %c0_1 = arith.constant 0 : index
    %c0_2 = arith.constant 0 : index
    %1 = vector.load %arg3[%c0_1, %c0_2] : memref<2048x1024xbf16, #tpu.memory_space<vmem>>, vector<2048x1024xbf16>
    %cst = arith.constant dense<0.000000e+00> : vector<4x1024xf32>
    %2 = tpu.matmul %0, %1, %cst {dimension_numbers = #tpu.dot_dimension_numbers<[1], [0], [0], [1], [0, 0, 1, 1], [], []>} : vector<4x2048xbf16>, vector<2048x1024xbf16>, vector<4x1024xf32> -> vector<4x1024xf32>
    %c0_3 = arith.constant 0 : index
    %c0_4 = arith.constant 0 : index
    %3 = vector.load %arg4[%c0_3, %c0_4] : memref<1x1024xf32, #tpu.memory_space<vmem>>, vector<1x1024xf32>
    %4 = vector.broadcast %3 : vector<1x1024xf32> to vector<4x1024xf32>
    %5 = arith.addf %2, %4 : vector<4x1024xf32>
    %c0_5 = arith.constant 0 : index
    %c0_6 = arith.constant 0 : index
    %6 = vector.load %arg5[%c0_5, %c0_6] : memref<4x1024xf32, #tpu.memory_space<vmem>>, vector<4x1024xf32>
    tpu.vector_store %arg5[%c0_5, %c0_6], %5 {strides = array<i32>} : memref<4x1024xf32, #tpu.memory_space<vmem>>, vector<4x1024xf32>,
    return
  }
  func.func @transform_0(%arg0: i32, %arg1: i32) -> (i32, i32) {
    %c0_i32 = arith.constant 0 : i32
    %c0_i32_0 = arith.constant 0 : i32
    return %arg1, %c0_i32 : i32, i32
  }
  func.func @transform_1(%arg0: i32, %arg1: i32) -> (i32, i32) {
    %c0_i32 = arith.constant 0 : i32
    %c0_i32_0 = arith.constant 0 : i32
    return %c0_i32, %arg0 : i32, i32
  }
  func.func @transform_2(%arg0: i32, %arg1: i32) -> (i32, i32) {
    %c0_i32 = arith.constant 0 : i32
    %c0_i32_0 = arith.constant 0 : i32
    return %c0_i32, %arg0 : i32, i32
  }
  func.func @transform_3(%arg0: i32, %arg1: i32) -> (i32, i32) {
    %c0_i32 = arith.constant 0 : i32
    return %arg1, %arg0 : i32, i32
  }
}

</mosaic_0001>

<llo_original>
// kernel: tpu_custom_call.1
$region0: #{tpu_custom_call.1}
  #allocation0 [shape = 'u32[]', space=smem, size = 0x4, offset = 0x4, fixed_abs, tag = 'smem constant byte address 0x4 - core index']
  #allocation1 [shape = 'u32[144,128]{1,0:T(1,128)}', space=vmem, size = 0x12000, scoped, tag = 'internal scratch']
  %s0 = inlined_call_operand.hbm [shape: bf16[4,2048], index: 0, kind: input, shape index: {}]
  %s1 = inlined_call_operand.hbm [shape: bf16[2048,4096], index: 1, kind: input, shape index: {}]
  %s2 = inlined_call_operand.hbm [shape: f32[1,4096], index: 2, kind: input, shape index: {}]
  %s3 = inlined_call_operand.hbm [shape: f32[4,4096], index: 3, kind: output, shape index: {}]
  %s4 = sld [smem:[#allocation0]]
  $region57: #{tpu_custom_call.1} parent=0
    _
  %s6 = ssub.s32 1, %s4
  %s7 = scalar_select 0, %s6, %s4
  $region1: #{tpu_custom_call.1} parent=0
    #allocation2 [shape = 'u8[16384]{0}', space=vmem, size = 0x4000, scoped, tag = 'input window, operand 0, single buffered']
    #allocation3 [shape = 's32[2]{0}', space=sflag, size = 0x8, scoped, tag = 'scoped memory for tpu_custom_call.1']
    #allocation4 [shape = 's32[2]{0}', space=sflag, size = 0x8, scoped, tag = 'scoped memory for tpu_custom_call.1']
    #allocation5 [shape = 'u8[8388608]{0}', space=vmem, size = 0x800000, scoped, tag = 'input window, operand 1']
    #allocation6 [shape = 's32[2]{0}', space=sflag, size = 0x8, scoped, tag = 'scoped memory for tpu_custom_call.1']
    #allocation7 [shape = 'u8[8192]{0}', space=vmem, size = 0x2000, scoped, tag = 'input window, operand 2']
    #allocation8 [shape = 'u8[32768]{0}', space=vmem, size = 0x8000, scoped, tag = 'output window, operand 0']
    %8 = vsyncpa [#allocation3], 0
    %9 = vsyncpa [#allocation6], 0
    %s10 = scalar_lea.sflag [#allocation6], 1
    %11 = vsyncpa %s10, 0
    %12 = vsyncpa [#allocation4], 0
    %s13 = scalar_lea.sflag [#allocation4], 1
    %14 = vsyncpa %s13, 0
    loop: start=0, step=1, limit=6
    $region2: #{tpu_custom_call.1} parent=1 // loop_pre_header
      _
    $region3: #{tpu_custom_call.1} parent=1 // loop_header
      %s16 = sphi 0, %s20
      %p17 = scmp.ge.s32.totalorder %s16, 6
      %s23 = sphi 0, %s35
      %s24 = sphi 0, %s31
      %s25 = sphi 0, %s23
      %s26 = sphi 0, %s24
      %s27 = sphi 0, %s25
      %s28 = sphi 0, %s26
      %s38 = sphi 0, %s40
      %s41 = sphi 0, %s38
      %s42 = sphi 0, %s41
      %s58 = sphi 0, %s42
      %s64 = sphi 0, %s66
      %s67 = sphi 0, %s64
      %s68 = sphi 0, %s67
      %s84 = sphi 0, %s68
      %s90 = sphi 0, %s92
      %s93 = sphi 0, %s90
      %s94 = sphi 0, %s93
      %s110 = sphi 0, %s94
      %s118 = sphi 0, %s120
      %s121 = sphi 0, %s118
      %s122 = sphi 0, %s121
      %s138 = sphi 0, %s122
    $region4: #{tpu_custom_call.1} parent=1 // loop_header_branch
      %19 = sbr.rel (%p17) target = $region8
    $region5: #{tpu_custom_call.1} parent=1 // loop_body
      %s21 = ssub.s32 %s16, 1
      %s22 = ssub.s32 %s16, 2
      %s29 = sadd.s32 1, %s24
      %p30 = scmp.ge.s32.totalorder %s29, 1
      %s31 = scalar_select %p30, 0, %s29
      %s32 = sadd.s32 1, %s23
      %s33 = scalar_select %p30, %s32, %s23
      %p34 = scmp.ge.s32.totalorder %s33, 4
      %s35 = scalar_select %p34, 0, %s33
      %s36 = ssub.s32 %s24, %s31
      %p37 = scmp.eq.s32.totalorder %s36, 0
      %s39 = sadd.s32 %s38, 1
      %s40 = scalar_select %p37, %s38, %s39
      %p43 = pneg %p37
      %p44 = scmp.eq.s32.totalorder %s16, 3
      %p45 = por %p43, %p44
      %p46 = scmp.ne.s32.totalorder %s38, %s41
      %p47 = scmp.eq.s32.totalorder %s16, 0
      %p48 = por %p46, %p47
      %p49 = scmp.ne.s32.totalorder %s38, %s41
      %p50 = scmp.eq.s32.totalorder %s21, 3
      %p51 = por %p49, %p50
      %p52 = scmp.ne.s32.totalorder %s41, %s42
      %p53 = scmp.eq.s32.totalorder %s21, 0
      %p54 = por %p52, %p53
      %p55 = scmp.ne.s32.totalorder %s41, %s42
      %p56 = scmp.eq.s32.totalorder %s22, 3
      %p57 = por %p55, %p56
      %p59 = scmp.ne.s32.totalorder %s42, %s58
      %p60 = scmp.eq.s32.totalorder %s22, 0
      %p61 = por %p59, %p60
      %s62 = ssub.s32 %s23, %s35
      %p63 = scmp.eq.s32.totalorder %s62, 0
      %s65 = sadd.s32 %s64, 1
      %s66 = scalar_select %p63, %s64, %s65
      %p69 = pneg %p63
      %p70 = scmp.eq.s32.totalorder %s16, 3
      %p71 = por %p69, %p70
      %p72 = scmp.ne.s32.totalorder %s64, %s67
      %p73 = scmp.eq.s32.totalorder %s16, 0
      %p74 = por %p72, %p73
      %p75 = scmp.ne.s32.totalorder %s64, %s67
      %p76 = scmp.eq.s32.totalorder %s21, 3
      %p77 = por %p75, %p76
      %p78 = scmp.ne.s32.totalorder %s67, %s68
      %p79 = scmp.eq.s32.totalorder %s21, 0
      %p80 = por %p78, %p79
      %p81 = scmp.ne.s32.totalorder %s67, %s68
      %p82 = scmp.eq.s32.totalorder %s22, 3
      %p83 = por %p81, %p82
      %p85 = scmp.ne.s32.totalorder %s68, %s84
      %p86 = scmp.eq.s32.totalorder %s22, 0
      %p87 = por %p85, %p86
      %s88 = ssub.s32 %s23, %s35
      %p89 = scmp.eq.s32.totalorder %s88, 0
      %s91 = sadd.s32 %s90, 1
      %s92 = scalar_select %p89, %s90, %s91
      %p95 = pneg %p89
      %p96 = scmp.eq.s32.totalorder %s16, 3
      %p97 = por %p95, %p96
      %p98 = scmp.ne.s32.totalorder %s90, %s93
      %p99 = scmp.eq.s32.totalorder %s16, 0
      %p100 = por %p98, %p99
      %p101 = scmp.ne.s32.totalorder %s90, %s93
      %p102 = scmp.eq.s32.totalorder %s21, 3
      %p103 = por %p101, %p102
      %p104 = scmp.ne.s32.totalorder %s93, %s94
      %p105 = scmp.eq.s32.totalorder %s21, 0
      %p106 = por %p104, %p105
      %p107 = scmp.ne.s32.totalorder %s93, %s94
      %p108 = scmp.eq.s32.totalorder %s22, 3
      %p109 = por %p107, %p108
      %p111 = scmp.ne.s32.totalorder %s94, %s110
      %p112 = scmp.eq.s32.totalorder %s22, 0
      %p113 = por %p111, %p112
      %s114 = ssub.s32 %s24, %s31
      %s115 = ssub.s32 %s23, %s35
      %s116 = sor.u32 %s114, %s115
      %p117 = scmp.eq.s32.totalorder %s116, 0
      %s119 = sadd.s32 %s118, 1
      %s120 = scalar_select %p117, %s118, %s119
      %p123 = pneg %p117
      %p124 = scmp.eq.s32.totalorder %s16, 3
      %p125 = por %p123, %p124
      %p126 = scmp.ne.s32.totalorder %s118, %s121
      %p127 = scmp.eq.s32.totalorder %s16, 0
      %p128 = por %p126, %p127
      %p129 = scmp.ne.s32.totalorder %s118, %s121
      %p130 = scmp.eq.s32.totalorder %s21, 3
      %p131 = por %p129, %p130
      %p132 = scmp.ne.s32.totalorder %s121, %s122
      %p133 = scmp.eq.s32.totalorder %s21, 0
      %p134 = por %p132, %p133
      %p135 = scmp.ne.s32.totalorder %s121, %s122
      %p136 = scmp.eq.s32.totalorder %s22, 3
      %p137 = por %p135, %p136
      %p139 = scmp.ne.s32.totalorder %s122, %s138
      %p140 = scmp.eq.s32.totalorder %s22, 0
      %p141 = por %p139, %p140
      %p142 = scmp.le.s32.totalorder 1, %s16
      %p143 = scmp.lt.s32.totalorder %s16, 5
      %p144 = pnand %p142, %p143
      %p145 = pneg %p144
      // Predicated region
      $region9: #{tpu_custom_call.1} parent=5 // pred_check
        _
      $region10: #{tpu_custom_call.1} parent=5 // pred_check_branch
        %147 = sbr.rel (%p144) target = $region12
      $region11: #{tpu_custom_call.1} parent=5 // pred_region
        %s148 = ssub.s32 %s16, 1
        // Predicated region
        $region13: #{tpu_custom_call.1} parent=11 // pred_check
          %p149 = pneg %p54
        $region14: #{tpu_custom_call.1} parent=11 // pred_check_branch
          %151 = sbr.rel (%p149) target = $region16
        $region15: #{tpu_custom_call.1} parent=11 // pred_region
          %s153 = ssub.s32 512, 512
          %154 = vsyncadd [#allocation3], %s153
          %s155 = smul.addr %s26, 16
          %s156 = smul.addr %s155, 32
          %s157 = scalar_lea.hbm %s0, %s156
          %s159 = sshll.u32 [#allocation2], 4
          %s160 = int_to_ptr.vmem [resolvable:$true] %s159
          %162 = dma.hbm_to_vmem [thread:$0]  %s157, 512, %s160, [#allocation3]
        $region16: #{tpu_custom_call.1} parent=11 // pred_fallthru
          _
      $region12: #{tpu_custom_call.1} parent=5 // pred_fallthru
        _
      %p163 = scmp.lt.s32.totalorder %s16, 4
      // Predicated region
      $region17: #{tpu_custom_call.1} parent=5 // pred_check
        %p164 = pneg %p163
      $region18: #{tpu_custom_call.1} parent=5 // pred_check_branch
        %166 = sbr.rel (%p164) target = $region20
      $region19: #{tpu_custom_call.1} parent=5 // pred_region
        // Predicated region
        $region21: #{tpu_custom_call.1} parent=19 // pred_check
          %p167 = pneg %p74
        $region22: #{tpu_custom_call.1} parent=19 // pred_check_branch
          %169 = sbr.rel (%p167) target = $region24
        $region23: #{tpu_custom_call.1} parent=19 // pred_region
          %s170 = sand.u32 %s16, 1
          %s171 = scalar_lea.sflag [#allocation6], %s170
          %s172 = sand.u32 %s64, 1
          %s173 = smul.addr %s172, 8192
          %s174 = scalar_lea.vmem [#allocation5], %s173
          %s175 = smul.u32 8, %s23
          %s177 = ssub.s32 131072, 131072
          %178 = vsyncadd %s171, %s177
          %s179 = smul.addr %s175, 64
          %s180 = scalar_lea.hbm %s1, %s179
          %s181 = sshll.u32 %s174, 4
          %s182 = int_to_ptr.vmem [resolvable:$true] %s181
          %187 = dma.hbm_to_vmem [thread:$0]  %s180, 131072, %s182, %s171, 2048, 512, 32
        $region24: #{tpu_custom_call.1} parent=19 // pred_fallthru
          _
        // Predicated region
        $region25: #{tpu_custom_call.1} parent=19 // pred_check
          %p188 = pneg %p100
        $region26: #{tpu_custom_call.1} parent=19 // pred_check_branch
          %190 = sbr.rel (%p188) target = $region28
        $region27: #{tpu_custom_call.1} parent=19 // pred_region
          %s191 = sand.u32 %s16, 1
          %s192 = scalar_lea.sflag [#allocation6], %s191
          %s193 = sand.u32 %s90, 1
          %s194 = smul.addr %s193, 8
          %s195 = scalar_lea.vmem [#allocation7], %s194
          %s196 = smul.u32 8, %s23
          %s198 = ssub.s32 128, 128
          %199 = vsyncadd %s192, %s198
          %s200 = smul.addr %s196, 16
          %s201 = scalar_lea.hbm %s2, %s200
          %s203 = sshll.u32 %s195, 4
          %s204 = int_to_ptr.vmem [resolvable:$true] %s203
          %206 = dma.hbm_to_vmem [thread:$0]  %s201, 128, %s204, %s192
        $region28: #{tpu_custom_call.1} parent=19 // pred_fallthru
          _
      $region20: #{tpu_custom_call.1} parent=5 // pred_fallthru
        _
      %p207 = scmp.le.s32.totalorder 1, %s16
      %p208 = scmp.lt.s32.totalorder %s16, 5
      %p209 = pnand %p207, %p208
      %p210 = pneg %p209
      // Predicated region
      $region29: #{tpu_custom_call.1} parent=5 // pred_check
        _
      $region30: #{tpu_custom_call.1} parent=5 // pred_check_branch
        %212 = sbr.rel (%p209) target = $region32
      $region31: #{tpu_custom_call.1} parent=5 // pred_region
        %s213 = ssub.s32 %s16, 1
        // Predicated region
        $region33: #{tpu_custom_call.1} parent=31 // pred_check
          %p214 = pneg %p54
        $region34: #{tpu_custom_call.1} parent=31 // pred_check_branch
          %216 = sbr.rel (%p214) target = $region36
        $region35: #{tpu_custom_call.1} parent=31 // pred_region
          %217 = dma.done [#allocation3], 512
        $region36: #{tpu_custom_call.1} parent=31 // pred_fallthru
          _
        %s218 = sand.u32 %s21, 1
        %s219 = scalar_lea.sflag [#allocation6], %s218
        %s220 = sand.u32 %s67, 1
        %s221 = smul.addr %s220, 8192
        %s222 = scalar_lea.vmem [#allocation5], %s221
        // Predicated region
        $region37: #{tpu_custom_call.1} parent=31 // pred_check
          %p223 = pneg %p80
        $region38: #{tpu_custom_call.1} parent=31 // pred_check_branch
          %225 = sbr.rel (%p223) target = $region40
        $region39: #{tpu_custom_call.1} parent=31 // pred_region
          %226 = dma.done %s219, 131072
        $region40: #{tpu_custom_call.1} parent=31 // pred_fallthru
          _
        %s227 = sand.u32 %s21, 1
        %s228 = scalar_lea.sflag [#allocation6], %s227
        %s229 = sand.u32 %s93, 1
        %s230 = smul.addr %s229, 8
        %s231 = scalar_lea.vmem [#allocation7], %s230
        // Predicated region
        $region41: #{tpu_custom_call.1} parent=31 // pred_check
          %p232 = pneg %p106
        $region42: #{tpu_custom_call.1} parent=31 // pred_check_branch
          %234 = sbr.rel (%p232) target = $region44
        $region43: #{tpu_custom_call.1} parent=31 // pred_region
          %235 = dma.done %s228, 128
        $region44: #{tpu_custom_call.1} parent=31 // pred_fallthru
          _
        %p236 = pneg %p54
        %p237 = pneg %p51
        %s238 = sand.u32 %s21, 1
        %s239 = scalar_lea.sflag [#allocation6], %s238
        %s240 = sand.u32 %s67, 1
        %s241 = smul.addr %s240, 8192
        %s242 = scalar_lea.vmem [#allocation5], %s241
        %p243 = pneg %p80
        %p244 = pneg %p77
        %s245 = sand.u32 %s21, 1
        %s246 = scalar_lea.sflag [#allocation6], %s245
        %s247 = sand.u32 %s93, 1
        %s248 = smul.addr %s247, 8
        %s249 = scalar_lea.vmem [#allocation7], %s248
        %p250 = pneg %p106
        %p251 = pneg %p103
        %p252 = pneg %p134
        %p253 = pneg %p131
        %s254 = sand.u32 %s121, 1
        %s255 = scalar_lea.sflag [#allocation4], %s254
        %s256 = sand.u32 %s121, 1
        %s257 = smul.addr %s256, 32
        %s258 = scalar_lea.vmem [#allocation8], %s257
        %s259 = smul.u32 8, %s25
        %s260 = smul.u32 8, %s25
        %s261 = smul.u32 8, %s25
        %v262 = vld [vmem:[#allocation2] sm:$0xff]
        %v263 = vld [vmem:[#allocation2 + $0x8] sm:$0xff]
        %v264 = vld [vmem:[#allocation2 + $0x10] sm:$0xff]
        %v265 = vld [vmem:[#allocation2 + $0x18] sm:$0xff]
        %v266 = vld [vmem:[%s222] sm:$0xff]
        %v267 = vld [vmem:[%s222 + $0x8] sm:$0xff]
        %v268 = vld [vmem:[%s222 + $0x10] sm:$0xff]
        %v269 = vld [vmem:[%s222 + $0x18] sm:$0xff]
        %v270 = vld [vmem:[%s222 + $0x20] sm:$0xff]
        %v271 = vld [vmem:[%s222 + $0x28] sm:$0xff]
        %v272 = vld [vmem:[%s222 + $0x30] sm:$0xff]
        %v273 = vld [vmem:[%s222 + $0x38] sm:$0xff]
        %v274 = vld [vmem:[%s222 + $0x40] sm:$0xff]
        %v275 = vld [vmem:[%s222 + $0x48] sm:$0xff]
        %v276 = vld [vmem:[%s222 + $0x50] sm:$0xff]
        %v277 = vld [vmem:[%s222 + $0x58] sm:$0xff]
        %v278 = vld [vmem:[%s222 + $0x60] sm:$0xff]
        %v279 = vld [vmem:[%s222 + $0x68] sm:$0xff]
        %v280 = vld [vmem:[%s222 + $0x70] sm:$0xff]
        %v281 = vld [vmem:[%s222 + $0x78] sm:$0xff]
        %v282 = vld [vmem:[%s222 + $0x80] sm:$0xff]
        %v283 = vld [vmem:[%s222 + $0x88] sm:$0xff]
        %v284 = vld [vmem:[%s222 + $0x90] sm:$0xff]
        %v285 = vld [vmem:[%s222 + $0x98] sm:$0xff]
        %v286 = vld [vmem:[%s222 + $0xa0] sm:$0xff]
        %v287 = vld [vmem:[%s222 + $0xa8] sm:$0xff]
        %v288 = vld [vmem:[%s222 + $0xb0] sm:$0xff]
        %v289 = vld [vmem:[%s222 + $0xb8] sm:$0xff]
        %v290 = vld [vmem:[%s222 + $0xc0] sm:$0xff]
        %v291 = vld [vmem:[%s222 + $0xc8] sm:$0xff]
        %v292 = vld [vmem:[%s222 + $0xd0] sm:$0xff]
        %v293 = vld [vmem:[%s222 + $0xd8] sm:$0xff]
        %v294 = vld [vmem:[%s222 + $0xe0] sm:$0xff]
        %v295 = vld [vmem:[%s222 + $0xe8] sm:$0xff]
        %v296 = vld [vmem:[%s222 + $0xf0] sm:$0xff]
        %v297 = vld [vmem:[%s222 + $0xf8] sm:$0xff]
        %v298 = vld [vmem:[%s222 + $0x100] sm:$0xff]
        %v299 = vld [vmem:[%s222 + $0x108] sm:$0xff]
        %v300 = vld [vmem:[%s222 + $0x110] sm:$0xff]
        %v301 = vld [vmem:[%s222 + $0x118] sm:$0xff]
        %v302 = vld [vmem:[%s222 + $0x120] sm:$0xff]
        %v303 = vld [vmem:[%s222 + $0x128] sm:$0xff]
        %v304 = vld [vmem:[%s222 + $0x130] sm:$0xff]
        %v305 = vld [vmem:[%s222 + $0x138] sm:$0xff]
        %v306 = vld [vmem:[%s222 + $0x140] sm:$0xff]
        %v307 = vld [vmem:[%s222 + $0x148] sm:$0xff]
        %v308 = vld [vmem:[%s222 + $0x150] sm:$0xff]
        %v309 = vld [vmem:[%s222 + $0x158] sm:$0xff]
        %v310 = vld [vmem:[%s222 + $0x160] sm:$0xff]
        %v311 = vld [vmem:[%s222 + $0x168] sm:$0xff]
        %v312 = vld [vmem:[%s222 + $0x170] sm:$0xff]
        %v313 = vld [vmem:[%s222 + $0x178] sm:$0xff]
        %v314 = vld [vmem:[%s222 + $0x180] sm:$0xff]
        %v315 = vld [vmem:[%s222 + $0x188] sm:$0xff]
        %v316 = vld [vmem:[%s222 + $0x190] sm:$0xff]
        %v317 = vld [vmem:[%s222 + $0x198] sm:$0xff]
        %v318 = vld [vmem:[%s222 + $0x1a0] sm:$0xff]
        %v319 = vld [vmem:[%s222 + $0x1a8] sm:$0xff]
        %v320 = vld [vmem:[%s222 + $0x1b0] sm:$0xff]
        %v321 = vld [vmem:[%s222 + $0x1b8] sm:$0xff]
        %v322 = vld [vmem:[%s222 + $0x1c0] sm:$0xff]
        %v323 = vld [vmem:[%s222 + $0x1c8] sm:$0xff]
        %v324 = vld [vmem:[%s222 + $0x1d0] sm:$0xff]
        %v325 = vld [vmem:[%s222 + $0x1d8] sm:$0xff]
        %v326 = vld [vmem:[%s222 + $0x1e0] sm:$0xff]
        %v327 = vld [vmem:[%s222 + $0x1e8] sm:$0xff]
        %v328 = vld [vmem:[%s222 + $0x1f0] sm:$0xff]
        %v329 = vld [vmem:[%s222 + $0x1f8] sm:$0xff]
        %v330 = vld [vmem:[%s222 + $0x200] sm:$0xff]
        %v331 = vld [vmem:[%s222 + $0x208] sm:$0xff]
        %v332 = vld [vmem:[%s222 + $0x210] sm:$0xff]
        %v333 = vld [vmem:[%s222 + $0x218] sm:$0xff]
        %v334 = vld [vmem:[%s222 + $0x220] sm:$0xff]
        %v335 = vld [vmem:[%s222 + $0x228] sm:$0xff]
        %v336 = vld [vmem:[%s222 + $0x230] sm:$0xff]
        %v337 = vld [vmem:[%s222 + $0x238] sm:$0xff]
        %v338 = vld [vmem:[%s222 + $0x240] sm:$0xff]
        %v339 = vld [vmem:[%s222 + $0x248] sm:$0xff]
        %v340 = vld [vmem:[%s222 + $0x250] sm:$0xff]
        %v341 = vld [vmem:[%s222 + $0x258] sm:$0xff]
        %v342 = vld [vmem:[%s222 + $0x260] sm:$0xff]
        %v343 = vld [vmem:[%s222 + $0x268] sm:$0xff]
        %v344 = vld [vmem:[%s222 + $0x270] sm:$0xff]
        %v345 = vld [vmem:[%s222 + $0x278] sm:$0xff]
        %v346 = vld [vmem:[%s222 + $0x280] sm:$0xff]
        %v347 = vld [vmem:[%s222 + $0x288] sm:$0xff]
        %v348 = vld [vmem:[%s222 + $0x290] sm:$0xff]
        %v349 = vld [vmem:[%s222 + $0x298] sm:$0xff]
        %v350 = vld [vmem:[%s222 + $0x2a0] sm:$0xff]
        %v351 = vld [vmem:[%s222 + $0x2a8] sm:$0xff]
        %v352 = vld [vmem:[%s222 + $0x2b0] sm:$0xff]
        %v353 = vld [vmem:[%s222 + $0x2b8] sm:$0xff]
        %v354 = vld [vmem:[%s222 + $0x2c0] sm:$0xff]
        %v355 = vld [vmem:[%s222 + $0x2c8] sm:$0xff]
        %v356 = vld [vmem:[%s222 + $0x2d0] sm:$0xff]
        %v357 = vld [vmem:[%s222 + $0x2d8] sm:$0xff]
        %v358 = vld [vmem:[%s222 + $0x2e0] sm:$0xff]
        %v359 = vld [vmem:[%s222 + $0x2e8] sm:$0xff]
        %v360 = vld [vmem:[%s222 + $0x2f0] sm:$0xff]
        %v361 = vld [vmem:[%s222 + $0x2f8] sm:$0xff]
        %v362 = vld [vmem:[%s222 + $0x300] sm:$0xff]
        %v363 = vld [vmem:[%s222 + $0x308] sm:$0xff]
        %v364 = vld [vmem:[%s222 + $0x310] sm:$0xff]
        %v365 = vld [vmem:[%s222 + $0x318] sm:$0xff]
        %v366 = vld [vmem:[%s222 + $0x320] sm:$0xff]
        %v367 = vld [vmem:[%s222 + $0x328] sm:$0xff]
        %v368 = vld [vmem:[%s222 + $0x330] sm:$0xff]
        %v369 = vld [vmem:[%s222 + $0x338] sm:$0xff]
        %v370 = vld [vmem:[%s222 + $0x340] sm:$0xff]
        %v371 = vld [vmem:[%s222 + $0x348] sm:$0xff]
        %v372 = vld [vmem:[%s222 + $0x350] sm:$0xff]
        %v373 = vld [vmem:[%s222 + $0x358] sm:$0xff]
        %v374 = vld [vmem:[%s222 + $0x360] sm:$0xff]
        %v375 = vld [vmem:[%s222 + $0x368] sm:$0xff]
        %v376 = vld [vmem:[%s222 + $0x370] sm:$0xff]
        %v377 = vld [vmem:[%s222 + $0x378] sm:$0xff]
        %v378 = vld [vmem:[%s222 + $0x380] sm:$0xff]
        %v379 = vld [vmem:[%s222 + $0x388] sm:$0xff]
        %v380 = vld [vmem:[%s222 + $0x390] sm:$0xff]
        %v381 = vld [vmem:[%s222 + $0x398] sm:$0xff]
        %v382 = vld [vmem:[%s222 + $0x3a0] sm:$0xff]
        %v383 = vld [vmem:[%s222 + $0x3a8] sm:$0xff]
        %v384 = vld [vmem:[%s222 + $0x3b0] sm:$0xff]
        %v385 = vld [vmem:[%s222 + $0x3b8] sm:$0xff]
        %v386 = vld [vmem:[%s222 + $0x3c0] sm:$0xff]
        %v387 = vld [vmem:[%s222 + $0x3c8] sm:$0xff]
        %v388 = vld [vmem:[%s222 + $0x3d0] sm:$0xff]
        %v389 = vld [vmem:[%s222 + $0x3d8] sm:$0xff]
        %v390 = vld [vmem:[%s222 + $0x3e0] sm:$0xff]
        %v391 = vld [vmem:[%s222 + $0x3e8] sm:$0xff]
        %v392 = vld [vmem:[%s222 + $0x3f0] sm:$0xff]
        %v393 = vld [vmem:[%s222 + $0x3f8] sm:$0xff]
        %v394 = vld [vmem:[%s222 + $0x400] sm:$0xff]
        %v395 = vld [vmem:[%s222 + $0x408] sm:$0xff]
        %v396 = vld [vmem:[%s222 + $0x410] sm:$0xff]
        %v397 = vld [vmem:[%s222 + $0x418] sm:$0xff]
        %v398 = vld [vmem:[%s222 + $0x420] sm:$0xff]
        %v399 = vld [vmem:[%s222 + $0x428] sm:$0xff]
        %v400 = vld [vmem:[%s222 + $0x430] sm:$0xff]
        %v401 = vld [vmem:[%s222 + $0x438] sm:$0xff]
        %v402 = vld [vmem:[%s222 + $0x440] sm:$0xff]
        %v403 = vld [vmem:[%s222 + $0x448] sm:$0xff]
        %v404 = vld [vmem:[%s222 + $0x450] sm:$0xff]
        %v405 = vld [vmem:[%s222 + $0x458] sm:$0xff]
        %v406 = vld [vmem:[%s222 + $0x460] sm:$0xff]
        %v407 = vld [vmem:[%s222 + $0x468] sm:$0xff]
        %v408 = vld [vmem:[%s222 + $0x470] sm:$0xff]
        %v409 = vld [vmem:[%s222 + $0x478] sm:$0xff]
        %v410 = vld [vmem:[%s222 + $0x480] sm:$0xff]
        %v411 = vld [vmem:[%s222 + $0x488] sm:$0xff]
        %v412 = vld [vmem:[%s222 + $0x490] sm:$0xff]
        %v413 = vld [vmem:[%s222 + $0x498] sm:$0xff]
        %v414 = vld [vmem:[%s222 + $0x4a0] sm:$0xff]
        %v415 = vld [vmem:[%s222 + $0x4a8] sm:$0xff]
        %v416 = vld [vmem:[%s222 + $0x4b0] sm:$0xff]
        %v417 = vld [vmem:[%s222 + $0x4b8] sm:$0xff]
        %v418 = vld [vmem:[%s222 + $0x4c0] sm:$0xff]
        %v419 = vld [vmem:[%s222 + $0x4c8] sm:$0xff]
        %v420 = vld [vmem:[%s222 + $0x4d0] sm:$0xff]
        %v421 = vld [vmem:[%s222 + $0x4d8] sm:$0xff]
        %v422 = vld [vmem:[%s222 + $0x4e0] sm:$0xff]
        %v423 = vld [vmem:[%s222 + $0x4e8] sm:$0xff]
        %v424 = vld [vmem:[%s222 + $0x4f0] sm:$0xff]
        %v425 = vld [vmem:[%s222 + $0x4f8] sm:$0xff]
        %v426 = vld [vmem:[%s222 + $0x500] sm:$0xff]
        %v427 = vld [vmem:[%s222 + $0x508] sm:$0xff]
        %v428 = vld [vmem:[%s222 + $0x510] sm:$0xff]
        %v429 = vld [vmem:[%s222 + $0x518] sm:$0xff]
        %v430 = vld [vmem:[%s222 + $0x520] sm:$0xff]
        %v431 = vld [vmem:[%s222 + $0x528] sm:$0xff]
        %v432 = vld [vmem:[%s222 + $0x530] sm:$0xff]
        %v433 = vld [vmem:[%s222 + $0x538] sm:$0xff]
        %v434 = vld [vmem:[%s222 + $0x540] sm:$0xff]
        %v435 = vld [vmem:[%s222 + $0x548] sm:$0xff]
        %v436 = vld [vmem:[%s222 + $0x550] sm:$0xff]
        %v437 = vld [vmem:[%s222 + $0x558] sm:$0xff]
        %v438 = vld [vmem:[%s222 + $0x560] sm:$0xff]
        %v439 = vld [vmem:[%s222 + $0x568] sm:$0xff]
        %v440 = vld [vmem:[%s222 + $0x570] sm:$0xff]
        %v441 = vld [vmem:[%s222 + $0x578] sm:$0xff]
        %v442 = vld [vmem:[%s222 + $0x580] sm:$0xff]
        %v443 = vld [vmem:[%s222 + $0x588] sm:$0xff]
        %v444 = vld [vmem:[%s222 + $0x590] sm:$0xff]
        %v445 = vld [vmem:[%s222 + $0x598] sm:$0xff]
        %v446 = vld [vmem:[%s222 + $0x5a0] sm:$0xff]
        %v447 = vld [vmem:[%s222 + $0x5a8] sm:$0xff]
        %v448 = vld [vmem:[%s222 + $0x5b0] sm:$0xff]
        %v449 = vld [vmem:[%s222 + $0x5b8] sm:$0xff]
        %v450 = vld [vmem:[%s222 + $0x5c0] sm:$0xff]
        %v451 = vld [vmem:[%s222 + $0x5c8] sm:$0xff]
        %v452 = vld [vmem:[%s222 + $0x5d0] sm:$0xff]
        %v453 = vld [vmem:[%s222 + $0x5d8] sm:$0xff]
        %v454 = vld [vmem:[%s222 + $0x5e0] sm:$0xff]
        %v455 = vld [vmem:[%s222 + $0x5e8] sm:$0xff]
        %v456 = vld [vmem:[%s222 + $0x5f0] sm:$0xff]
        %v457 = vld [vmem:[%s222 + $0x5f8] sm:$0xff]
        %v458 = vld [vmem:[%s222 + $0x600] sm:$0xff]
        %v459 = vld [vmem:[%s222 + $0x608] sm:$0xff]
        %v460 = vld [vmem:[%s222 + $0x610] sm:$0xff]
        %v461 = vld [vmem:[%s222 + $0x618] sm:$0xff]
        %v462 = vld [vmem:[%s222 + $0x620] sm:$0xff]
        %v463 = vld [vmem:[%s222 + $0x628] sm:$0xff]
        %v464 = vld [vmem:[%s222 + $0x630] sm:$0xff]
        %v465 = vld [vmem:[%s222 + $0x638] sm:$0xff]
        %v466 = vld [vmem:[%s222 + $0x640] sm:$0xff]
        %v467 = vld [vmem:[%s222 + $0x648] sm:$0xff]
        %v468 = vld [vmem:[%s222 + $0x650] sm:$0xff]
        %v469 = vld [vmem:[%s222 + $0x658] sm:$0xff]
        %v470 = vld [vmem:[%s222 + $0x660] sm:$0xff]
        %v471 = vld [vmem:[%s222 + $0x668] sm:$0xff]
        %v472 = vld [vmem:[%s222 + $0x670] sm:$0xff]
        %v473 = vld [vmem:[%s222 + $0x678] sm:$0xff]
        %v474 = vld [vmem:[%s222 + $0x680] sm:$0xff]
        %v475 = vld [vmem:[%s222 + $0x688] sm:$0xff]
        %v476 = vld [vmem:[%s222 + $0x690] sm:$0xff]
        %v477 = vld [vmem:[%s222 + $0x698] sm:$0xff]
        %v478 = vld [vmem:[%s222 + $0x6a0] sm:$0xff]
        %v479 = vld [vmem:[%s222 + $0x6a8] sm:$0xff]
        %v480 = vld [vmem:[%s222 + $0x6b0] sm:$0xff]
        %v481 = vld [vmem:[%s222 + $0x6b8] sm:$0xff]
        %v482 = vld [vmem:[%s222 + $0x6c0] sm:$0xff]
        %v483 = vld [vmem:[%s222 + $0x6c8] sm:$0xff]
        %v484 = vld [vmem:[%s222 + $0x6d0] sm:$0xff]
        %v485 = vld [vmem:[%s222 + $0x6d8] sm:$0xff]
        %v486 = vld [vmem:[%s222 + $0x6e0] sm:$0xff]
        %v487 = vld [vmem:[%s222 + $0x6e8] sm:$0xff]
        %v488 = vld [vmem:[%s222 + $0x6f0] sm:$0xff]
        %v489 = vld [vmem:[%s222 + $0x6f8] sm:$0xff]
        %v490 = vld [vmem:[%s222 + $0x700] sm:$0xff]
        %v491 = vld [vmem:[%s222 + $0x708] sm:$0xff]
        %v492 = vld [vmem:[%s222 + $0x710] sm:$0xff]
        %v493 = vld [vmem:[%s222 + $0x718] sm:$0xff]
        %v494 = vld [vmem:[%s222 + $0x720] sm:$0xff]
        %v495 = vld [vmem:[%s222 + $0x728] sm:$0xff]
        %v496 = vld [vmem:[%s222 + $0x730] sm:$0xff]
        %v497 = vld [vmem:[%s222 + $0x738] sm:$0xff]
        %v498 = vld [vmem:[%s222 + $0x740] sm:$0xff]
        %v499 = vld [vmem:[%s222 + $0x748] sm:$0xff]
        %v500 = vld [vmem:[%s222 + $0x750] sm:$0xff]
        %v501 = vld [vmem:[%s222 + $0x758] sm:$0xff]
        %v502 = vld [vmem:[%s222 + $0x760] sm:$0xff]
        %v503 = vld [vmem:[%s222 + $0x768] sm:$0xff]
        %v504 = vld [vmem:[%s222 + $0x770] sm:$0xff]
        %v505 = vld [vmem:[%s222 + $0x778] sm:$0xff]
        %v506 = vld [vmem:[%s222 + $0x780] sm:$0xff]
        %v507 = vld [vmem:[%s222 + $0x788] sm:$0xff]
        %v508 = vld [vmem:[%s222 + $0x790] sm:$0xff]
        %v509 = vld [vmem:[%s222 + $0x798] sm:$0xff]
        %v510 = vld [vmem:[%s222 + $0x7a0] sm:$0xff]
        %v511 = vld [vmem:[%s222 + $0x7a8] sm:$0xff]
        %v512 = vld [vmem:[%s222 + $0x7b0] sm:$0xff]
        %v513 = vld [vmem:[%s222 + $0x7b8] sm:$0xff]
        %v514 = vld [vmem:[%s222 + $0x7c0] sm:$0xff]
        %v515 = vld [vmem:[%s222 + $0x7c8] sm:$0xff]
        %v516 = vld [vmem:[%s222 + $0x7d0] sm:$0xff]
        %v517 = vld [vmem:[%s222 + $0x7d8] sm:$0xff]
        %v518 = vld [vmem:[%s222 + $0x7e0] sm:$0xff]
        %v519 = vld [vmem:[%s222 + $0x7e8] sm:$0xff]
        %v520 = vld [vmem:[%s222 + $0x7f0] sm:$0xff]
        %v521 = vld [vmem:[%s222 + $0x7f8] sm:$0xff]
        %v522 = vld [vmem:[%s222 + $0x800] sm:$0xff]
        %v523 = vld [vmem:[%s222 + $0x808] sm:$0xff]
        %v524 = vld [vmem:[%s222 + $0x810] sm:$0xff]
        %v525 = vld [vmem:[%s222 + $0x818] sm:$0xff]
        %v526 = vld [vmem:[%s222 + $0x820] sm:$0xff]
        %v527 = vld [vmem:[%s222 + $0x828] sm:$0xff]
        %v528 = vld [vmem:[%s222 + $0x830] sm:$0xff]
        %v529 = vld [vmem:[%s222 + $0x838] sm:$0xff]
        %v530 = vld [vmem:[%s222 + $0x840] sm:$0xff]
        %v531 = vld [vmem:[%s222 + $0x848] sm:$0xff]
        %v532 = vld [vmem:[%s222 + $0x850] sm:$0xff]
        %v533 = vld [vmem:[%s222 + $0x858] sm:$0xff]
        %v534 = vld [vmem:[%s222 + $0x860] sm:$0xff]
        %v535 = vld [vmem:[%s222 + $0x868] sm:$0xff]
        %v536 = vld [vmem:[%s222 + $0x870] sm:$0xff]
        %v537 = vld [vmem:[%s222 + $0x878] sm:$0xff]
        %v538 = vld [vmem:[%s222 + $0x880] sm:$0xff]
        %v539 = vld [vmem:[%s222 + $0x888] sm:$0xff]
        %v540 = vld [vmem:[%s222 + $0x890] sm:$0xff]
        %v541 = vld [vmem:[%s222 + $0x898] sm:$0xff]
        %v542 = vld [vmem:[%s222 + $0x8a0] sm:$0xff]
        %v543 = vld [vmem:[%s222 + $0x8a8] sm:$0xff]
        %v544 = vld [vmem:[%s222 + $0x8b0] sm:$0xff]
        %v545 = vld [vmem:[%s222 + $0x8b8] sm:$0xff]
        %v546 = vld [vmem:[%s222 + $0x8c0] sm:$0xff]
        %v547 = vld [vmem:[%s222 + $0x8c8] sm:$0xff]
        %v548 = vld [vmem:[%s222 + $0x8d0] sm:$0xff]
        %v549 = vld [vmem:[%s222 + $0x8d8] sm:$0xff]
        %v550 = vld [vmem:[%s222 + $0x8e0] sm:$0xff]
        %v551 = vld [vmem:[%s222 + $0x8e8] sm:$0xff]
        %v552 = vld [vmem:[%s222 + $0x8f0] sm:$0xff]
        %v553 = vld [vmem:[%s222 + $0x8f8] sm:$0xff]
        %v554 = vld [vmem:[%s222 + $0x900] sm:$0xff]
        %v555 = vld [vmem:[%s222 + $0x908] sm:$0xff]
        %v556 = vld [vmem:[%s222 + $0x910] sm:$0xff]
        %v557 = vld [vmem:[%s222 + $0x918] sm:$0xff]
        %v558 = vld [vmem:[%s222 + $0x920] sm:$0xff]
        %v559 = vld [vmem:[%s222 + $0x928] sm:$0xff]
        %v560 = vld [vmem:[%s222 + $0x930] sm:$0xff]
        %v561 = vld [vmem:[%s222 + $0x938] sm:$0xff]
        %v562 = vld [vmem:[%s222 + $0x940] sm:$0xff]
        %v563 = vld [vmem:[%s222 + $0x948] sm:$0xff]
        %v564 = vld [vmem:[%s222 + $0x950] sm:$0xff]
        %v565 = vld [vmem:[%s222 + $0x958] sm:$0xff]
        %v566 = vld [vmem:[%s222 + $0x960] sm:$0xff]
        %v567 = vld [vmem:[%s222 + $0x968] sm:$0xff]
        %v568 = vld [vmem:[%s222 + $0x970] sm:$0xff]
        %v569 = vld [vmem:[%s222 + $0x978] sm:$0xff]
        %v570 = vld [vmem:[%s222 + $0x980] sm:$0xff]
        %v571 = vld [vmem:[%s222 + $0x988] sm:$0xff]
        %v572 = vld [vmem:[%s222 + $0x990] sm:$0xff]
        %v573 = vld [vmem:[%s222 + $0x998] sm:$0xff]
        %v574 = vld [vmem:[%s222 + $0x9a0] sm:$0xff]
        %v575 = vld [vmem:[%s222 + $0x9a8] sm:$0xff]
        %v576 = vld [vmem:[%s222 + $0x9b0] sm:$0xff]
        %v577 = vld [vmem:[%s222 + $0x9b8] sm:$0xff]
        %v578 = vld [vmem:[%s222 + $0x9c0] sm:$0xff]
        %v579 = vld [vmem:[%s222 + $0x9c8] sm:$0xff]
        %v580 = vld [vmem:[%s222 + $0x9d0] sm:$0xff]
        %v581 = vld [vmem:[%s222 + $0x9d8] sm:$0xff]
        %v582 = vld [vmem:[%s222 + $0x9e0] sm:$0xff]
        %v583 = vld [vmem:[%s222 + $0x9e8] sm:$0xff]
        %v584 = vld [vmem:[%s222 + $0x9f0] sm:$0xff]
        %v585 = vld [vmem:[%s222 + $0x9f8] sm:$0xff]
        %v586 = vld [vmem:[%s222 + $0xa00] sm:$0xff]
        %v587 = vld [vmem:[%s222 + $0xa08] sm:$0xff]
        %v588 = vld [vmem:[%s222 + $0xa10] sm:$0xff]
        %v589 = vld [vmem:[%s222 + $0xa18] sm:$0xff]
        %v590 = vld [vmem:[%s222 + $0xa20] sm:$0xff]
        %v591 = vld [vmem:[%s222 + $0xa28] sm:$0xff]
        %v592 = vld [vmem:[%s222 + $0xa30] sm:$0xff]
        %v593 = vld [vmem:[%s222 + $0xa38] sm:$0xff]
        %v594 = vld [vmem:[%s222 + $0xa40] sm:$0xff]
        %v595 = vld [vmem:[%s222 + $0xa48] sm:$0xff]
        %v596 = vld [vmem:[%s222 + $0xa50] sm:$0xff]
        %v597 = vld [vmem:[%s222 + $0xa58] sm:$0xff]
        %v598 = vld [vmem:[%s222 + $0xa60] sm:$0xff]
        %v599 = vld [vmem:[%s222 + $0xa68] sm:$0xff]
        %v600 = vld [vmem:[%s222 + $0xa70] sm:$0xff]
        %v601 = vld [vmem:[%s222 + $0xa78] sm:$0xff]
        %v602 = vld [vmem:[%s222 + $0xa80] sm:$0xff]
        %v603 = vld [vmem:[%s222 + $0xa88] sm:$0xff]
        %v604 = vld [vmem:[%s222 + $0xa90] sm:$0xff]
        %v605 = vld [vmem:[%s222 + $0xa98] sm:$0xff]
        %v606 = vld [vmem:[%s222 + $0xaa0] sm:$0xff]
        %v607 = vld [vmem:[%s222 + $0xaa8] sm:$0xff]
        %v608 = vld [vmem:[%s222 + $0xab0] sm:$0xff]
        %v609 = vld [vmem:[%s222 + $0xab8] sm:$0xff]
        %v610 = vld [vmem:[%s222 + $0xac0] sm:$0xff]
        %v611 = vld [vmem:[%s222 + $0xac8] sm:$0xff]
        %v612 = vld [vmem:[%s222 + $0xad0] sm:$0xff]
        %v613 = vld [vmem:[%s222 + $0xad8] sm:$0xff]
        %v614 = vld [vmem:[%s222 + $0xae0] sm:$0xff]
        %v615 = vld [vmem:[%s222 + $0xae8] sm:$0xff]
        %v616 = vld [vmem:[%s222 + $0xaf0] sm:$0xff]
        %v617 = vld [vmem:[%s222 + $0xaf8] sm:$0xff]
        %v618 = vld [vmem:[%s222 + $0xb00] sm:$0xff]
        %v619 = vld [vmem:[%s222 + $0xb08] sm:$0xff]
        %v620 = vld [vmem:[%s222 + $0xb10] sm:$0xff]
        %v621 = vld [vmem:[%s222 + $0xb18] sm:$0xff]
        %v622 = vld [vmem:[%s222 + $0xb20] sm:$0xff]
        %v623 = vld [vmem:[%s222 + $0xb28] sm:$0xff]
        %v624 = vld [vmem:[%s222 + $0xb30] sm:$0xff]
        %v625 = vld [vmem:[%s222 + $0xb38] sm:$0xff]
        %v626 = vld [vmem:[%s222 + $0xb40] sm:$0xff]
        %v627 = vld [vmem:[%s222 + $0xb48] sm:$0xff]
        %v628 = vld [vmem:[%s222 + $0xb50] sm:$0xff]
        %v629 = vld [vmem:[%s222 + $0xb58] sm:$0xff]
        %v630 = vld [vmem:[%s222 + $0xb60] sm:$0xff]
        %v631 = vld [vmem:[%s222 + $0xb68] sm:$0xff]
        %v632 = vld [vmem:[%s222 + $0xb70] sm:$0xff]
        %v633 = vld [vmem:[%s222 + $0xb78] sm:$0xff]
        %v634 = vld [vmem:[%s222 + $0xb80] sm:$0xff]
        %v635 = vld [vmem:[%s222 + $0xb88] sm:$0xff]
        %v636 = vld [vmem:[%s222 + $0xb90] sm:$0xff]
        %v637 = vld [vmem:[%s222 + $0xb98] sm:$0xff]
        %v638 = vld [vmem:[%s222 + $0xba0] sm:$0xff]
        %v639 = vld [vmem:[%s222 + $0xba8] sm:$0xff]
        %v640 = vld [vmem:[%s222 + $0xbb0] sm:$0xff]
        %v641 = vld [vmem:[%s222 + $0xbb8] sm:$0xff]
        %v642 = vld [vmem:[%s222 + $0xbc0] sm:$0xff]
        %v643 = vld [vmem:[%s222 + $0xbc8] sm:$0xff]
        %v644 = vld [vmem:[%s222 + $0xbd0] sm:$0xff]
        %v645 = vld [vmem:[%s222 + $0xbd8] sm:$0xff]
        %v646 = vld [vmem:[%s222 + $0xbe0] sm:$0xff]
        %v647 = vld [vmem:[%s222 + $0xbe8] sm:$0xff]
        %v648 = vld [vmem:[%s222 + $0xbf0] sm:$0xff]
        %v649 = vld [vmem:[%s222 + $0xbf8] sm:$0xff]
        %v650 = vld [vmem:[%s222 + $0xc00] sm:$0xff]
        %v651 = vld [vmem:[%s222 + $0xc08] sm:$0xff]
        %v652 = vld [vmem:[%s222 + $0xc10] sm:$0xff]
        %v653 = vld [vmem:[%s222 + $0xc18] sm:$0xff]
        %v654 = vld [vmem:[%s222 + $0xc20] sm:$0xff]
        %v655 = vld [vmem:[%s222 + $0xc28] sm:$0xff]
        %v656 = vld [vmem:[%s222 + $0xc30] sm:$0xff]
        %v657 = vld [vmem:[%s222 + $0xc38] sm:$0xff]
        %v658 = vld [vmem:[%s222 + $0xc40] sm:$0xff]
        %v659 = vld [vmem:[%s222 + $0xc48] sm:$0xff]
        %v660 = vld [vmem:[%s222 + $0xc50] sm:$0xff]
        %v661 = vld [vmem:[%s222 + $0xc58] sm:$0xff]
        %v662 = vld [vmem:[%s222 + $0xc60] sm:$0xff]
        %v663 = vld [vmem:[%s222 + $0xc68] sm:$0xff]
        %v664 = vld [vmem:[%s222 + $0xc70] sm:$0xff]
        %v665 = vld [vmem:[%s222 + $0xc78] sm:$0xff]
        %v666 = vld [vmem:[%s222 + $0xc80] sm:$0xff]
        %v667 = vld [vmem:[%s222 + $0xc88] sm:$0xff]
        %v668 = vld [vmem:[%s222 + $0xc90] sm:$0xff]
        %v669 = vld [vmem:[%s222 + $0xc98] sm:$0xff]
        %v670 = vld [vmem:[%s222 + $0xca0] sm:$0xff]
        %v671 = vld [vmem:[%s222 + $0xca8] sm:$0xff]
        %v672 = vld [vmem:[%s222 + $0xcb0] sm:$0xff]
        %v673 = vld [vmem:[%s222 + $0xcb8] sm:$0xff]
        %v674 = vld [vmem:[%s222 + $0xcc0] sm:$0xff]
        %v675 = vld [vmem:[%s222 + $0xcc8] sm:$0xff]
        %v676 = vld [vmem:[%s222 + $0xcd0] sm:$0xff]
        %v677 = vld [vmem:[%s222 + $0xcd8] sm:$0xff]
        %v678 = vld [vmem:[%s222 + $0xce0] sm:$0xff]
        %v679 = vld [vmem:[%s222 + $0xce8] sm:$0xff]
        %v680 = vld [vmem:[%s222 + $0xcf0] sm:$0xff]
        %v681 = vld [vmem:[%s222 + $0xcf8] sm:$0xff]
        %v682 = vld [vmem:[%s222 + $0xd00] sm:$0xff]
        %v683 = vld [vmem:[%s222 + $0xd08] sm:$0xff]
        %v684 = vld [vmem:[%s222 + $0xd10] sm:$0xff]
        %v685 = vld [vmem:[%s222 + $0xd18] sm:$0xff]
        %v686 = vld [vmem:[%s222 + $0xd20] sm:$0xff]
        %v687 = vld [vmem:[%s222 + $0xd28] sm:$0xff]
        %v688 = vld [vmem:[%s222 + $0xd30] sm:$0xff]
        %v689 = vld [vmem:[%s222 + $0xd38] sm:$0xff]
        %v690 = vld [vmem:[%s222 + $0xd40] sm:$0xff]
        %v691 = vld [vmem:[%s222 + $0xd48] sm:$0xff]
        %v692 = vld [vmem:[%s222 + $0xd50] sm:$0xff]
        %v693 = vld [vmem:[%s222 + $0xd58] sm:$0xff]
        %v694 = vld [vmem:[%s222 + $0xd60] sm:$0xff]
        %v695 = vld [vmem:[%s222 + $0xd68] sm:$0xff]
        %v696 = vld [vmem:[%s222 + $0xd70] sm:$0xff]
        %v697 = vld [vmem:[%s222 + $0xd78] sm:$0xff]
        %v698 = vld [vmem:[%s222 + $0xd80] sm:$0xff]
        %v699 = vld [vmem:[%s222 + $0xd88] sm:$0xff]
        %v700 = vld [vmem:[%s222 + $0xd90] sm:$0xff]
        %v701 = vld [vmem:[%s222 + $0xd98] sm:$0xff]
        %v702 = vld [vmem:[%s222 + $0xda0] sm:$0xff]
        %v703 = vld [vmem:[%s222 + $0xda8] sm:$0xff]
        %v704 = vld [vmem:[%s222 + $0xdb0] sm:$0xff]
        %v705 = vld [vmem:[%s222 + $0xdb8] sm:$0xff]
        %v706 = vld [vmem:[%s222 + $0xdc0] sm:$0xff]
        %v707 = vld [vmem:[%s222 + $0xdc8] sm:$0xff]
        %v708 = vld [vmem:[%s222 + $0xdd0] sm:$0xff]
        %v709 = vld [vmem:[%s222 + $0xdd8] sm:$0xff]
        %v710 = vld [vmem:[%s222 + $0xde0] sm:$0xff]
        %v711 = vld [vmem:[%s222 + $0xde8] sm:$0xff]
        %v712 = vld [vmem:[%s222 + $0xdf0] sm:$0xff]
        %v713 = vld [vmem:[%s222 + $0xdf8] sm:$0xff]
        %v714 = vld [vmem:[%s222 + $0xe00] sm:$0xff]
        %v715 = vld [vmem:[%s222 + $0xe08] sm:$0xff]
        %v716 = vld [vmem:[%s222 + $0xe10] sm:$0xff]
        %v717 = vld [vmem:[%s222 + $0xe18] sm:$0xff]
        %v718 = vld [vmem:[%s222 + $0xe20] sm:$0xff]
        %v719 = vld [vmem:[%s222 + $0xe28] sm:$0xff]
        %v720 = vld [vmem:[%s222 + $0xe30] sm:$0xff]
        %v721 = vld [vmem:[%s222 + $0xe38] sm:$0xff]
        %v722 = vld [vmem:[%s222 + $0xe40] sm:$0xff]
        %v723 = vld [vmem:[%s222 + $0xe48] sm:$0xff]
        %v724 = vld [vmem:[%s222 + $0xe50] sm:$0xff]
        %v725 = vld [vmem:[%s222 + $0xe58] sm:$0xff]
        %v726 = vld [vmem:[%s222 + $0xe60] sm:$0xff]
        %v727 = vld [vmem:[%s222 + $0xe68] sm:$0xff]
        %v728 = vld [vmem:[%s222 + $0xe70] sm:$0xff]
        %v729 = vld [vmem:[%s222 + $0xe78] sm:$0xff]
        %v730 = vld [vmem:[%s222 + $0xe80] sm:$0xff]
        %v731 = vld [vmem:[%s222 + $0xe88] sm:$0xff]
        %v732 = vld [vmem:[%s222 + $0xe90] sm:$0xff]
        %v733 = vld [vmem:[%s222 + $0xe98] sm:$0xff]
        %v734 = vld [vmem:[%s222 + $0xea0] sm:$0xff]
        %v735 = vld [vmem:[%s222 + $0xea8] sm:$0xff]
        %v736 = vld [vmem:[%s222 + $0xeb0] sm:$0xff]
        %v737 = vld [vmem:[%s222 + $0xeb8] sm:$0xff]
        %v738 = vld [vmem:[%s222 + $0xec0] sm:$0xff]
        %v739 = vld [vmem:[%s222 + $0xec8] sm:$0xff]
        %v740 = vld [vmem:[%s222 + $0xed0] sm:$0xff]
        %v741 = vld [vmem:[%s222 + $0xed8] sm:$0xff]
        %v742 = vld [vmem:[%s222 + $0xee0] sm:$0xff]
        %v743 = vld [vmem:[%s222 + $0xee8] sm:$0xff]
        %v744 = vld [vmem:[%s222 + $0xef0] sm:$0xff]
        %v745 = vld [vmem:[%s222 + $0xef8] sm:$0xff]
        %v746 = vld [vmem:[%s222 + $0xf00] sm:$0xff]
        %v747 = vld [vmem:[%s222 + $0xf08] sm:$0xff]
        %v748 = vld [vmem:[%s222 + $0xf10] sm:$0xff]
        %v749 = vld [vmem:[%s222 + $0xf18] sm:$0xff]
        %v750 = vld [vmem:[%s222 + $0xf20] sm:$0xff]
        %v751 = vld [vmem:[%s222 + $0xf28] sm:$0xff]
        %v752 = vld [vmem:[%s222 + $0xf30] sm:$0xff]
        %v753 = vld [vmem:[%s222 + $0xf38] sm:$0xff]
        %v754 = vld [vmem:[%s222 + $0xf40] sm:$0xff]
        %v755 = vld [vmem:[%s222 + $0xf48] sm:$0xff]
        %v756 = vld [vmem:[%s222 + $0xf50] sm:$0xff]
        %v757 = vld [vmem:[%s222 + $0xf58] sm:$0xff]
        %v758 = vld [vmem:[%s222 + $0xf60] sm:$0xff]
        %v759 = vld [vmem:[%s222 + $0xf68] sm:$0xff]
        %v760 = vld [vmem:[%s222 + $0xf70] sm:$0xff]
        %v761 = vld [vmem:[%s222 + $0xf78] sm:$0xff]
        %v762 = vld [vmem:[%s222 + $0xf80] sm:$0xff]
        %v763 = vld [vmem:[%s222 + $0xf88] sm:$0xff]
        %v764 = vld [vmem:[%s222 + $0xf90] sm:$0xff]
        %v765 = vld [vmem:[%s222 + $0xf98] sm:$0xff]
        %v766 = vld [vmem:[%s222 + $0xfa0] sm:$0xff]
        %v767 = vld [vmem:[%s222 + $0xfa8] sm:$0xff]
        %v768 = vld [vmem:[%s222 + $0xfb0] sm:$0xff]
        %v769 = vld [vmem:[%s222 + $0xfb8] sm:$0xff]
        %v770 = vld [vmem:[%s222 + $0xfc0] sm:$0xff]
        %v771 = vld [vmem:[%s222 + $0xfc8] sm:$0xff]
        %v772 = vld [vmem:[%s222 + $0xfd0] sm:$0xff]
        %v773 = vld [vmem:[%s222 + $0xfd8] sm:$0xff]
        %v774 = vld [vmem:[%s222 + $0xfe0] sm:$0xff]
        %v775 = vld [vmem:[%s222 + $0xfe8] sm:$0xff]
        %v776 = vld [vmem:[%s222 + $0xff0] sm:$0xff]
        %v777 = vld [vmem:[%s222 + $0xff8] sm:$0xff]
        %v778 = vld [vmem:[%s222 + $0x1000] sm:$0xff]
        %v779 = vld [vmem:[%s222 + $0x1008] sm:$0xff]
        %v780 = vld [vmem:[%s222 + $0x1010] sm:$0xff]
        %v781 = vld [vmem:[%s222 + $0x1018] sm:$0xff]
        %v782 = vld [vmem:[%s222 + $0x1020] sm:$0xff]
        %v783 = vld [vmem:[%s222 + $0x1028] sm:$0xff]
        %v784 = vld [vmem:[%s222 + $0x1030] sm:$0xff]
        %v785 = vld [vmem:[%s222 + $0x1038] sm:$0xff]
        %v786 = vld [vmem:[%s222 + $0x1040] sm:$0xff]
        %v787 = vld [vmem:[%s222 + $0x1048] sm:$0xff]
        %v788 = vld [vmem:[%s222 + $0x1050] sm:$0xff]
        %v789 = vld [vmem:[%s222 + $0x1058] sm:$0xff]
        %v790 = vld [vmem:[%s222 + $0x1060] sm:$0xff]
        %v791 = vld [vmem:[%s222 + $0x1068] sm:$0xff]
        %v792 = vld [vmem:[%s222 + $0x1070] sm:$0xff]
        %v793 = vld [vmem:[%s222 + $0x1078] sm:$0xff]
        %v794 = vld [vmem:[%s222 + $0x1080] sm:$0xff]
        %v795 = vld [vmem:[%s222 + $0x1088] sm:$0xff]
        %v796 = vld [vmem:[%s222 + $0x1090] sm:$0xff]
        %v797 = vld [vmem:[%s222 + $0x1098] sm:$0xff]
        %v798 = vld [vmem:[%s222 + $0x10a0] sm:$0xff]
        %v799 = vld [vmem:[%s222 + $0x10a8] sm:$0xff]
        %v800 = vld [vmem:[%s222 + $0x10b0] sm:$0xff]
        %v801 = vld [vmem:[%s222 + $0x10b8] sm:$0xff]
        %v802 = vld [vmem:[%s222 + $0x10c0] sm:$0xff]
        %v803 = vld [vmem:[%s222 + $0x10c8] sm:$0xff]
        %v804 = vld [vmem:[%s222 + $0x10d0] sm:$0xff]
        %v805 = vld [vmem:[%s222 + $0x10d8] sm:$0xff]
        %v806 = vld [vmem:[%s222 + $0x10e0] sm:$0xff]
        %v807 = vld [vmem:[%s222 + $0x10e8] sm:$0xff]
        %v808 = vld [vmem:[%s222 + $0x10f0] sm:$0xff]
        %v809 = vld [vmem:[%s222 + $0x10f8] sm:$0xff]
        %v810 = vld [vmem:[%s222 + $0x1100] sm:$0xff]
        %v811 = vld [vmem:[%s222 + $0x1108] sm:$0xff]
        %v812 = vld [vmem:[%s222 + $0x1110] sm:$0xff]
        %v813 = vld [vmem:[%s222 + $0x1118] sm:$0xff]
        %v814 = vld [vmem:[%s222 + $0x1120] sm:$0xff]
        %v815 = vld [vmem:[%s222 + $0x1128] sm:$0xff]
        %v816 = vld [vmem:[%s222 + $0x1130] sm:$0xff]
        %v817 = vld [vmem:[%s222 + $0x1138] sm:$0xff]
        %v818 = vld [vmem:[%s222 + $0x1140] sm:$0xff]
        %v819 = vld [vmem:[%s222 + $0x1148] sm:$0xff]
        %v820 = vld [vmem:[%s222 + $0x1150] sm:$0xff]
        %v821 = vld [vmem:[%s222 + $0x1158] sm:$0xff]
        %v822 = vld [vmem:[%s222 + $0x1160] sm:$0xff]
        %v823 = vld [vmem:[%s222 + $0x1168] sm:$0xff]
        %v824 = vld [vmem:[%s222 + $0x1170] sm:$0xff]
        %v825 = vld [vmem:[%s222 + $0x1178] sm:$0xff]
        %v826 = vld [vmem:[%s222 + $0x1180] sm:$0xff]
        %v827 = vld [vmem:[%s222 + $0x1188] sm:$0xff]
        %v828 = vld [vmem:[%s222 + $0x1190] sm:$0xff]
        %v829 = vld [vmem:[%s222 + $0x1198] sm:$0xff]
        %v830 = vld [vmem:[%s222 + $0x11a0] sm:$0xff]
        %v831 = vld [vmem:[%s222 + $0x11a8] sm:$0xff]
        %v832 = vld [vmem:[%s222 + $0x11b0] sm:$0xff]
        %v833 = vld [vmem:[%s222 + $0x11b8] sm:$0xff]
        %v834 = vld [vmem:[%s222 + $0x11c0] sm:$0xff]
        %v835 = vld [vmem:[%s222 + $0x11c8] sm:$0xff]
        %v836 = vld [vmem:[%s222 + $0x11d0] sm:$0xff]
        %v837 = vld [vmem:[%s222 + $0x11d8] sm:$0xff]
        %v838 = vld [vmem:[%s222 + $0x11e0] sm:$0xff]
        %v839 = vld [vmem:[%s222 + $0x11e8] sm:$0xff]
        %v840 = vld [vmem:[%s222 + $0x11f0] sm:$0xff]
        %v841 = vld [vmem:[%s222 + $0x11f8] sm:$0xff]
        %v842 = vld [vmem:[%s222 + $0x1200] sm:$0xff]
        %v843 = vld [vmem:[%s222 + $0x1208] sm:$0xff]
        %v844 = vld [vmem:[%s222 + $0x1210] sm:$0xff]
        %v845 = vld [vmem:[%s222 + $0x1218] sm:$0xff]
        %v846 = vld [vmem:[%s222 + $0x1220] sm:$0xff]
        %v847 = vld [vmem:[%s222 + $0x1228] sm:$0xff]
        %v848 = vld [vmem:[%s222 + $0x1230] sm:$0xff]
        %v849 = vld [vmem:[%s222 + $0x1238] sm:$0xff]
        %v850 = vld [vmem:[%s222 + $0x1240] sm:$0xff]
        %v851 = vld [vmem:[%s222 + $0x1248] sm:$0xff]
        %v852 = vld [vmem:[%s222 + $0x1250] sm:$0xff]
        %v853 = vld [vmem:[%s222 + $0x1258] sm:$0xff]
        %v854 = vld [vmem:[%s222 + $0x1260] sm:$0xff]
        %v855 = vld [vmem:[%s222 + $0x1268] sm:$0xff]
        %v856 = vld [vmem:[%s222 + $0x1270] sm:$0xff]
        %v857 = vld [vmem:[%s222 + $0x1278] sm:$0xff]
        %v858 = vld [vmem:[%s222 + $0x1280] sm:$0xff]
        %v859 = vld [vmem:[%s222 + $0x1288] sm:$0xff]
        %v860 = vld [vmem:[%s222 + $0x1290] sm:$0xff]
        %v861 = vld [vmem:[%s222 + $0x1298] sm:$0xff]
        %v862 = vld [vmem:[%s222 + $0x12a0] sm:$0xff]
        %v863 = vld [vmem:[%s222 + $0x12a8] sm:$0xff]
        %v864 = vld [vmem:[%s222 + $0x12b0] sm:$0xff]
        %v865 = vld [vmem:[%s222 + $0x12b8] sm:$0xff]
        %v866 = vld [vmem:[%s222 + $0x12c0] sm:$0xff]
        %v867 = vld [vmem:[%s222 + $0x12c8] sm:$0xff]
        %v868 = vld [vmem:[%s222 + $0x12d0] sm:$0xff]
        %v869 = vld [vmem:[%s222 + $0x12d8] sm:$0xff]
        %v870 = vld [vmem:[%s222 + $0x12e0] sm:$0xff]
        %v871 = vld [vmem:[%s222 + $0x12e8] sm:$0xff]
        %v872 = vld [vmem:[%s222 + $0x12f0] sm:$0xff]
        %v873 = vld [vmem:[%s222 + $0x12f8] sm:$0xff]
        %v874 = vld [vmem:[%s222 + $0x1300] sm:$0xff]
        %v875 = vld [vmem:[%s222 + $0x1308] sm:$0xff]
        %v876 = vld [vmem:[%s222 + $0x1310] sm:$0xff]
        %v877 = vld [vmem:[%s222 + $0x1318] sm:$0xff]
        %v878 = vld [vmem:[%s222 + $0x1320] sm:$0xff]
        %v879 = vld [vmem:[%s222 + $0x1328] sm:$0xff]
        %v880 = vld [vmem:[%s222 + $0x1330] sm:$0xff]
        %v881 = vld [vmem:[%s222 + $0x1338] sm:$0xff]
        %v882 = vld [vmem:[%s222 + $0x1340] sm:$0xff]
        %v883 = vld [vmem:[%s222 + $0x1348] sm:$0xff]
        %v884 = vld [vmem:[%s222 + $0x1350] sm:$0xff]
        %v885 = vld [vmem:[%s222 + $0x1358] sm:$0xff]
        %v886 = vld [vmem:[%s222 + $0x1360] sm:$0xff]
        %v887 = vld [vmem:[%s222 + $0x1368] sm:$0xff]
        %v888 = vld [vmem:[%s222 + $0x1370] sm:$0xff]
        %v889 = vld [vmem:[%s222 + $0x1378] sm:$0xff]
        %v890 = vld [vmem:[%s222 + $0x1380] sm:$0xff]
        %v891 = vld [vmem:[%s222 + $0x1388] sm:$0xff]
        %v892 = vld [vmem:[%s222 + $0x1390] sm:$0xff]
        %v893 = vld [vmem:[%s222 + $0x1398] sm:$0xff]
        %v894 = vld [vmem:[%s222 + $0x13a0] sm:$0xff]
        %v895 = vld [vmem:[%s222 + $0x13a8] sm:$0xff]
        %v896 = vld [vmem:[%s222 + $0x13b0] sm:$0xff]
        %v897 = vld [vmem:[%s222 + $0x13b8] sm:$0xff]
        %v898 = vld [vmem:[%s222 + $0x13c0] sm:$0xff]
        %v899 = vld [vmem:[%s222 + $0x13c8] sm:$0xff]
        %v900 = vld [vmem:[%s222 + $0x13d0] sm:$0xff]
        %v901 = vld [vmem:[%s222 + $0x13d8] sm:$0xff]
        %v902 = vld [vmem:[%s222 + $0x13e0] sm:$0xff]
        %v903 = vld [vmem:[%s222 + $0x13e8] sm:$0xff]
        %v904 = vld [vmem:[%s222 + $0x13f0] sm:$0xff]
        %v905 = vld [vmem:[%s222 + $0x13f8] sm:$0xff]
        %v906 = vld [vmem:[%s222 + $0x1400] sm:$0xff]
        %v907 = vld [vmem:[%s222 + $0x1408] sm:$0xff]
        %v908 = vld [vmem:[%s222 + $0x1410] sm:$0xff]
        %v909 = vld [vmem:[%s222 + $0x1418] sm:$0xff]
        %v910 = vld [vmem:[%s222 + $0x1420] sm:$0xff]
        %v911 = vld [vmem:[%s222 + $0x1428] sm:$0xff]
        %v912 = vld [vmem:[%s222 + $0x1430] sm:$0xff]
        %v913 = vld [vmem:[%s222 + $0x1438] sm:$0xff]
        %v914 = vld [vmem:[%s222 + $0x1440] sm:$0xff]
        %v915 = vld [vmem:[%s222 + $0x1448] sm:$0xff]
        %v916 = vld [vmem:[%s222 + $0x1450] sm:$0xff]
        %v917 = vld [vmem:[%s222 + $0x1458] sm:$0xff]
        %v918 = vld [vmem:[%s222 + $0x1460] sm:$0xff]
        %v919 = vld [vmem:[%s222 + $0x1468] sm:$0xff]
        %v920 = vld [vmem:[%s222 + $0x1470] sm:$0xff]
        %v921 = vld [vmem:[%s222 + $0x1478] sm:$0xff]
        %v922 = vld [vmem:[%s222 + $0x1480] sm:$0xff]
        %v923 = vld [vmem:[%s222 + $0x1488] sm:$0xff]
        %v924 = vld [vmem:[%s222 + $0x1490] sm:$0xff]
        %v925 = vld [vmem:[%s222 + $0x1498] sm:$0xff]
        %v926 = vld [vmem:[%s222 + $0x14a0] sm:$0xff]
        %v927 = vld [vmem:[%s222 + $0x14a8] sm:$0xff]
        %v928 = vld [vmem:[%s222 + $0x14b0] sm:$0xff]
        %v929 = vld [vmem:[%s222 + $0x14b8] sm:$0xff]
        %v930 = vld [vmem:[%s222 + $0x14c0] sm:$0xff]
        %v931 = vld [vmem:[%s222 + $0x14c8] sm:$0xff]
        %v932 = vld [vmem:[%s222 + $0x14d0] sm:$0xff]
        %v933 = vld [vmem:[%s222 + $0x14d8] sm:$0xff]
        %v934 = vld [vmem:[%s222 + $0x14e0] sm:$0xff]
        %v935 = vld [vmem:[%s222 + $0x14e8] sm:$0xff]
        %v936 = vld [vmem:[%s222 + $0x14f0] sm:$0xff]
        %v937 = vld [vmem:[%s222 + $0x14f8] sm:$0xff]
        %v938 = vld [vmem:[%s222 + $0x1500] sm:$0xff]
        %v939 = vld [vmem:[%s222 + $0x1508] sm:$0xff]
        %v940 = vld [vmem:[%s222 + $0x1510] sm:$0xff]
        %v941 = vld [vmem:[%s222 + $0x1518] sm:$0xff]
        %v942 = vld [vmem:[%s222 + $0x1520] sm:$0xff]
        %v943 = vld [vmem:[%s222 + $0x1528] sm:$0xff]
        %v944 = vld [vmem:[%s222 + $0x1530] sm:$0xff]
        %v945 = vld [vmem:[%s222 + $0x1538] sm:$0xff]
        %v946 = vld [vmem:[%s222 + $0x1540] sm:$0xff]
        %v947 = vld [vmem:[%s222 + $0x1548] sm:$0xff]
        %v948 = vld [vmem:[%s222 + $0x1550] sm:$0xff]
        %v949 = vld [vmem:[%s222 + $0x1558] sm:$0xff]
        %v950 = vld [vmem:[%s222 + $0x1560] sm:$0xff]
        %v951 = vld [vmem:[%s222 + $0x1568] sm:$0xff]
        %v952 = vld [vmem:[%s222 + $0x1570] sm:$0xff]
        %v953 = vld [vmem:[%s222 + $0x1578] sm:$0xff]
        %v954 = vld [vmem:[%s222 + $0x1580] sm:$0xff]
        %v955 = vld [vmem:[%s222 + $0x1588] sm:$0xff]
        %v956 = vld [vmem:[%s222 + $0x1590] sm:$0xff]
        %v957 = vld [vmem:[%s222 + $0x1598] sm:$0xff]
        %v958 = vld [vmem:[%s222 + $0x15a0] sm:$0xff]
        %v959 = vld [vmem:[%s222 + $0x15a8] sm:$0xff]
        %v960 = vld [vmem:[%s222 + $0x15b0] sm:$0xff]
        %v961 = vld [vmem:[%s222 + $0x15b8] sm:$0xff]
        %v962 = vld [vmem:[%s222 + $0x15c0] sm:$0xff]
        %v963 = vld [vmem:[%s222 + $0x15c8] sm:$0xff]
        %v964 = vld [vmem:[%s222 + $0x15d0] sm:$0xff]
        %v965 = vld [vmem:[%s222 + $0x15d8] sm:$0xff]
        %v966 = vld [vmem:[%s222 + $0x15e0] sm:$0xff]
        %v967 = vld [vmem:[%s222 + $0x15e8] sm:$0xff]
        %v968 = vld [vmem:[%s222 + $0x15f0] sm:$0xff]
        %v969 = vld [vmem:[%s222 + $0x15f8] sm:$0xff]
        %v970 = vld [vmem:[%s222 + $0x1600] sm:$0xff]
        %v971 = vld [vmem:[%s222 + $0x1608] sm:$0xff]
        %v972 = vld [vmem:[%s222 + $0x1610] sm:$0xff]
        %v973 = vld [vmem:[%s222 + $0x1618] sm:$0xff]
        %v974 = vld [vmem:[%s222 + $0x1620] sm:$0xff]
        %v975 = vld [vmem:[%s222 + $0x1628] sm:$0xff]
        %v976 = vld [vmem:[%s222 + $0x1630] sm:$0xff]
        %v977 = vld [vmem:[%s222 + $0x1638] sm:$0xff]
        %v978 = vld [vmem:[%s222 + $0x1640] sm:$0xff]
        %v979 = vld [vmem:[%s222 + $0x1648] sm:$0xff]
        %v980 = vld [vmem:[%s222 + $0x1650] sm:$0xff]
        %v981 = vld [vmem:[%s222 + $0x1658] sm:$0xff]
        %v982 = vld [vmem:[%s222 + $0x1660] sm:$0xff]
        %v983 = vld [vmem:[%s222 + $0x1668] sm:$0xff]
        %v984 = vld [vmem:[%s222 + $0x1670] sm:$0xff]
        %v985 = vld [vmem:[%s222 + $0x1678] sm:$0xff]
        %v986 = vld [vmem:[%s222 + $0x1680] sm:$0xff]
        %v987 = vld [vmem:[%s222 + $0x1688] sm:$0xff]
        %v988 = vld [vmem:[%s222 + $0x1690] sm:$0xff]
        %v989 = vld [vmem:[%s222 + $0x1698] sm:$0xff]
        %v990 = vld [vmem:[%s222 + $0x16a0] sm:$0xff]
        %v991 = vld [vmem:[%s222 + $0x16a8] sm:$0xff]
        %v992 = vld [vmem:[%s222 + $0x16b0] sm:$0xff]
        %v993 = vld [vmem:[%s222 + $0x16b8] sm:$0xff]
        %v994 = vld [vmem:[%s222 + $0x16c0] sm:$0xff]
        %v995 = vld [vmem:[%s222 + $0x16c8] sm:$0xff]
        %v996 = vld [vmem:[%s222 + $0x16d0] sm:$0xff]
        %v997 = vld [vmem:[%s222 + $0x16d8] sm:$0xff]
        %v998 = vld [vmem:[%s222 + $0x16e0] sm:$0xff]
        %v999 = vld [vmem:[%s222 + $0x16e8] sm:$0xff]
        %v1000 = vld [vmem:[%s222 + $0x16f0] sm:$0xff]
        %v1001 = vld [vmem:[%s222 + $0x16f8] sm:$0xff]
        %v1002 = vld [vmem:[%s222 + $0x1700] sm:$0xff]
        %v1003 = vld [vmem:[%s222 + $0x1708] sm:$0xff]
        %v1004 = vld [vmem:[%s222 + $0x1710] sm:$0xff]
        %v1005 = vld [vmem:[%s222 + $0x1718] sm:$0xff]
        %v1006 = vld [vmem:[%s222 + $0x1720] sm:$0xff]
        %v1007 = vld [vmem:[%s222 + $0x1728] sm:$0xff]
        %v1008 = vld [vmem:[%s222 + $0x1730] sm:$0xff]
        %v1009 = vld [vmem:[%s222 + $0x1738] sm:$0xff]
        %v1010 = vld [vmem:[%s222 + $0x1740] sm:$0xff]
        %v1011 = vld [vmem:[%s222 + $0x1748] sm:$0xff]
        %v1012 = vld [vmem:[%s222 + $0x1750] sm:$0xff]
        %v1013 = vld [vmem:[%s222 + $0x1758] sm:$0xff]
        %v1014 = vld [vmem:[%s222 + $0x1760] sm:$0xff]
        %v1015 = vld [vmem:[%s222 + $0x1768] sm:$0xff]
        %v1016 = vld [vmem:[%s222 + $0x1770] sm:$0xff]
        %v1017 = vld [vmem:[%s222 + $0x1778] sm:$0xff]
        %v1018 = vld [vmem:[%s222 + $0x1780] sm:$0xff]
        %v1019 = vld [vmem:[%s222 + $0x1788] sm:$0xff]
        %v1020 = vld [vmem:[%s222 + $0x1790] sm:$0xff]
        %v1021 = vld [vmem:[%s222 + $0x1798] sm:$0xff]
        %v1022 = vld [vmem:[%s222 + $0x17a0] sm:$0xff]
        %v1023 = vld [vmem:[%s222 + $0x17a8] sm:$0xff]
        %v1024 = vld [vmem:[%s222 + $0x17b0] sm:$0xff]
        %v1025 = vld [vmem:[%s222 + $0x17b8] sm:$0xff]
        %v1026 = vld [vmem:[%s222 + $0x17c0] sm:$0xff]
        %v1027 = vld [vmem:[%s222 + $0x17c8] sm:$0xff]
        %v1028 = vld [vmem:[%s222 + $0x17d0] sm:$0xff]
        %v1029 = vld [vmem:[%s222 + $0x17d8] sm:$0xff]
        %v1030 = vld [vmem:[%s222 + $0x17e0] sm:$0xff]
        %v1031 = vld [vmem:[%s222 + $0x17e8] sm:$0xff]
        %v1032 = vld [vmem:[%s222 + $0x17f0] sm:$0xff]
        %v1033 = vld [vmem:[%s222 + $0x17f8] sm:$0xff]
        %v1034 = vld [vmem:[%s222 + $0x1800] sm:$0xff]
        %v1035 = vld [vmem:[%s222 + $0x1808] sm:$0xff]
        %v1036 = vld [vmem:[%s222 + $0x1810] sm:$0xff]
        %v1037 = vld [vmem:[%s222 + $0x1818] sm:$0xff]
        %v1038 = vld [vmem:[%s222 + $0x1820] sm:$0xff]
        %v1039 = vld [vmem:[%s222 + $0x1828] sm:$0xff]
        %v1040 = vld [vmem:[%s222 + $0x1830] sm:$0xff]
        %v1041 = vld [vmem:[%s222 + $0x1838] sm:$0xff]
        %v1042 = vld [vmem:[%s222 + $0x1840] sm:$0xff]
        %v1043 = vld [vmem:[%s222 + $0x1848] sm:$0xff]
        %v1044 = vld [vmem:[%s222 + $0x1850] sm:$0xff]
        %v1045 = vld [vmem:[%s222 + $0x1858] sm:$0xff]
        %v1046 = vld [vmem:[%s222 + $0x1860] sm:$0xff]
        %v1047 = vld [vmem:[%s222 + $0x1868] sm:$0xff]
        %v1048 = vld [vmem:[%s222 + $0x1870] sm:$0xff]
        %v1049 = vld [vmem:[%s222 + $0x1878] sm:$0xff]
        %v1050 = vld [vmem:[%s222 + $0x1880] sm:$0xff]
        %v1051 = vld [vmem:[%s222 + $0x1888] sm:$0xff]
        %v1052 = vld [vmem:[%s222 + $0x1890] sm:$0xff]
        %v1053 = vld [vmem:[%s222 + $0x1898] sm:$0xff]
        %v1054 = vld [vmem:[%s222 + $0x18a0] sm:$0xff]
        %v1055 = vld [vmem:[%s222 + $0x18a8] sm:$0xff]
        %v1056 = vld [vmem:[%s222 + $0x18b0] sm:$0xff]
        %v1057 = vld [vmem:[%s222 + $0x18b8] sm:$0xff]
        %v1058 = vld [vmem:[%s222 + $0x18c0] sm:$0xff]
        %v1059 = vld [vmem:[%s222 + $0x18c8] sm:$0xff]
        %v1060 = vld [vmem:[%s222 + $0x18d0] sm:$0xff]
        %v1061 = vld [vmem:[%s222 + $0x18d8] sm:$0xff]
        %v1062 = vld [vmem:[%s222 + $0x18e0] sm:$0xff]
        %v1063 = vld [vmem:[%s222 + $0x18e8] sm:$0xff]
        %v1064 = vld [vmem:[%s222 + $0x18f0] sm:$0xff]
        %v1065 = vld [vmem:[%s222 + $0x18f8] sm:$0xff]
        %v1066 = vld [vmem:[%s222 + $0x1900] sm:$0xff]
        %v1067 = vld [vmem:[%s222 + $0x1908] sm:$0xff]
        %v1068 = vld [vmem:[%s222 + $0x1910] sm:$0xff]
        %v1069 = vld [vmem:[%s222 + $0x1918] sm:$0xff]
        %v1070 = vld [vmem:[%s222 + $0x1920] sm:$0xff]
        %v1071 = vld [vmem:[%s222 + $0x1928] sm:$0xff]
        %v1072 = vld [vmem:[%s222 + $0x1930] sm:$0xff]
        %v1073 = vld [vmem:[%s222 + $0x1938] sm:$0xff]
        %v1074 = vld [vmem:[%s222 + $0x1940] sm:$0xff]
        %v1075 = vld [vmem:[%s222 + $0x1948] sm:$0xff]
        %v1076 = vld [vmem:[%s222 + $0x1950] sm:$0xff]
        %v1077 = vld [vmem:[%s222 + $0x1958] sm:$0xff]
        %v1078 = vld [vmem:[%s222 + $0x1960] sm:$0xff]
        %v1079 = vld [vmem:[%s222 + $0x1968] sm:$0xff]
        %v1080 = vld [vmem:[%s222 + $0x1970] sm:$0xff]
        %v1081 = vld [vmem:[%s222 + $0x1978] sm:$0xff]
        %v1082 = vld [vmem:[%s222 + $0x1980] sm:$0xff]
        %v1083 = vld [vmem:[%s222 + $0x1988] sm:$0xff]
        %v1084 = vld [vmem:[%s222 + $0x1990] sm:$0xff]
        %v1085 = vld [vmem:[%s222 + $0x1998] sm:$0xff]
        %v1086 = vld [vmem:[%s222 + $0x19a0] sm:$0xff]
        %v1087 = vld [vmem:[%s222 + $0x19a8] sm:$0xff]
        %v1088 = vld [vmem:[%s222 + $0x19b0] sm:$0xff]
        %v1089 = vld [vmem:[%s222 + $0x19b8] sm:$0xff]
        %v1090 = vld [vmem:[%s222 + $0x19c0] sm:$0xff]
        %v1091 = vld [vmem:[%s222 + $0x19c8] sm:$0xff]
        %v1092 = vld [vmem:[%s222 + $0x19d0] sm:$0xff]
        %v1093 = vld [vmem:[%s222 + $0x19d8] sm:$0xff]
        %v1094 = vld [vmem:[%s222 + $0x19e0] sm:$0xff]
        %v1095 = vld [vmem:[%s222 + $0x19e8] sm:$0xff]
        %v1096 = vld [vmem:[%s222 + $0x19f0] sm:$0xff]
        %v1097 = vld [vmem:[%s222 + $0x19f8] sm:$0xff]
        %v1098 = vld [vmem:[%s222 + $0x1a00] sm:$0xff]
        %v1099 = vld [vmem:[%s222 + $0x1a08] sm:$0xff]
        %v1100 = vld [vmem:[%s222 + $0x1a10] sm:$0xff]
        %v1101 = vld [vmem:[%s222 + $0x1a18] sm:$0xff]
        %v1102 = vld [vmem:[%s222 + $0x1a20] sm:$0xff]
        %v1103 = vld [vmem:[%s222 + $0x1a28] sm:$0xff]
        %v1104 = vld [vmem:[%s222 + $0x1a30] sm:$0xff]
        %v1105 = vld [vmem:[%s222 + $0x1a38] sm:$0xff]
        %v1106 = vld [vmem:[%s222 + $0x1a40] sm:$0xff]
        %v1107 = vld [vmem:[%s222 + $0x1a48] sm:$0xff]
        %v1108 = vld [vmem:[%s222 + $0x1a50] sm:$0xff]
        %v1109 = vld [vmem:[%s222 + $0x1a58] sm:$0xff]
        %v1110 = vld [vmem:[%s222 + $0x1a60] sm:$0xff]
        %v1111 = vld [vmem:[%s222 + $0x1a68] sm:$0xff]
        %v1112 = vld [vmem:[%s222 + $0x1a70] sm:$0xff]
        %v1113 = vld [vmem:[%s222 + $0x1a78] sm:$0xff]
        %v1114 = vld [vmem:[%s222 + $0x1a80] sm:$0xff]
        %v1115 = vld [vmem:[%s222 + $0x1a88] sm:$0xff]
        %v1116 = vld [vmem:[%s222 + $0x1a90] sm:$0xff]
        %v1117 = vld [vmem:[%s222 + $0x1a98] sm:$0xff]
        %v1118 = vld [vmem:[%s222 + $0x1aa0] sm:$0xff]
        %v1119 = vld [vmem:[%s222 + $0x1aa8] sm:$0xff]
        %v1120 = vld [vmem:[%s222 + $0x1ab0] sm:$0xff]
        %v1121 = vld [vmem:[%s222 + $0x1ab8] sm:$0xff]
        %v1122 = vld [vmem:[%s222 + $0x1ac0] sm:$0xff]
        %v1123 = vld [vmem:[%s222 + $0x1ac8] sm:$0xff]
        %v1124 = vld [vmem:[%s222 + $0x1ad0] sm:$0xff]
        %v1125 = vld [vmem:[%s222 + $0x1ad8] sm:$0xff]
        %v1126 = vld [vmem:[%s222 + $0x1ae0] sm:$0xff]
        %v1127 = vld [vmem:[%s222 + $0x1ae8] sm:$0xff]
        %v1128 = vld [vmem:[%s222 + $0x1af0] sm:$0xff]
        %v1129 = vld [vmem:[%s222 + $0x1af8] sm:$0xff]
        %v1130 = vld [vmem:[%s222 + $0x1b00] sm:$0xff]
        %v1131 = vld [vmem:[%s222 + $0x1b08] sm:$0xff]
        %v1132 = vld [vmem:[%s222 + $0x1b10] sm:$0xff]
        %v1133 = vld [vmem:[%s222 + $0x1b18] sm:$0xff]
        %v1134 = vld [vmem:[%s222 + $0x1b20] sm:$0xff]
        %v1135 = vld [vmem:[%s222 + $0x1b28] sm:$0xff]
        %v1136 = vld [vmem:[%s222 + $0x1b30] sm:$0xff]
        %v1137 = vld [vmem:[%s222 + $0x1b38] sm:$0xff]
        %v1138 = vld [vmem:[%s222 + $0x1b40] sm:$0xff]
        %v1139 = vld [vmem:[%s222 + $0x1b48] sm:$0xff]
        %v1140 = vld [vmem:[%s222 + $0x1b50] sm:$0xff]
        %v1141 = vld [vmem:[%s222 + $0x1b58] sm:$0xff]
        %v1142 = vld [vmem:[%s222 + $0x1b60] sm:$0xff]
        %v1143 = vld [vmem:[%s222 + $0x1b68] sm:$0xff]
        %v1144 = vld [vmem:[%s222 + $0x1b70] sm:$0xff]
        %v1145 = vld [vmem:[%s222 + $0x1b78] sm:$0xff]
        %v1146 = vld [vmem:[%s222 + $0x1b80] sm:$0xff]
        %v1147 = vld [vmem:[%s222 + $0x1b88] sm:$0xff]
        %v1148 = vld [vmem:[%s222 + $0x1b90] sm:$0xff]
        %v1149 = vld [vmem:[%s222 + $0x1b98] sm:$0xff]
        %v1150 = vld [vmem:[%s222 + $0x1ba0] sm:$0xff]
        %v1151 = vld [vmem:[%s222 + $0x1ba8] sm:$0xff]
        %v1152 = vld [vmem:[%s222 + $0x1bb0] sm:$0xff]
        %v1153 = vld [vmem:[%s222 + $0x1bb8] sm:$0xff]
        %v1154 = vld [vmem:[%s222 + $0x1bc0] sm:$0xff]
        %v1155 = vld [vmem:[%s222 + $0x1bc8] sm:$0xff]
        %v1156 = vld [vmem:[%s222 + $0x1bd0] sm:$0xff]
        %v1157 = vld [vmem:[%s222 + $0x1bd8] sm:$0xff]
        %v1158 = vld [vmem:[%s222 + $0x1be0] sm:$0xff]
        %v1159 = vld [vmem:[%s222 + $0x1be8] sm:$0xff]
        %v1160 = vld [vmem:[%s222 + $0x1bf0] sm:$0xff]
        %v1161 = vld [vmem:[%s222 + $0x1bf8] sm:$0xff]
        %v1162 = vld [vmem:[%s222 + $0x1c00] sm:$0xff]
        %v1163 = vld [vmem:[%s222 + $0x1c08] sm:$0xff]
        %v1164 = vld [vmem:[%s222 + $0x1c10] sm:$0xff]
        %v1165 = vld [vmem:[%s222 + $0x1c18] sm:$0xff]
        %v1166 = vld [vmem:[%s222 + $0x1c20] sm:$0xff]
        %v1167 = vld [vmem:[%s222 + $0x1c28] sm:$0xff]
        %v1168 = vld [vmem:[%s222 + $0x1c30] sm:$0xff]
        %v1169 = vld [vmem:[%s222 + $0x1c38] sm:$0xff]
        %v1170 = vld [vmem:[%s222 + $0x1c40] sm:$0xff]
        %v1171 = vld [vmem:[%s222 + $0x1c48] sm:$0xff]
        %v1172 = vld [vmem:[%s222 + $0x1c50] sm:$0xff]
        %v1173 = vld [vmem:[%s222 + $0x1c58] sm:$0xff]
        %v1174 = vld [vmem:[%s222 + $0x1c60] sm:$0xff]
        %v1175 = vld [vmem:[%s222 + $0x1c68] sm:$0xff]
        %v1176 = vld [vmem:[%s222 + $0x1c70] sm:$0xff]
        %v1177 = vld [vmem:[%s222 + $0x1c78] sm:$0xff]
        %v1178 = vld [vmem:[%s222 + $0x1c80] sm:$0xff]
        %v1179 = vld [vmem:[%s222 + $0x1c88] sm:$0xff]
        %v1180 = vld [vmem:[%s222 + $0x1c90] sm:$0xff]
        %v1181 = vld [vmem:[%s222 + $0x1c98] sm:$0xff]
        %v1182 = vld [vmem:[%s222 + $0x1ca0] sm:$0xff]
        %v1183 = vld [vmem:[%s222 + $0x1ca8] sm:$0xff]
        %v1184 = vld [vmem:[%s222 + $0x1cb0] sm:$0xff]
        %v1185 = vld [vmem:[%s222 + $0x1cb8] sm:$0xff]
        %v1186 = vld [vmem:[%s222 + $0x1cc0] sm:$0xff]
        %v1187 = vld [vmem:[%s222 + $0x1cc8] sm:$0xff]
        %v1188 = vld [vmem:[%s222 + $0x1cd0] sm:$0xff]
        %v1189 = vld [vmem:[%s222 + $0x1cd8] sm:$0xff]
        %v1190 = vld [vmem:[%s222 + $0x1ce0] sm:$0xff]
        %v1191 = vld [vmem:[%s222 + $0x1ce8] sm:$0xff]
        %v1192 = vld [vmem:[%s222 + $0x1cf0] sm:$0xff]
        %v1193 = vld [vmem:[%s222 + $0x1cf8] sm:$0xff]
        %v1194 = vld [vmem:[%s222 + $0x1d00] sm:$0xff]
        %v1195 = vld [vmem:[%s222 + $0x1d08] sm:$0xff]
        %v1196 = vld [vmem:[%s222 + $0x1d10] sm:$0xff]
        %v1197 = vld [vmem:[%s222 + $0x1d18] sm:$0xff]
        %v1198 = vld [vmem:[%s222 + $0x1d20] sm:$0xff]
        %v1199 = vld [vmem:[%s222 + $0x1d28] sm:$0xff]
        %v1200 = vld [vmem:[%s222 + $0x1d30] sm:$0xff]
        %v1201 = vld [vmem:[%s222 + $0x1d38] sm:$0xff]
        %v1202 = vld [vmem:[%s222 + $0x1d40] sm:$0xff]
        %v1203 = vld [vmem:[%s222 + $0x1d48] sm:$0xff]
        %v1204 = vld [vmem:[%s222 + $0x1d50] sm:$0xff]
        %v1205 = vld [vmem:[%s222 + $0x1d58] sm:$0xff]
        %v1206 = vld [vmem:[%s222 + $0x1d60] sm:$0xff]
        %v1207 = vld [vmem:[%s222 + $0x1d68] sm:$0xff]
        %v1208 = vld [vmem:[%s222 + $0x1d70] sm:$0xff]
        %v1209 = vld [vmem:[%s222 + $0x1d78] sm:$0xff]
        %v1210 = vld [vmem:[%s222 + $0x1d80] sm:$0xff]
        %v1211 = vld [vmem:[%s222 + $0x1d88] sm:$0xff]
        %v1212 = vld [vmem:[%s222 + $0x1d90] sm:$0xff]
        %v1213 = vld [vmem:[%s222 + $0x1d98] sm:$0xff]
        %v1214 = vld [vmem:[%s222 + $0x1da0] sm:$0xff]
        %v1215 = vld [vmem:[%s222 + $0x1da8] sm:$0xff]
        %v1216 = vld [vmem:[%s222 + $0x1db0] sm:$0xff]
        %v1217 = vld [vmem:[%s222 + $0x1db8] sm:$0xff]
        %v1218 = vld [vmem:[%s222 + $0x1dc0] sm:$0xff]
        %v1219 = vld [vmem:[%s222 + $0x1dc8] sm:$0xff]
        %v1220 = vld [vmem:[%s222 + $0x1dd0] sm:$0xff]
        %v1221 = vld [vmem:[%s222 + $0x1dd8] sm:$0xff]
        %v1222 = vld [vmem:[%s222 + $0x1de0] sm:$0xff]
        %v1223 = vld [vmem:[%s222 + $0x1de8] sm:$0xff]
        %v1224 = vld [vmem:[%s222 + $0x1df0] sm:$0xff]
        %v1225 = vld [vmem:[%s222 + $0x1df8] sm:$0xff]
        %v1226 = vld [vmem:[%s222 + $0x1e00] sm:$0xff]
        %v1227 = vld [vmem:[%s222 + $0x1e08] sm:$0xff]
        %v1228 = vld [vmem:[%s222 + $0x1e10] sm:$0xff]
        %v1229 = vld [vmem:[%s222 + $0x1e18] sm:$0xff]
        %v1230 = vld [vmem:[%s222 + $0x1e20] sm:$0xff]
        %v1231 = vld [vmem:[%s222 + $0x1e28] sm:$0xff]
        %v1232 = vld [vmem:[%s222 + $0x1e30] sm:$0xff]
        %v1233 = vld [vmem:[%s222 + $0x1e38] sm:$0xff]
        %v1234 = vld [vmem:[%s222 + $0x1e40] sm:$0xff]
        %v1235 = vld [vmem:[%s222 + $0x1e48] sm:$0xff]
        %v1236 = vld [vmem:[%s222 + $0x1e50] sm:$0xff]
        %v1237 = vld [vmem:[%s222 + $0x1e58] sm:$0xff]
        %v1238 = vld [vmem:[%s222 + $0x1e60] sm:$0xff]
        %v1239 = vld [vmem:[%s222 + $0x1e68] sm:$0xff]
        %v1240 = vld [vmem:[%s222 + $0x1e70] sm:$0xff]
        %v1241 = vld [vmem:[%s222 + $0x1e78] sm:$0xff]
        %v1242 = vld [vmem:[%s222 + $0x1e80] sm:$0xff]
        %v1243 = vld [vmem:[%s222 + $0x1e88] sm:$0xff]
        %v1244 = vld [vmem:[%s222 + $0x1e90] sm:$0xff]
        %v1245 = vld [vmem:[%s222 + $0x1e98] sm:$0xff]
        %v1246 = vld [vmem:[%s222 + $0x1ea0] sm:$0xff]
        %v1247 = vld [vmem:[%s222 + $0x1ea8] sm:$0xff]
        %v1248 = vld [vmem:[%s222 + $0x1eb0] sm:$0xff]
        %v1249 = vld [vmem:[%s222 + $0x1eb8] sm:$0xff]
        %v1250 = vld [vmem:[%s222 + $0x1ec0] sm:$0xff]
        %v1251 = vld [vmem:[%s222 + $0x1ec8] sm:$0xff]
        %v1252 = vld [vmem:[%s222 + $0x1ed0] sm:$0xff]
        %v1253 = vld [vmem:[%s222 + $0x1ed8] sm:$0xff]
        %v1254 = vld [vmem:[%s222 + $0x1ee0] sm:$0xff]
        %v1255 = vld [vmem:[%s222 + $0x1ee8] sm:$0xff]
        %v1256 = vld [vmem:[%s222 + $0x1ef0] sm:$0xff]
        %v1257 = vld [vmem:[%s222 + $0x1ef8] sm:$0xff]
        %v1258 = vld [vmem:[%s222 + $0x1f00] sm:$0xff]
        %v1259 = vld [vmem:[%s222 + $0x1f08] sm:$0xff]
        %v1260 = vld [vmem:[%s222 + $0x1f10] sm:$0xff]
        %v1261 = vld [vmem:[%s222 + $0x1f18] sm:$0xff]
        %v1262 = vld [vmem:[%s222 + $0x1f20] sm:$0xff]
        %v1263 = vld [vmem:[%s222 + $0x1f28] sm:$0xff]
        %v1264 = vld [vmem:[%s222 + $0x1f30] sm:$0xff]
        %v1265 = vld [vmem:[%s222 + $0x1f38] sm:$0xff]
        %v1266 = vld [vmem:[%s222 + $0x1f40] sm:$0xff]
        %v1267 = vld [vmem:[%s222 + $0x1f48] sm:$0xff]
        %v1268 = vld [vmem:[%s222 + $0x1f50] sm:$0xff]
        %v1269 = vld [vmem:[%s222 + $0x1f58] sm:$0xff]
        %v1270 = vld [vmem:[%s222 + $0x1f60] sm:$0xff]
        %v1271 = vld [vmem:[%s222 + $0x1f68] sm:$0xff]
        %v1272 = vld [vmem:[%s222 + $0x1f70] sm:$0xff]
        %v1273 = vld [vmem:[%s222 + $0x1f78] sm:$0xff]
        %v1274 = vld [vmem:[%s222 + $0x1f80] sm:$0xff]
        %v1275 = vld [vmem:[%s222 + $0x1f88] sm:$0xff]
        %v1276 = vld [vmem:[%s222 + $0x1f90] sm:$0xff]
        %v1277 = vld [vmem:[%s222 + $0x1f98] sm:$0xff]
        %v1278 = vld [vmem:[%s222 + $0x1fa0] sm:$0xff]
        %v1279 = vld [vmem:[%s222 + $0x1fa8] sm:$0xff]
        %v1280 = vld [vmem:[%s222 + $0x1fb0] sm:$0xff]
        %v1281 = vld [vmem:[%s222 + $0x1fb8] sm:$0xff]
        %v1282 = vld [vmem:[%s222 + $0x1fc0] sm:$0xff]
        %v1283 = vld [vmem:[%s222 + $0x1fc8] sm:$0xff]
        %v1284 = vld [vmem:[%s222 + $0x1fd0] sm:$0xff]
        %v1285 = vld [vmem:[%s222 + $0x1fd8] sm:$0xff]
        %v1286 = vld [vmem:[%s222 + $0x1fe0] sm:$0xff]
        %v1287 = vld [vmem:[%s222 + $0x1fe8] sm:$0xff]
        %v1288 = vld [vmem:[%s222 + $0x1ff0] sm:$0xff]
        %v1289 = vld [vmem:[%s222 + $0x1ff8] sm:$0xff]
        %v1290 = vld [vmem:[%s231] sm:$0xff]
        %v1292 = vlaneseq
        %v1293 = vshrl.u32 %v1292, 7
        %v1294 = vsub.s32 0, %v1293
        %v1295 = vrot.slane %v1290, %v1294
        %v1296 = vlaneseq
        %v1297 = vshrl.u32 %v1296, 7
        %v1298 = vsub.s32 1, %v1297
        %v1299 = vrot.slane %v1290, %v1298
        %v1300 = vlaneseq
        %v1301 = vshrl.u32 %v1300, 7
        %v1302 = vsub.s32 2, %v1301
        %v1303 = vrot.slane %v1290, %v1302
        %v1304 = vlaneseq
        %v1305 = vshrl.u32 %v1304, 7
        %v1306 = vsub.s32 3, %v1305
        %v1307 = vrot.slane %v1290, %v1306
        %v1308 = vlaneseq
        %v1309 = vshrl.u32 %v1308, 7
        %v1310 = vsub.s32 4, %v1309
        %v1311 = vrot.slane %v1290, %v1310
        %v1312 = vlaneseq
        %v1313 = vshrl.u32 %v1312, 7
        %v1314 = vsub.s32 5, %v1313
        %v1315 = vrot.slane %v1290, %v1314
        %v1316 = vlaneseq
        %v1317 = vshrl.u32 %v1316, 7
        %v1318 = vsub.s32 6, %v1317
        %v1319 = vrot.slane %v1290, %v1318
        %v1320 = vlaneseq
        %v1321 = vshrl.u32 %v1320, 7
        %v1322 = vsub.s32 7, %v1321
        %v1323 = vrot.slane %v1290, %v1322
        %v1336 = vcombine.high %v262, %v262
        %v1338 = vunpack.c.l.s4 1983009808
        %v1339 = vunpack.c.0.s8 %v1338
        %v1340 = vlaneseq
        %v1341 = vshrl.u32 %v1340, 7
        %v1342 = vsub.s32 %v1339, %v1341
        %v1343 = vrot.slane %v262, %v1342
        %v1345 = vunpack.c.l.s4 1983009808
        %v1346 = vunpack.c.0.s8 %v1345
        %v1347 = vlaneseq
        %v1348 = vshrl.u32 %v1347, 7
        %v1349 = vsub.s32 %v1346, %v1348
        %v1350 = vrot.slane %v1336, %v1349
        %v1351 = vcombine.high %v1343, %v1343
        %v1352 = vcombine.high %v1350, %v1350
        %v1353 = vcombine.high %v263, %v263
        %v1355 = vunpack.c.l.s4 1983009808
        %v1356 = vunpack.c.0.s8 %v1355
        %v1357 = vlaneseq
        %v1358 = vshrl.u32 %v1357, 7
        %v1359 = vsub.s32 %v1356, %v1358
        %v1360 = vrot.slane %v263, %v1359
        %v1362 = vunpack.c.l.s4 1983009808
        %v1363 = vunpack.c.0.s8 %v1362
        %v1364 = vlaneseq
        %v1365 = vshrl.u32 %v1364, 7
        %v1366 = vsub.s32 %v1363, %v1365
        %v1367 = vrot.slane %v1353, %v1366
        %v1368 = vcombine.high %v1360, %v1360
        %v1369 = vcombine.high %v1367, %v1367
        %v1370 = vcombine.high %v264, %v264
        %v1372 = vunpack.c.l.s4 1983009808
        %v1373 = vunpack.c.0.s8 %v1372
        %v1374 = vlaneseq
        %v1375 = vshrl.u32 %v1374, 7
        %v1376 = vsub.s32 %v1373, %v1375
        %v1377 = vrot.slane %v264, %v1376
        %v1379 = vunpack.c.l.s4 1983009808
        %v1380 = vunpack.c.0.s8 %v1379
        %v1381 = vlaneseq
        %v1382 = vshrl.u32 %v1381, 7
        %v1383 = vsub.s32 %v1380, %v1382
        %v1384 = vrot.slane %v1370, %v1383
        %v1385 = vcombine.high %v1377, %v1377
        %v1386 = vcombine.high %v1384, %v1384
        %v1387 = vcombine.high %v265, %v265
        %v1389 = vunpack.c.l.s4 1983009808
        %v1390 = vunpack.c.0.s8 %v1389
        %v1391 = vlaneseq
        %v1392 = vshrl.u32 %v1391, 7
        %v1393 = vsub.s32 %v1390, %v1392
        %v1394 = vrot.slane %v265, %v1393
        %v1396 = vunpack.c.l.s4 1983009808
        %v1397 = vunpack.c.0.s8 %v1396
        %v1398 = vlaneseq
        %v1399 = vshrl.u32 %v1398, 7
        %v1400 = vsub.s32 %v1397, %v1399
        %v1401 = vrot.slane %v1387, %v1400
        %v1402 = vcombine.high %v1394, %v1394
        %v1403 = vcombine.high %v1401, %v1401
        %v2444 = vunpack.c.l.b16 %v266
        %v2445 = vunpack.c.h.b16 %v266
        %v2446 = vunpack.c.l.b16 %v267
        %v2447 = vunpack.c.h.b16 %v267
        %v2448 = vunpack.c.l.b16 %v268
        %v2449 = vunpack.c.h.b16 %v268
        %v2450 = vunpack.c.l.b16 %v269
        %v2451 = vunpack.c.h.b16 %v269
        %v2452 = vunpack.c.l.b16 %v270
        %v2453 = vunpack.c.h.b16 %v270
        %v2454 = vunpack.c.l.b16 %v271
        %v2455 = vunpack.c.h.b16 %v271
        %v2456 = vunpack.c.l.b16 %v272
        %v2457 = vunpack.c.h.b16 %v272
        %v2458 = vunpack.c.l.b16 %v273
        %v2459 = vunpack.c.h.b16 %v273
        %v2460 = vunpack.c.l.b16 %v274
        %v2461 = vunpack.c.h.b16 %v274
        %v2462 = vunpack.c.l.b16 %v275
        %v2463 = vunpack.c.h.b16 %v275
        %v2464 = vunpack.c.l.b16 %v276
        %v2465 = vunpack.c.h.b16 %v276
        %v2466 = vunpack.c.l.b16 %v277
        %v2467 = vunpack.c.h.b16 %v277
        %v2468 = vunpack.c.l.b16 %v278
        %v2469 = vunpack.c.h.b16 %v278
        %v2470 = vunpack.c.l.b16 %v279
        %v2471 = vunpack.c.h.b16 %v279
        %v2472 = vunpack.c.l.b16 %v280
        %v2473 = vunpack.c.h.b16 %v280
        %v2474 = vunpack.c.l.b16 %v281
        %v2475 = vunpack.c.h.b16 %v281
        %v2476 = vunpack.c.l.b16 %v282
        %v2477 = vunpack.c.h.b16 %v282
        %v2478 = vunpack.c.l.b16 %v283
        %v2479 = vunpack.c.h.b16 %v283
        %v2480 = vunpack.c.l.b16 %v284
        %v2481 = vunpack.c.h.b16 %v284
        %v2482 = vunpack.c.l.b16 %v285
        %v2483 = vunpack.c.h.b16 %v285
        %v2484 = vunpack.c.l.b16 %v286
        %v2485 = vunpack.c.h.b16 %v286
        %v2486 = vunpack.c.l.b16 %v287
        %v2487 = vunpack.c.h.b16 %v287
        %v2488 = vunpack.c.l.b16 %v288
        %v2489 = vunpack.c.h.b16 %v288
        %v2490 = vunpack.c.l.b16 %v289
        %v2491 = vunpack.c.h.b16 %v289
        %v2492 = vunpack.c.l.b16 %v290
        %v2493 = vunpack.c.h.b16 %v290
        %v2494 = vunpack.c.l.b16 %v291
        %v2495 = vunpack.c.h.b16 %v291
        %v2496 = vunpack.c.l.b16 %v292
        %v2497 = vunpack.c.h.b16 %v292
        %v2498 = vunpack.c.l.b16 %v293
        %v2499 = vunpack.c.h.b16 %v293
        %v2500 = vunpack.c.l.b16 %v294
        %v2501 = vunpack.c.h.b16 %v294
        %v2502 = vunpack.c.l.b16 %v295
        %v2503 = vunpack.c.h.b16 %v295
        %v2504 = vunpack.c.l.b16 %v296
        %v2505 = vunpack.c.h.b16 %v296
        %v2506 = vunpack.c.l.b16 %v297
        %v2507 = vunpack.c.h.b16 %v297
        %v2508 = vunpack.c.l.b16 %v298
        %v2509 = vunpack.c.h.b16 %v298
        %v2510 = vunpack.c.l.b16 %v299
        %v2511 = vunpack.c.h.b16 %v299
        %v2512 = vunpack.c.l.b16 %v300
        %v2513 = vunpack.c.h.b16 %v300
        %v2514 = vunpack.c.l.b16 %v301
        %v2515 = vunpack.c.h.b16 %v301
        %v2516 = vunpack.c.l.b16 %v302
        %v2517 = vunpack.c.h.b16 %v302
        %v2518 = vunpack.c.l.b16 %v303
        %v2519 = vunpack.c.h.b16 %v303
        %v2520 = vunpack.c.l.b16 %v304
        %v2521 = vunpack.c.h.b16 %v304
        %v2522 = vunpack.c.l.b16 %v305
        %v2523 = vunpack.c.h.b16 %v305
        %v2524 = vunpack.c.l.b16 %v306
        %v2525 = vunpack.c.h.b16 %v306
        %v2526 = vunpack.c.l.b16 %v307
        %v2527 = vunpack.c.h.b16 %v307
        %v2528 = vunpack.c.l.b16 %v308
        %v2529 = vunpack.c.h.b16 %v308
        %v2530 = vunpack.c.l.b16 %v309
        %v2531 = vunpack.c.h.b16 %v309
        %v2532 = vunpack.c.l.b16 %v310
        %v2533 = vunpack.c.h.b16 %v310
        %v2534 = vunpack.c.l.b16 %v311
        %v2535 = vunpack.c.h.b16 %v311
        %v2536 = vunpack.c.l.b16 %v312
        %v2537 = vunpack.c.h.b16 %v312
        %v2538 = vunpack.c.l.b16 %v313
        %v2539 = vunpack.c.h.b16 %v313
        %v2540 = vunpack.c.l.b16 %v314
        %v2541 = vunpack.c.h.b16 %v314
        %v2542 = vunpack.c.l.b16 %v315
        %v2543 = vunpack.c.h.b16 %v315
        %v2544 = vunpack.c.l.b16 %v316
        %v2545 = vunpack.c.h.b16 %v316
        %v2546 = vunpack.c.l.b16 %v317
        %v2547 = vunpack.c.h.b16 %v317
        %v2548 = vunpack.c.l.b16 %v318
        %v2549 = vunpack.c.h.b16 %v318
        %v2550 = vunpack.c.l.b16 %v319
        %v2551 = vunpack.c.h.b16 %v319
        %v2552 = vunpack.c.l.b16 %v320
        %v2553 = vunpack.c.h.b16 %v320
        %v2554 = vunpack.c.l.b16 %v321
        %v2555 = vunpack.c.h.b16 %v321
        %v2556 = vunpack.c.l.b16 %v322
        %v2557 = vunpack.c.h.b16 %v322
        %v2558 = vunpack.c.l.b16 %v323
        %v2559 = vunpack.c.h.b16 %v323
        %v2560 = vunpack.c.l.b16 %v324
        %v2561 = vunpack.c.h.b16 %v324
        %v2562 = vunpack.c.l.b16 %v325
        %v2563 = vunpack.c.h.b16 %v325
        %v2564 = vunpack.c.l.b16 %v326
        %v2565 = vunpack.c.h.b16 %v326
        %v2566 = vunpack.c.l.b16 %v327
        %v2567 = vunpack.c.h.b16 %v327
        %v2568 = vunpack.c.l.b16 %v328
        %v2569 = vunpack.c.h.b16 %v328
        %v2570 = vunpack.c.l.b16 %v329
        %v2571 = vunpack.c.h.b16 %v329
        %v2572 = vunpack.c.l.b16 %v330
        %v2573 = vunpack.c.h.b16 %v330
        %v2574 = vunpack.c.l.b16 %v331
        %v2575 = vunpack.c.h.b16 %v331
        %v2576 = vunpack.c.l.b16 %v332
        %v2577 = vunpack.c.h.b16 %v332
        %v2578 = vunpack.c.l.b16 %v333
        %v2579 = vunpack.c.h.b16 %v333
        %v2580 = vunpack.c.l.b16 %v334
        %v2581 = vunpack.c.h.b16 %v334
        %v2582 = vunpack.c.l.b16 %v335
        %v2583 = vunpack.c.h.b16 %v335
        %v2584 = vunpack.c.l.b16 %v336
        %v2585 = vunpack.c.h.b16 %v336
        %v2586 = vunpack.c.l.b16 %v337
        %v2587 = vunpack.c.h.b16 %v337
        %v2588 = vunpack.c.l.b16 %v338
        %v2589 = vunpack.c.h.b16 %v338
        %v2590 = vunpack.c.l.b16 %v339
        %v2591 = vunpack.c.h.b16 %v339
        %v2592 = vunpack.c.l.b16 %v340
        %v2593 = vunpack.c.h.b16 %v340
        %v2594 = vunpack.c.l.b16 %v341
        %v2595 = vunpack.c.h.b16 %v341
        %v2596 = vunpack.c.l.b16 %v342
        %v2597 = vunpack.c.h.b16 %v342
        %v2598 = vunpack.c.l.b16 %v343
        %v2599 = vunpack.c.h.b16 %v343
        %v2600 = vunpack.c.l.b16 %v344
        %v2601 = vunpack.c.h.b16 %v344
        %v2602 = vunpack.c.l.b16 %v345
        %v2603 = vunpack.c.h.b16 %v345
        %v2604 = vunpack.c.l.b16 %v346
        %v2605 = vunpack.c.h.b16 %v346
        %v2606 = vunpack.c.l.b16 %v347
        %v2607 = vunpack.c.h.b16 %v347
        %v2608 = vunpack.c.l.b16 %v348
        %v2609 = vunpack.c.h.b16 %v348
        %v2610 = vunpack.c.l.b16 %v349
        %v2611 = vunpack.c.h.b16 %v349
        %v2612 = vunpack.c.l.b16 %v350
        %v2613 = vunpack.c.h.b16 %v350
        %v2614 = vunpack.c.l.b16 %v351
        %v2615 = vunpack.c.h.b16 %v351
        %v2616 = vunpack.c.l.b16 %v352
        %v2617 = vunpack.c.h.b16 %v352
        %v2618 = vunpack.c.l.b16 %v353
        %v2619 = vunpack.c.h.b16 %v353
        %v2620 = vunpack.c.l.b16 %v354
        %v2621 = vunpack.c.h.b16 %v354
        %v2622 = vunpack.c.l.b16 %v355
        %v2623 = vunpack.c.h.b16 %v355
        %v2624 = vunpack.c.l.b16 %v356
        %v2625 = vunpack.c.h.b16 %v356
        %v2626 = vunpack.c.l.b16 %v357
        %v2627 = vunpack.c.h.b16 %v357
        %v2628 = vunpack.c.l.b16 %v358
        %v2629 = vunpack.c.h.b16 %v358
        %v2630 = vunpack.c.l.b16 %v359
        %v2631 = vunpack.c.h.b16 %v359
        %v2632 = vunpack.c.l.b16 %v360
        %v2633 = vunpack.c.h.b16 %v360
        %v2634 = vunpack.c.l.b16 %v361
        %v2635 = vunpack.c.h.b16 %v361
        %v2636 = vunpack.c.l.b16 %v362
        %v2637 = vunpack.c.h.b16 %v362
        %v2638 = vunpack.c.l.b16 %v363
        %v2639 = vunpack.c.h.b16 %v363
        %v2640 = vunpack.c.l.b16 %v364
        %v2641 = vunpack.c.h.b16 %v364
        %v2642 = vunpack.c.l.b16 %v365
        %v2643 = vunpack.c.h.b16 %v365
        %v2644 = vunpack.c.l.b16 %v366
        %v2645 = vunpack.c.h.b16 %v366
        %v2646 = vunpack.c.l.b16 %v367
        %v2647 = vunpack.c.h.b16 %v367
        %v2648 = vunpack.c.l.b16 %v368
        %v2649 = vunpack.c.h.b16 %v368
        %v2650 = vunpack.c.l.b16 %v369
        %v2651 = vunpack.c.h.b16 %v369
        %v2652 = vunpack.c.l.b16 %v370
        %v2653 = vunpack.c.h.b16 %v370
        %v2654 = vunpack.c.l.b16 %v371
        %v2655 = vunpack.c.h.b16 %v371
        %v2656 = vunpack.c.l.b16 %v372
        %v2657 = vunpack.c.h.b16 %v372
        %v2658 = vunpack.c.l.b16 %v373
        %v2659 = vunpack.c.h.b16 %v373
        %v2660 = vunpack.c.l.b16 %v374
        %v2661 = vunpack.c.h.b16 %v374
        %v2662 = vunpack.c.l.b16 %v375
        %v2663 = vunpack.c.h.b16 %v375
        %v2664 = vunpack.c.l.b16 %v376
        %v2665 = vunpack.c.h.b16 %v376
        %v2666 = vunpack.c.l.b16 %v377
        %v2667 = vunpack.c.h.b16 %v377
        %v2668 = vunpack.c.l.b16 %v378
        %v2669 = vunpack.c.h.b16 %v378
        %v2670 = vunpack.c.l.b16 %v379
        %v2671 = vunpack.c.h.b16 %v379
        %v2672 = vunpack.c.l.b16 %v380
        %v2673 = vunpack.c.h.b16 %v380
        %v2674 = vunpack.c.l.b16 %v381
        %v2675 = vunpack.c.h.b16 %v381
        %v2676 = vunpack.c.l.b16 %v382
        %v2677 = vunpack.c.h.b16 %v382
        %v2678 = vunpack.c.l.b16 %v383
        %v2679 = vunpack.c.h.b16 %v383
        %v2680 = vunpack.c.l.b16 %v384
        %v2681 = vunpack.c.h.b16 %v384
        %v2682 = vunpack.c.l.b16 %v385
        %v2683 = vunpack.c.h.b16 %v385
        %v2684 = vunpack.c.l.b16 %v386
        %v2685 = vunpack.c.h.b16 %v386
        %v2686 = vunpack.c.l.b16 %v387
        %v2687 = vunpack.c.h.b16 %v387
        %v2688 = vunpack.c.l.b16 %v388
        %v2689 = vunpack.c.h.b16 %v388
        %v2690 = vunpack.c.l.b16 %v389
        %v2691 = vunpack.c.h.b16 %v389
        %v2692 = vunpack.c.l.b16 %v390
        %v2693 = vunpack.c.h.b16 %v390
        %v2694 = vunpack.c.l.b16 %v391
        %v2695 = vunpack.c.h.b16 %v391
        %v2696 = vunpack.c.l.b16 %v392
        %v2697 = vunpack.c.h.b16 %v392
        %v2698 = vunpack.c.l.b16 %v393
        %v2699 = vunpack.c.h.b16 %v393
        %v2700 = vunpack.c.l.b16 %v394
        %v2701 = vunpack.c.h.b16 %v394
        %v2702 = vunpack.c.l.b16 %v395
        %v2703 = vunpack.c.h.b16 %v395
        %v2704 = vunpack.c.l.b16 %v396
        %v2705 = vunpack.c.h.b16 %v396
        %v2706 = vunpack.c.l.b16 %v397
        %v2707 = vunpack.c.h.b16 %v397
        %v2708 = vunpack.c.l.b16 %v398
        %v2709 = vunpack.c.h.b16 %v398
        %v2710 = vunpack.c.l.b16 %v399
        %v2711 = vunpack.c.h.b16 %v399
        %v2712 = vunpack.c.l.b16 %v400
        %v2713 = vunpack.c.h.b16 %v400
        %v2714 = vunpack.c.l.b16 %v401
        %v2715 = vunpack.c.h.b16 %v401
        %v2716 = vunpack.c.l.b16 %v402
        %v2717 = vunpack.c.h.b16 %v402
        %v2718 = vunpack.c.l.b16 %v403
        %v2719 = vunpack.c.h.b16 %v403
        %v2720 = vunpack.c.l.b16 %v404
        %v2721 = vunpack.c.h.b16 %v404
        %v2722 = vunpack.c.l.b16 %v405
        %v2723 = vunpack.c.h.b16 %v405
        %v2724 = vunpack.c.l.b16 %v406
        %v2725 = vunpack.c.h.b16 %v406
        %v2726 = vunpack.c.l.b16 %v407
        %v2727 = vunpack.c.h.b16 %v407
        %v2728 = vunpack.c.l.b16 %v408
        %v2729 = vunpack.c.h.b16 %v408
        %v2730 = vunpack.c.l.b16 %v409
        %v2731 = vunpack.c.h.b16 %v409
        %v2732 = vunpack.c.l.b16 %v410
        %v2733 = vunpack.c.h.b16 %v410
        %v2734 = vunpack.c.l.b16 %v411
        %v2735 = vunpack.c.h.b16 %v411
        %v2736 = vunpack.c.l.b16 %v412
        %v2737 = vunpack.c.h.b16 %v412
        %v2738 = vunpack.c.l.b16 %v413
        %v2739 = vunpack.c.h.b16 %v413
        %v2740 = vunpack.c.l.b16 %v414
        %v2741 = vunpack.c.h.b16 %v414
        %v2742 = vunpack.c.l.b16 %v415
        %v2743 = vunpack.c.h.b16 %v415
        %v2744 = vunpack.c.l.b16 %v416
        %v2745 = vunpack.c.h.b16 %v416
        %v2746 = vunpack.c.l.b16 %v417
        %v2747 = vunpack.c.h.b16 %v417
        %v2748 = vunpack.c.l.b16 %v418
        %v2749 = vunpack.c.h.b16 %v418
        %v2750 = vunpack.c.l.b16 %v419
        %v2751 = vunpack.c.h.b16 %v419
        %v2752 = vunpack.c.l.b16 %v420
        %v2753 = vunpack.c.h.b16 %v420
        %v2754 = vunpack.c.l.b16 %v421
        %v2755 = vunpack.c.h.b16 %v421
        %v2756 = vunpack.c.l.b16 %v422
        %v2757 = vunpack.c.h.b16 %v422
        %v2758 = vunpack.c.l.b16 %v423
        %v2759 = vunpack.c.h.b16 %v423
        %v2760 = vunpack.c.l.b16 %v424
        %v2761 = vunpack.c.h.b16 %v424
        %v2762 = vunpack.c.l.b16 %v425
        %v2763 = vunpack.c.h.b16 %v425
        %v2764 = vunpack.c.l.b16 %v426
        %v2765 = vunpack.c.h.b16 %v426
        %v2766 = vunpack.c.l.b16 %v427
        %v2767 = vunpack.c.h.b16 %v427
        %v2768 = vunpack.c.l.b16 %v428
        %v2769 = vunpack.c.h.b16 %v428
        %v2770 = vunpack.c.l.b16 %v429
        %v2771 = vunpack.c.h.b16 %v429
        %v2772 = vunpack.c.l.b16 %v430
        %v2773 = vunpack.c.h.b16 %v430
        %v2774 = vunpack.c.l.b16 %v431
        %v2775 = vunpack.c.h.b16 %v431
        %v2776 = vunpack.c.l.b16 %v432
        %v2777 = vunpack.c.h.b16 %v432
        %v2778 = vunpack.c.l.b16 %v433
        %v2779 = vunpack.c.h.b16 %v433
        %v2780 = vunpack.c.l.b16 %v434
        %v2781 = vunpack.c.h.b16 %v434
        %v2782 = vunpack.c.l.b16 %v435
        %v2783 = vunpack.c.h.b16 %v435
        %v2784 = vunpack.c.l.b16 %v436
        %v2785 = vunpack.c.h.b16 %v436
        %v2786 = vunpack.c.l.b16 %v437
        %v2787 = vunpack.c.h.b16 %v437
        %v2788 = vunpack.c.l.b16 %v438
        %v2789 = vunpack.c.h.b16 %v438
        %v2790 = vunpack.c.l.b16 %v439
        %v2791 = vunpack.c.h.b16 %v439
        %v2792 = vunpack.c.l.b16 %v440
        %v2793 = vunpack.c.h.b16 %v440
        %v2794 = vunpack.c.l.b16 %v441
        %v2795 = vunpack.c.h.b16 %v441
        %v2796 = vunpack.c.l.b16 %v442
        %v2797 = vunpack.c.h.b16 %v442
        %v2798 = vunpack.c.l.b16 %v443
        %v2799 = vunpack.c.h.b16 %v443
        %v2800 = vunpack.c.l.b16 %v444
        %v2801 = vunpack.c.h.b16 %v444
        %v2802 = vunpack.c.l.b16 %v445
        %v2803 = vunpack.c.h.b16 %v445
        %v2804 = vunpack.c.l.b16 %v446
        %v2805 = vunpack.c.h.b16 %v446
        %v2806 = vunpack.c.l.b16 %v447
        %v2807 = vunpack.c.h.b16 %v447
        %v2808 = vunpack.c.l.b16 %v448
        %v2809 = vunpack.c.h.b16 %v448
        %v2810 = vunpack.c.l.b16 %v449
        %v2811 = vunpack.c.h.b16 %v449
        %v2812 = vunpack.c.l.b16 %v450
        %v2813 = vunpack.c.h.b16 %v450
        %v2814 = vunpack.c.l.b16 %v451
        %v2815 = vunpack.c.h.b16 %v451
        %v2816 = vunpack.c.l.b16 %v452
        %v2817 = vunpack.c.h.b16 %v452
        %v2818 = vunpack.c.l.b16 %v453
        %v2819 = vunpack.c.h.b16 %v453
        %v2820 = vunpack.c.l.b16 %v454
        %v2821 = vunpack.c.h.b16 %v454
        %v2822 = vunpack.c.l.b16 %v455
        %v2823 = vunpack.c.h.b16 %v455
        %v2824 = vunpack.c.l.b16 %v456
        %v2825 = vunpack.c.h.b16 %v456
        %v2826 = vunpack.c.l.b16 %v457
        %v2827 = vunpack.c.h.b16 %v457
        %v2828 = vunpack.c.l.b16 %v458
        %v2829 = vunpack.c.h.b16 %v458
        %v2830 = vunpack.c.l.b16 %v459
        %v2831 = vunpack.c.h.b16 %v459
        %v2832 = vunpack.c.l.b16 %v460
        %v2833 = vunpack.c.h.b16 %v460
        %v2834 = vunpack.c.l.b16 %v461
        %v2835 = vunpack.c.h.b16 %v461
        %v2836 = vunpack.c.l.b16 %v462
        %v2837 = vunpack.c.h.b16 %v462
        %v2838 = vunpack.c.l.b16 %v463
        %v2839 = vunpack.c.h.b16 %v463
        %v2840 = vunpack.c.l.b16 %v464
        %v2841 = vunpack.c.h.b16 %v464
        %v2842 = vunpack.c.l.b16 %v465
        %v2843 = vunpack.c.h.b16 %v465
        %v2844 = vunpack.c.l.b16 %v466
        %v2845 = vunpack.c.h.b16 %v466
        %v2846 = vunpack.c.l.b16 %v467
        %v2847 = vunpack.c.h.b16 %v467
        %v2848 = vunpack.c.l.b16 %v468
        %v2849 = vunpack.c.h.b16 %v468
        %v2850 = vunpack.c.l.b16 %v469
        %v2851 = vunpack.c.h.b16 %v469
        %v2852 = vunpack.c.l.b16 %v470
        %v2853 = vunpack.c.h.b16 %v470
        %v2854 = vunpack.c.l.b16 %v471
        %v2855 = vunpack.c.h.b16 %v471
        %v2856 = vunpack.c.l.b16 %v472
        %v2857 = vunpack.c.h.b16 %v472
        %v2858 = vunpack.c.l.b16 %v473
        %v2859 = vunpack.c.h.b16 %v473
        %v2860 = vunpack.c.l.b16 %v474
        %v2861 = vunpack.c.h.b16 %v474
        %v2862 = vunpack.c.l.b16 %v475
        %v2863 = vunpack.c.h.b16 %v475
        %v2864 = vunpack.c.l.b16 %v476
        %v2865 = vunpack.c.h.b16 %v476
        %v2866 = vunpack.c.l.b16 %v477
        %v2867 = vunpack.c.h.b16 %v477
        %v2868 = vunpack.c.l.b16 %v478
        %v2869 = vunpack.c.h.b16 %v478
        %v2870 = vunpack.c.l.b16 %v479
        %v2871 = vunpack.c.h.b16 %v479
        %v2872 = vunpack.c.l.b16 %v480
        %v2873 = vunpack.c.h.b16 %v480
        %v2874 = vunpack.c.l.b16 %v481
        %v2875 = vunpack.c.h.b16 %v481
        %v2876 = vunpack.c.l.b16 %v482
        %v2877 = vunpack.c.h.b16 %v482
        %v2878 = vunpack.c.l.b16 %v483
        %v2879 = vunpack.c.h.b16 %v483
        %v2880 = vunpack.c.l.b16 %v484
        %v2881 = vunpack.c.h.b16 %v484
        %v2882 = vunpack.c.l.b16 %v485
        %v2883 = vunpack.c.h.b16 %v485
        %v2884 = vunpack.c.l.b16 %v486
        %v2885 = vunpack.c.h.b16 %v486
        %v2886 = vunpack.c.l.b16 %v487
        %v2887 = vunpack.c.h.b16 %v487
        %v2888 = vunpack.c.l.b16 %v488
        %v2889 = vunpack.c.h.b16 %v488
        %v2890 = vunpack.c.l.b16 %v489
        %v2891 = vunpack.c.h.b16 %v489
        %v2892 = vunpack.c.l.b16 %v490
        %v2893 = vunpack.c.h.b16 %v490
        %v2894 = vunpack.c.l.b16 %v491
        %v2895 = vunpack.c.h.b16 %v491
        %v2896 = vunpack.c.l.b16 %v492
        %v2897 = vunpack.c.h.b16 %v492
        %v2898 = vunpack.c.l.b16 %v493
        %v2899 = vunpack.c.h.b16 %v493
        %v2900 = vunpack.c.l.b16 %v494
        %v2901 = vunpack.c.h.b16 %v494
        %v2902 = vunpack.c.l.b16 %v495
        %v2903 = vunpack.c.h.b16 %v495
        %v2904 = vunpack.c.l.b16 %v496
        %v2905 = vunpack.c.h.b16 %v496
        %v2906 = vunpack.c.l.b16 %v497
        %v2907 = vunpack.c.h.b16 %v497
        %v2908 = vunpack.c.l.b16 %v498
        %v2909 = vunpack.c.h.b16 %v498
        %v2910 = vunpack.c.l.b16 %v499
        %v2911 = vunpack.c.h.b16 %v499
        %v2912 = vunpack.c.l.b16 %v500
        %v2913 = vunpack.c.h.b16 %v500
        %v2914 = vunpack.c.l.b16 %v501
        %v2915 = vunpack.c.h.b16 %v501
        %v2916 = vunpack.c.l.b16 %v502
        %v2917 = vunpack.c.h.b16 %v502
        %v2918 = vunpack.c.l.b16 %v503
        %v2919 = vunpack.c.h.b16 %v503
        %v2920 = vunpack.c.l.b16 %v504
        %v2921 = vunpack.c.h.b16 %v504
        %v2922 = vunpack.c.l.b16 %v505
        %v2923 = vunpack.c.h.b16 %v505
        %v2924 = vunpack.c.l.b16 %v506
        %v2925 = vunpack.c.h.b16 %v506
        %v2926 = vunpack.c.l.b16 %v507
        %v2927 = vunpack.c.h.b16 %v507
        %v2928 = vunpack.c.l.b16 %v508
        %v2929 = vunpack.c.h.b16 %v508
        %v2930 = vunpack.c.l.b16 %v509
        %v2931 = vunpack.c.h.b16 %v509
        %v2932 = vunpack.c.l.b16 %v510
        %v2933 = vunpack.c.h.b16 %v510
        %v2934 = vunpack.c.l.b16 %v511
        %v2935 = vunpack.c.h.b16 %v511
        %v2936 = vunpack.c.l.b16 %v512
        %v2937 = vunpack.c.h.b16 %v512
        %v2938 = vunpack.c.l.b16 %v513
        %v2939 = vunpack.c.h.b16 %v513
        %v2940 = vunpack.c.l.b16 %v514
        %v2941 = vunpack.c.h.b16 %v514
        %v2942 = vunpack.c.l.b16 %v515
        %v2943 = vunpack.c.h.b16 %v515
        %v2944 = vunpack.c.l.b16 %v516
        %v2945 = vunpack.c.h.b16 %v516
        %v2946 = vunpack.c.l.b16 %v517
        %v2947 = vunpack.c.h.b16 %v517
        %v2948 = vunpack.c.l.b16 %v518
        %v2949 = vunpack.c.h.b16 %v518
        %v2950 = vunpack.c.l.b16 %v519
        %v2951 = vunpack.c.h.b16 %v519
        %v2952 = vunpack.c.l.b16 %v520
        %v2953 = vunpack.c.h.b16 %v520
        %v2954 = vunpack.c.l.b16 %v521
        %v2955 = vunpack.c.h.b16 %v521
        %v2956 = vunpack.c.l.b16 %v522
        %v2957 = vunpack.c.h.b16 %v522
        %v2958 = vunpack.c.l.b16 %v523
        %v2959 = vunpack.c.h.b16 %v523
        %v2960 = vunpack.c.l.b16 %v524
        %v2961 = vunpack.c.h.b16 %v524
        %v2962 = vunpack.c.l.b16 %v525
        %v2963 = vunpack.c.h.b16 %v525
        %v2964 = vunpack.c.l.b16 %v526
        %v2965 = vunpack.c.h.b16 %v526
        %v2966 = vunpack.c.l.b16 %v527
        %v2967 = vunpack.c.h.b16 %v527
        %v2968 = vunpack.c.l.b16 %v528
        %v2969 = vunpack.c.h.b16 %v528
        %v2970 = vunpack.c.l.b16 %v529
        %v2971 = vunpack.c.h.b16 %v529
        %v2972 = vunpack.c.l.b16 %v530
        %v2973 = vunpack.c.h.b16 %v530
        %v2974 = vunpack.c.l.b16 %v531
        %v2975 = vunpack.c.h.b16 %v531
        %v2976 = vunpack.c.l.b16 %v532
        %v2977 = vunpack.c.h.b16 %v532
        %v2978 = vunpack.c.l.b16 %v533
        %v2979 = vunpack.c.h.b16 %v533
        %v2980 = vunpack.c.l.b16 %v534
        %v2981 = vunpack.c.h.b16 %v534
        %v2982 = vunpack.c.l.b16 %v535
        %v2983 = vunpack.c.h.b16 %v535
        %v2984 = vunpack.c.l.b16 %v536
        %v2985 = vunpack.c.h.b16 %v536
        %v2986 = vunpack.c.l.b16 %v537
        %v2987 = vunpack.c.h.b16 %v537
        %v2988 = vunpack.c.l.b16 %v538
        %v2989 = vunpack.c.h.b16 %v538
        %v2990 = vunpack.c.l.b16 %v539
        %v2991 = vunpack.c.h.b16 %v539
        %v2992 = vunpack.c.l.b16 %v540
        %v2993 = vunpack.c.h.b16 %v540
        %v2994 = vunpack.c.l.b16 %v541
        %v2995 = vunpack.c.h.b16 %v541
        %v2996 = vunpack.c.l.b16 %v542
        %v2997 = vunpack.c.h.b16 %v542
        %v2998 = vunpack.c.l.b16 %v543
        %v2999 = vunpack.c.h.b16 %v543
        %v3000 = vunpack.c.l.b16 %v544
        %v3001 = vunpack.c.h.b16 %v544
        %v3002 = vunpack.c.l.b16 %v545
        %v3003 = vunpack.c.h.b16 %v545
        %v3004 = vunpack.c.l.b16 %v546
        %v3005 = vunpack.c.h.b16 %v546
        %v3006 = vunpack.c.l.b16 %v547
        %v3007 = vunpack.c.h.b16 %v547
        %v3008 = vunpack.c.l.b16 %v548
        %v3009 = vunpack.c.h.b16 %v548
        %v3010 = vunpack.c.l.b16 %v549
        %v3011 = vunpack.c.h.b16 %v549
        %v3012 = vunpack.c.l.b16 %v550
        %v3013 = vunpack.c.h.b16 %v550
        %v3014 = vunpack.c.l.b16 %v551
        %v3015 = vunpack.c.h.b16 %v551
        %v3016 = vunpack.c.l.b16 %v552
        %v3017 = vunpack.c.h.b16 %v552
        %v3018 = vunpack.c.l.b16 %v553
        %v3019 = vunpack.c.h.b16 %v553
        %v3020 = vunpack.c.l.b16 %v554
        %v3021 = vunpack.c.h.b16 %v554
        %v3022 = vunpack.c.l.b16 %v555
        %v3023 = vunpack.c.h.b16 %v555
        %v3024 = vunpack.c.l.b16 %v556
        %v3025 = vunpack.c.h.b16 %v556
        %v3026 = vunpack.c.l.b16 %v557
        %v3027 = vunpack.c.h.b16 %v557
        %v3028 = vunpack.c.l.b16 %v558
        %v3029 = vunpack.c.h.b16 %v558
        %v3030 = vunpack.c.l.b16 %v559
        %v3031 = vunpack.c.h.b16 %v559
        %v3032 = vunpack.c.l.b16 %v560
        %v3033 = vunpack.c.h.b16 %v560
        %v3034 = vunpack.c.l.b16 %v561
        %v3035 = vunpack.c.h.b16 %v561
        %v3036 = vunpack.c.l.b16 %v562
        %v3037 = vunpack.c.h.b16 %v562
        %v3038 = vunpack.c.l.b16 %v563
        %v3039 = vunpack.c.h.b16 %v563
        %v3040 = vunpack.c.l.b16 %v564
        %v3041 = vunpack.c.h.b16 %v564
        %v3042 = vunpack.c.l.b16 %v565
        %v3043 = vunpack.c.h.b16 %v565
        %v3044 = vunpack.c.l.b16 %v566
        %v3045 = vunpack.c.h.b16 %v566
        %v3046 = vunpack.c.l.b16 %v567
        %v3047 = vunpack.c.h.b16 %v567
        %v3048 = vunpack.c.l.b16 %v568
        %v3049 = vunpack.c.h.b16 %v568
        %v3050 = vunpack.c.l.b16 %v569
        %v3051 = vunpack.c.h.b16 %v569
        %v3052 = vunpack.c.l.b16 %v570
        %v3053 = vunpack.c.h.b16 %v570
        %v3054 = vunpack.c.l.b16 %v571
        %v3055 = vunpack.c.h.b16 %v571
        %v3056 = vunpack.c.l.b16 %v572
        %v3057 = vunpack.c.h.b16 %v572
        %v3058 = vunpack.c.l.b16 %v573
        %v3059 = vunpack.c.h.b16 %v573
        %v3060 = vunpack.c.l.b16 %v574
        %v3061 = vunpack.c.h.b16 %v574
        %v3062 = vunpack.c.l.b16 %v575
        %v3063 = vunpack.c.h.b16 %v575
        %v3064 = vunpack.c.l.b16 %v576
        %v3065 = vunpack.c.h.b16 %v576
        %v3066 = vunpack.c.l.b16 %v577
        %v3067 = vunpack.c.h.b16 %v577
        %v3068 = vunpack.c.l.b16 %v578
        %v3069 = vunpack.c.h.b16 %v578
        %v3070 = vunpack.c.l.b16 %v579
        %v3071 = vunpack.c.h.b16 %v579
        %v3072 = vunpack.c.l.b16 %v580
        %v3073 = vunpack.c.h.b16 %v580
        %v3074 = vunpack.c.l.b16 %v581
        %v3075 = vunpack.c.h.b16 %v581
        %v3076 = vunpack.c.l.b16 %v582
        %v3077 = vunpack.c.h.b16 %v582
        %v3078 = vunpack.c.l.b16 %v583
        %v3079 = vunpack.c.h.b16 %v583
        %v3080 = vunpack.c.l.b16 %v584
        %v3081 = vunpack.c.h.b16 %v584
        %v3082 = vunpack.c.l.b16 %v585
        %v3083 = vunpack.c.h.b16 %v585
        %v3084 = vunpack.c.l.b16 %v586
        %v3085 = vunpack.c.h.b16 %v586
        %v3086 = vunpack.c.l.b16 %v587
        %v3087 = vunpack.c.h.b16 %v587
        %v3088 = vunpack.c.l.b16 %v588
        %v3089 = vunpack.c.h.b16 %v588
        %v3090 = vunpack.c.l.b16 %v589
        %v3091 = vunpack.c.h.b16 %v589
        %v3092 = vunpack.c.l.b16 %v590
        %v3093 = vunpack.c.h.b16 %v590
        %v3094 = vunpack.c.l.b16 %v591
        %v3095 = vunpack.c.h.b16 %v591
        %v3096 = vunpack.c.l.b16 %v592
        %v3097 = vunpack.c.h.b16 %v592
        %v3098 = vunpack.c.l.b16 %v593
        %v3099 = vunpack.c.h.b16 %v593
        %v3100 = vunpack.c.l.b16 %v594
        %v3101 = vunpack.c.h.b16 %v594
        %v3102 = vunpack.c.l.b16 %v595
        %v3103 = vunpack.c.h.b16 %v595
        %v3104 = vunpack.c.l.b16 %v596
        %v3105 = vunpack.c.h.b16 %v596
        %v3106 = vunpack.c.l.b16 %v597
        %v3107 = vunpack.c.h.b16 %v597
        %v3108 = vunpack.c.l.b16 %v598
        %v3109 = vunpack.c.h.b16 %v598
        %v3110 = vunpack.c.l.b16 %v599
        %v3111 = vunpack.c.h.b16 %v599
        %v3112 = vunpack.c.l.b16 %v600
        %v3113 = vunpack.c.h.b16 %v600
        %v3114 = vunpack.c.l.b16 %v601
        %v3115 = vunpack.c.h.b16 %v601
        %v3116 = vunpack.c.l.b16 %v602
        %v3117 = vunpack.c.h.b16 %v602
        %v3118 = vunpack.c.l.b16 %v603
        %v3119 = vunpack.c.h.b16 %v603
        %v3120 = vunpack.c.l.b16 %v604
        %v3121 = vunpack.c.h.b16 %v604
        %v3122 = vunpack.c.l.b16 %v605
        %v3123 = vunpack.c.h.b16 %v605
        %v3124 = vunpack.c.l.b16 %v606
        %v3125 = vunpack.c.h.b16 %v606
        %v3126 = vunpack.c.l.b16 %v607
        %v3127 = vunpack.c.h.b16 %v607
        %v3128 = vunpack.c.l.b16 %v608
        %v3129 = vunpack.c.h.b16 %v608
        %v3130 = vunpack.c.l.b16 %v609
        %v3131 = vunpack.c.h.b16 %v609
        %v3132 = vunpack.c.l.b16 %v610
        %v3133 = vunpack.c.h.b16 %v610
        %v3134 = vunpack.c.l.b16 %v611
        %v3135 = vunpack.c.h.b16 %v611
        %v3136 = vunpack.c.l.b16 %v612
        %v3137 = vunpack.c.h.b16 %v612
        %v3138 = vunpack.c.l.b16 %v613
        %v3139 = vunpack.c.h.b16 %v613
        %v3140 = vunpack.c.l.b16 %v614
        %v3141 = vunpack.c.h.b16 %v614
        %v3142 = vunpack.c.l.b16 %v615
        %v3143 = vunpack.c.h.b16 %v615
        %v3144 = vunpack.c.l.b16 %v616
        %v3145 = vunpack.c.h.b16 %v616
        %v3146 = vunpack.c.l.b16 %v617
        %v3147 = vunpack.c.h.b16 %v617
        %v3148 = vunpack.c.l.b16 %v618
        %v3149 = vunpack.c.h.b16 %v618
        %v3150 = vunpack.c.l.b16 %v619
        %v3151 = vunpack.c.h.b16 %v619
        %v3152 = vunpack.c.l.b16 %v620
        %v3153 = vunpack.c.h.b16 %v620
        %v3154 = vunpack.c.l.b16 %v621
        %v3155 = vunpack.c.h.b16 %v621
        %v3156 = vunpack.c.l.b16 %v622
        %v3157 = vunpack.c.h.b16 %v622
        %v3158 = vunpack.c.l.b16 %v623
        %v3159 = vunpack.c.h.b16 %v623
        %v3160 = vunpack.c.l.b16 %v624
        %v3161 = vunpack.c.h.b16 %v624
        %v3162 = vunpack.c.l.b16 %v625
        %v3163 = vunpack.c.h.b16 %v625
        %v3164 = vunpack.c.l.b16 %v626
        %v3165 = vunpack.c.h.b16 %v626
        %v3166 = vunpack.c.l.b16 %v627
        %v3167 = vunpack.c.h.b16 %v627
        %v3168 = vunpack.c.l.b16 %v628
        %v3169 = vunpack.c.h.b16 %v628
        %v3170 = vunpack.c.l.b16 %v629
        %v3171 = vunpack.c.h.b16 %v629
        %v3172 = vunpack.c.l.b16 %v630
        %v3173 = vunpack.c.h.b16 %v630
        %v3174 = vunpack.c.l.b16 %v631
        %v3175 = vunpack.c.h.b16 %v631
        %v3176 = vunpack.c.l.b16 %v632
        %v3177 = vunpack.c.h.b16 %v632
        %v3178 = vunpack.c.l.b16 %v633
        %v3179 = vunpack.c.h.b16 %v633
        %v3180 = vunpack.c.l.b16 %v634
        %v3181 = vunpack.c.h.b16 %v634
        %v3182 = vunpack.c.l.b16 %v635
        %v3183 = vunpack.c.h.b16 %v635
        %v3184 = vunpack.c.l.b16 %v636
        %v3185 = vunpack.c.h.b16 %v636
        %v3186 = vunpack.c.l.b16 %v637
        %v3187 = vunpack.c.h.b16 %v637
        %v3188 = vunpack.c.l.b16 %v638
        %v3189 = vunpack.c.h.b16 %v638
        %v3190 = vunpack.c.l.b16 %v639
        %v3191 = vunpack.c.h.b16 %v639
        %v3192 = vunpack.c.l.b16 %v640
        %v3193 = vunpack.c.h.b16 %v640
        %v3194 = vunpack.c.l.b16 %v641
        %v3195 = vunpack.c.h.b16 %v641
        %v3196 = vunpack.c.l.b16 %v642
        %v3197 = vunpack.c.h.b16 %v642
        %v3198 = vunpack.c.l.b16 %v643
        %v3199 = vunpack.c.h.b16 %v643
        %v3200 = vunpack.c.l.b16 %v644
        %v3201 = vunpack.c.h.b16 %v644
        %v3202 = vunpack.c.l.b16 %v645
        %v3203 = vunpack.c.h.b16 %v645
        %v3204 = vunpack.c.l.b16 %v646
        %v3205 = vunpack.c.h.b16 %v646
        %v3206 = vunpack.c.l.b16 %v647
        %v3207 = vunpack.c.h.b16 %v647
        %v3208 = vunpack.c.l.b16 %v648
        %v3209 = vunpack.c.h.b16 %v648
        %v3210 = vunpack.c.l.b16 %v649
        %v3211 = vunpack.c.h.b16 %v649
        %v3212 = vunpack.c.l.b16 %v650
        %v3213 = vunpack.c.h.b16 %v650
        %v3214 = vunpack.c.l.b16 %v651
        %v3215 = vunpack.c.h.b16 %v651
        %v3216 = vunpack.c.l.b16 %v652
        %v3217 = vunpack.c.h.b16 %v652
        %v3218 = vunpack.c.l.b16 %v653
        %v3219 = vunpack.c.h.b16 %v653
        %v3220 = vunpack.c.l.b16 %v654
        %v3221 = vunpack.c.h.b16 %v654
        %v3222 = vunpack.c.l.b16 %v655
        %v3223 = vunpack.c.h.b16 %v655
        %v3224 = vunpack.c.l.b16 %v656
        %v3225 = vunpack.c.h.b16 %v656
        %v3226 = vunpack.c.l.b16 %v657
        %v3227 = vunpack.c.h.b16 %v657
        %v3228 = vunpack.c.l.b16 %v658
        %v3229 = vunpack.c.h.b16 %v658
        %v3230 = vunpack.c.l.b16 %v659
        %v3231 = vunpack.c.h.b16 %v659
        %v3232 = vunpack.c.l.b16 %v660
        %v3233 = vunpack.c.h.b16 %v660
        %v3234 = vunpack.c.l.b16 %v661
        %v3235 = vunpack.c.h.b16 %v661
        %v3236 = vunpack.c.l.b16 %v662
        %v3237 = vunpack.c.h.b16 %v662
        %v3238 = vunpack.c.l.b16 %v663
        %v3239 = vunpack.c.h.b16 %v663
        %v3240 = vunpack.c.l.b16 %v664
        %v3241 = vunpack.c.h.b16 %v664
        %v3242 = vunpack.c.l.b16 %v665
        %v3243 = vunpack.c.h.b16 %v665
        %v3244 = vunpack.c.l.b16 %v666
        %v3245 = vunpack.c.h.b16 %v666
        %v3246 = vunpack.c.l.b16 %v667
        %v3247 = vunpack.c.h.b16 %v667
        %v3248 = vunpack.c.l.b16 %v668
        %v3249 = vunpack.c.h.b16 %v668
        %v3250 = vunpack.c.l.b16 %v669
        %v3251 = vunpack.c.h.b16 %v669
        %v3252 = vunpack.c.l.b16 %v670
        %v3253 = vunpack.c.h.b16 %v670
        %v3254 = vunpack.c.l.b16 %v671
        %v3255 = vunpack.c.h.b16 %v671
        %v3256 = vunpack.c.l.b16 %v672
        %v3257 = vunpack.c.h.b16 %v672
        %v3258 = vunpack.c.l.b16 %v673
        %v3259 = vunpack.c.h.b16 %v673
        %v3260 = vunpack.c.l.b16 %v674
        %v3261 = vunpack.c.h.b16 %v674
        %v3262 = vunpack.c.l.b16 %v675
        %v3263 = vunpack.c.h.b16 %v675
        %v3264 = vunpack.c.l.b16 %v676
        %v3265 = vunpack.c.h.b16 %v676
        %v3266 = vunpack.c.l.b16 %v677
        %v3267 = vunpack.c.h.b16 %v677
        %v3268 = vunpack.c.l.b16 %v678
        %v3269 = vunpack.c.h.b16 %v678
        %v3270 = vunpack.c.l.b16 %v679
        %v3271 = vunpack.c.h.b16 %v679
        %v3272 = vunpack.c.l.b16 %v680
        %v3273 = vunpack.c.h.b16 %v680
        %v3274 = vunpack.c.l.b16 %v681
        %v3275 = vunpack.c.h.b16 %v681
        %v3276 = vunpack.c.l.b16 %v682
        %v3277 = vunpack.c.h.b16 %v682
        %v3278 = vunpack.c.l.b16 %v683
        %v3279 = vunpack.c.h.b16 %v683
        %v3280 = vunpack.c.l.b16 %v684
        %v3281 = vunpack.c.h.b16 %v684
        %v3282 = vunpack.c.l.b16 %v685
        %v3283 = vunpack.c.h.b16 %v685
        %v3284 = vunpack.c.l.b16 %v686
        %v3285 = vunpack.c.h.b16 %v686
        %v3286 = vunpack.c.l.b16 %v687
        %v3287 = vunpack.c.h.b16 %v687
        %v3288 = vunpack.c.l.b16 %v688
        %v3289 = vunpack.c.h.b16 %v688
        %v3290 = vunpack.c.l.b16 %v689
        %v3291 = vunpack.c.h.b16 %v689
        %v3292 = vunpack.c.l.b16 %v690
        %v3293 = vunpack.c.h.b16 %v690
        %v3294 = vunpack.c.l.b16 %v691
        %v3295 = vunpack.c.h.b16 %v691
        %v3296 = vunpack.c.l.b16 %v692
        %v3297 = vunpack.c.h.b16 %v692
        %v3298 = vunpack.c.l.b16 %v693
        %v3299 = vunpack.c.h.b16 %v693
        %v3300 = vunpack.c.l.b16 %v694
        %v3301 = vunpack.c.h.b16 %v694
        %v3302 = vunpack.c.l.b16 %v695
        %v3303 = vunpack.c.h.b16 %v695
        %v3304 = vunpack.c.l.b16 %v696
        %v3305 = vunpack.c.h.b16 %v696
        %v3306 = vunpack.c.l.b16 %v697
        %v3307 = vunpack.c.h.b16 %v697
        %v3308 = vunpack.c.l.b16 %v698
        %v3309 = vunpack.c.h.b16 %v698
        %v3310 = vunpack.c.l.b16 %v699
        %v3311 = vunpack.c.h.b16 %v699
        %v3312 = vunpack.c.l.b16 %v700
        %v3313 = vunpack.c.h.b16 %v700
        %v3314 = vunpack.c.l.b16 %v701
        %v3315 = vunpack.c.h.b16 %v701
        %v3316 = vunpack.c.l.b16 %v702
        %v3317 = vunpack.c.h.b16 %v702
        %v3318 = vunpack.c.l.b16 %v703
        %v3319 = vunpack.c.h.b16 %v703
        %v3320 = vunpack.c.l.b16 %v704
        %v3321 = vunpack.c.h.b16 %v704
        %v3322 = vunpack.c.l.b16 %v705
        %v3323 = vunpack.c.h.b16 %v705
        %v3324 = vunpack.c.l.b16 %v706
        %v3325 = vunpack.c.h.b16 %v706
        %v3326 = vunpack.c.l.b16 %v707
        %v3327 = vunpack.c.h.b16 %v707
        %v3328 = vunpack.c.l.b16 %v708
        %v3329 = vunpack.c.h.b16 %v708
        %v3330 = vunpack.c.l.b16 %v709
        %v3331 = vunpack.c.h.b16 %v709
        %v3332 = vunpack.c.l.b16 %v710
        %v3333 = vunpack.c.h.b16 %v710
        %v3334 = vunpack.c.l.b16 %v711
        %v3335 = vunpack.c.h.b16 %v711
        %v3336 = vunpack.c.l.b16 %v712
        %v3337 = vunpack.c.h.b16 %v712
        %v3338 = vunpack.c.l.b16 %v713
        %v3339 = vunpack.c.h.b16 %v713
        %v3340 = vunpack.c.l.b16 %v714
        %v3341 = vunpack.c.h.b16 %v714
        %v3342 = vunpack.c.l.b16 %v715
        %v3343 = vunpack.c.h.b16 %v715
        %v3344 = vunpack.c.l.b16 %v716
        %v3345 = vunpack.c.h.b16 %v716
        %v3346 = vunpack.c.l.b16 %v717
        %v3347 = vunpack.c.h.b16 %v717
        %v3348 = vunpack.c.l.b16 %v718
        %v3349 = vunpack.c.h.b16 %v718
        %v3350 = vunpack.c.l.b16 %v719
        %v3351 = vunpack.c.h.b16 %v719
        %v3352 = vunpack.c.l.b16 %v720
        %v3353 = vunpack.c.h.b16 %v720
        %v3354 = vunpack.c.l.b16 %v721
        %v3355 = vunpack.c.h.b16 %v721
        %v3356 = vunpack.c.l.b16 %v722
        %v3357 = vunpack.c.h.b16 %v722
        %v3358 = vunpack.c.l.b16 %v723
        %v3359 = vunpack.c.h.b16 %v723
        %v3360 = vunpack.c.l.b16 %v724
        %v3361 = vunpack.c.h.b16 %v724
        %v3362 = vunpack.c.l.b16 %v725
        %v3363 = vunpack.c.h.b16 %v725
        %v3364 = vunpack.c.l.b16 %v726
        %v3365 = vunpack.c.h.b16 %v726
        %v3366 = vunpack.c.l.b16 %v727
        %v3367 = vunpack.c.h.b16 %v727
        %v3368 = vunpack.c.l.b16 %v728
        %v3369 = vunpack.c.h.b16 %v728
        %v3370 = vunpack.c.l.b16 %v729
        %v3371 = vunpack.c.h.b16 %v729
        %v3372 = vunpack.c.l.b16 %v730
        %v3373 = vunpack.c.h.b16 %v730
        %v3374 = vunpack.c.l.b16 %v731
        %v3375 = vunpack.c.h.b16 %v731
        %v3376 = vunpack.c.l.b16 %v732
        %v3377 = vunpack.c.h.b16 %v732
        %v3378 = vunpack.c.l.b16 %v733
        %v3379 = vunpack.c.h.b16 %v733
        %v3380 = vunpack.c.l.b16 %v734
        %v3381 = vunpack.c.h.b16 %v734
        %v3382 = vunpack.c.l.b16 %v735
        %v3383 = vunpack.c.h.b16 %v735
        %v3384 = vunpack.c.l.b16 %v736
        %v3385 = vunpack.c.h.b16 %v736
        %v3386 = vunpack.c.l.b16 %v737
        %v3387 = vunpack.c.h.b16 %v737
        %v3388 = vunpack.c.l.b16 %v738
        %v3389 = vunpack.c.h.b16 %v738
        %v3390 = vunpack.c.l.b16 %v739
        %v3391 = vunpack.c.h.b16 %v739
        %v3392 = vunpack.c.l.b16 %v740
        %v3393 = vunpack.c.h.b16 %v740
        %v3394 = vunpack.c.l.b16 %v741
        %v3395 = vunpack.c.h.b16 %v741
        %v3396 = vunpack.c.l.b16 %v742
        %v3397 = vunpack.c.h.b16 %v742
        %v3398 = vunpack.c.l.b16 %v743
        %v3399 = vunpack.c.h.b16 %v743
        %v3400 = vunpack.c.l.b16 %v744
        %v3401 = vunpack.c.h.b16 %v744
        %v3402 = vunpack.c.l.b16 %v745
        %v3403 = vunpack.c.h.b16 %v745
        %v3404 = vunpack.c.l.b16 %v746
        %v3405 = vunpack.c.h.b16 %v746
        %v3406 = vunpack.c.l.b16 %v747
        %v3407 = vunpack.c.h.b16 %v747
        %v3408 = vunpack.c.l.b16 %v748
        %v3409 = vunpack.c.h.b16 %v748
        %v3410 = vunpack.c.l.b16 %v749
        %v3411 = vunpack.c.h.b16 %v749
        %v3412 = vunpack.c.l.b16 %v750
        %v3413 = vunpack.c.h.b16 %v750
        %v3414 = vunpack.c.l.b16 %v751
        %v3415 = vunpack.c.h.b16 %v751
        %v3416 = vunpack.c.l.b16 %v752
        %v3417 = vunpack.c.h.b16 %v752
        %v3418 = vunpack.c.l.b16 %v753
        %v3419 = vunpack.c.h.b16 %v753
        %v3420 = vunpack.c.l.b16 %v754
        %v3421 = vunpack.c.h.b16 %v754
        %v3422 = vunpack.c.l.b16 %v755
        %v3423 = vunpack.c.h.b16 %v755
        %v3424 = vunpack.c.l.b16 %v756
        %v3425 = vunpack.c.h.b16 %v756
        %v3426 = vunpack.c.l.b16 %v757
        %v3427 = vunpack.c.h.b16 %v757
        %v3428 = vunpack.c.l.b16 %v758
        %v3429 = vunpack.c.h.b16 %v758
        %v3430 = vunpack.c.l.b16 %v759
        %v3431 = vunpack.c.h.b16 %v759
        %v3432 = vunpack.c.l.b16 %v760
        %v3433 = vunpack.c.h.b16 %v760
        %v3434 = vunpack.c.l.b16 %v761
        %v3435 = vunpack.c.h.b16 %v761
        %v3436 = vunpack.c.l.b16 %v762
        %v3437 = vunpack.c.h.b16 %v762
        %v3438 = vunpack.c.l.b16 %v763
        %v3439 = vunpack.c.h.b16 %v763
        %v3440 = vunpack.c.l.b16 %v764
        %v3441 = vunpack.c.h.b16 %v764
        %v3442 = vunpack.c.l.b16 %v765
        %v3443 = vunpack.c.h.b16 %v765
        %v3444 = vunpack.c.l.b16 %v766
        %v3445 = vunpack.c.h.b16 %v766
        %v3446 = vunpack.c.l.b16 %v767
        %v3447 = vunpack.c.h.b16 %v767
        %v3448 = vunpack.c.l.b16 %v768
        %v3449 = vunpack.c.h.b16 %v768
        %v3450 = vunpack.c.l.b16 %v769
        %v3451 = vunpack.c.h.b16 %v769
        %v3452 = vunpack.c.l.b16 %v770
        %v3453 = vunpack.c.h.b16 %v770
        %v3454 = vunpack.c.l.b16 %v771
        %v3455 = vunpack.c.h.b16 %v771
        %v3456 = vunpack.c.l.b16 %v772
        %v3457 = vunpack.c.h.b16 %v772
        %v3458 = vunpack.c.l.b16 %v773
        %v3459 = vunpack.c.h.b16 %v773
        %v3460 = vunpack.c.l.b16 %v774
        %v3461 = vunpack.c.h.b16 %v774
        %v3462 = vunpack.c.l.b16 %v775
        %v3463 = vunpack.c.h.b16 %v775
        %v3464 = vunpack.c.l.b16 %v776
        %v3465 = vunpack.c.h.b16 %v776
        %v3466 = vunpack.c.l.b16 %v777
        %v3467 = vunpack.c.h.b16 %v777
        %v3468 = vunpack.c.l.b16 %v778
        %v3469 = vunpack.c.h.b16 %v778
        %v3470 = vunpack.c.l.b16 %v779
        %v3471 = vunpack.c.h.b16 %v779
        %v3472 = vunpack.c.l.b16 %v780
        %v3473 = vunpack.c.h.b16 %v780
        %v3474 = vunpack.c.l.b16 %v781
        %v3475 = vunpack.c.h.b16 %v781
        %v3476 = vunpack.c.l.b16 %v782
        %v3477 = vunpack.c.h.b16 %v782
        %v3478 = vunpack.c.l.b16 %v783
        %v3479 = vunpack.c.h.b16 %v783
        %v3480 = vunpack.c.l.b16 %v784
        %v3481 = vunpack.c.h.b16 %v784
        %v3482 = vunpack.c.l.b16 %v785
        %v3483 = vunpack.c.h.b16 %v785
        %v3484 = vunpack.c.l.b16 %v786
        %v3485 = vunpack.c.h.b16 %v786
        %v3486 = vunpack.c.l.b16 %v787
        %v3487 = vunpack.c.h.b16 %v787
        %v3488 = vunpack.c.l.b16 %v788
        %v3489 = vunpack.c.h.b16 %v788
        %v3490 = vunpack.c.l.b16 %v789
        %v3491 = vunpack.c.h.b16 %v789
        %v3492 = vunpack.c.l.b16 %v790
        %v3493 = vunpack.c.h.b16 %v790
        %v3494 = vunpack.c.l.b16 %v791
        %v3495 = vunpack.c.h.b16 %v791
        %v3496 = vunpack.c.l.b16 %v792
        %v3497 = vunpack.c.h.b16 %v792
        %v3498 = vunpack.c.l.b16 %v793
        %v3499 = vunpack.c.h.b16 %v793
        %v3500 = vunpack.c.l.b16 %v794
        %v3501 = vunpack.c.h.b16 %v794
        %v3502 = vunpack.c.l.b16 %v795
        %v3503 = vunpack.c.h.b16 %v795
        %v3504 = vunpack.c.l.b16 %v796
        %v3505 = vunpack.c.h.b16 %v796
        %v3506 = vunpack.c.l.b16 %v797
        %v3507 = vunpack.c.h.b16 %v797
        %v3508 = vunpack.c.l.b16 %v798
        %v3509 = vunpack.c.h.b16 %v798
        %v3510 = vunpack.c.l.b16 %v799
        %v3511 = vunpack.c.h.b16 %v799
        %v3512 = vunpack.c.l.b16 %v800
        %v3513 = vunpack.c.h.b16 %v800
        %v3514 = vunpack.c.l.b16 %v801
        %v3515 = vunpack.c.h.b16 %v801
        %v3516 = vunpack.c.l.b16 %v802
        %v3517 = vunpack.c.h.b16 %v802
        %v3518 = vunpack.c.l.b16 %v803
        %v3519 = vunpack.c.h.b16 %v803
        %v3520 = vunpack.c.l.b16 %v804
        %v3521 = vunpack.c.h.b16 %v804
        %v3522 = vunpack.c.l.b16 %v805
        %v3523 = vunpack.c.h.b16 %v805
        %v3524 = vunpack.c.l.b16 %v806
        %v3525 = vunpack.c.h.b16 %v806
        %v3526 = vunpack.c.l.b16 %v807
        %v3527 = vunpack.c.h.b16 %v807
        %v3528 = vunpack.c.l.b16 %v808
        %v3529 = vunpack.c.h.b16 %v808
        %v3530 = vunpack.c.l.b16 %v809
        %v3531 = vunpack.c.h.b16 %v809
        %v3532 = vunpack.c.l.b16 %v810
        %v3533 = vunpack.c.h.b16 %v810
        %v3534 = vunpack.c.l.b16 %v811
        %v3535 = vunpack.c.h.b16 %v811
        %v3536 = vunpack.c.l.b16 %v812
        %v3537 = vunpack.c.h.b16 %v812
        %v3538 = vunpack.c.l.b16 %v813
        %v3539 = vunpack.c.h.b16 %v813
        %v3540 = vunpack.c.l.b16 %v814
        %v3541 = vunpack.c.h.b16 %v814
        %v3542 = vunpack.c.l.b16 %v815
        %v3543 = vunpack.c.h.b16 %v815
        %v3544 = vunpack.c.l.b16 %v816
        %v3545 = vunpack.c.h.b16 %v816
        %v3546 = vunpack.c.l.b16 %v817
        %v3547 = vunpack.c.h.b16 %v817
        %v3548 = vunpack.c.l.b16 %v818
        %v3549 = vunpack.c.h.b16 %v818
        %v3550 = vunpack.c.l.b16 %v819
        %v3551 = vunpack.c.h.b16 %v819
        %v3552 = vunpack.c.l.b16 %v820
        %v3553 = vunpack.c.h.b16 %v820
        %v3554 = vunpack.c.l.b16 %v821
        %v3555 = vunpack.c.h.b16 %v821
        %v3556 = vunpack.c.l.b16 %v822
        %v3557 = vunpack.c.h.b16 %v822
        %v3558 = vunpack.c.l.b16 %v823
        %v3559 = vunpack.c.h.b16 %v823
        %v3560 = vunpack.c.l.b16 %v824
        %v3561 = vunpack.c.h.b16 %v824
        %v3562 = vunpack.c.l.b16 %v825
        %v3563 = vunpack.c.h.b16 %v825
        %v3564 = vunpack.c.l.b16 %v826
        %v3565 = vunpack.c.h.b16 %v826
        %v3566 = vunpack.c.l.b16 %v827
        %v3567 = vunpack.c.h.b16 %v827
        %v3568 = vunpack.c.l.b16 %v828
        %v3569 = vunpack.c.h.b16 %v828
        %v3570 = vunpack.c.l.b16 %v829
        %v3571 = vunpack.c.h.b16 %v829
        %v3572 = vunpack.c.l.b16 %v830
        %v3573 = vunpack.c.h.b16 %v830
        %v3574 = vunpack.c.l.b16 %v831
        %v3575 = vunpack.c.h.b16 %v831
        %v3576 = vunpack.c.l.b16 %v832
        %v3577 = vunpack.c.h.b16 %v832
        %v3578 = vunpack.c.l.b16 %v833
        %v3579 = vunpack.c.h.b16 %v833
        %v3580 = vunpack.c.l.b16 %v834
        %v3581 = vunpack.c.h.b16 %v834
        %v3582 = vunpack.c.l.b16 %v835
        %v3583 = vunpack.c.h.b16 %v835
        %v3584 = vunpack.c.l.b16 %v836
        %v3585 = vunpack.c.h.b16 %v836
        %v3586 = vunpack.c.l.b16 %v837
        %v3587 = vunpack.c.h.b16 %v837
        %v3588 = vunpack.c.l.b16 %v838
        %v3589 = vunpack.c.h.b16 %v838
        %v3590 = vunpack.c.l.b16 %v839
        %v3591 = vunpack.c.h.b16 %v839
        %v3592 = vunpack.c.l.b16 %v840
        %v3593 = vunpack.c.h.b16 %v840
        %v3594 = vunpack.c.l.b16 %v841
        %v3595 = vunpack.c.h.b16 %v841
        %v3596 = vunpack.c.l.b16 %v842
        %v3597 = vunpack.c.h.b16 %v842
        %v3598 = vunpack.c.l.b16 %v843
        %v3599 = vunpack.c.h.b16 %v843
        %v3600 = vunpack.c.l.b16 %v844
        %v3601 = vunpack.c.h.b16 %v844
        %v3602 = vunpack.c.l.b16 %v845
        %v3603 = vunpack.c.h.b16 %v845
        %v3604 = vunpack.c.l.b16 %v846
        %v3605 = vunpack.c.h.b16 %v846
        %v3606 = vunpack.c.l.b16 %v847
        %v3607 = vunpack.c.h.b16 %v847
        %v3608 = vunpack.c.l.b16 %v848
        %v3609 = vunpack.c.h.b16 %v848
        %v3610 = vunpack.c.l.b16 %v849
        %v3611 = vunpack.c.h.b16 %v849
        %v3612 = vunpack.c.l.b16 %v850
        %v3613 = vunpack.c.h.b16 %v850
        %v3614 = vunpack.c.l.b16 %v851
        %v3615 = vunpack.c.h.b16 %v851
        %v3616 = vunpack.c.l.b16 %v852
        %v3617 = vunpack.c.h.b16 %v852
        %v3618 = vunpack.c.l.b16 %v853
        %v3619 = vunpack.c.h.b16 %v853
        %v3620 = vunpack.c.l.b16 %v854
        %v3621 = vunpack.c.h.b16 %v854
        %v3622 = vunpack.c.l.b16 %v855
        %v3623 = vunpack.c.h.b16 %v855
        %v3624 = vunpack.c.l.b16 %v856
        %v3625 = vunpack.c.h.b16 %v856
        %v3626 = vunpack.c.l.b16 %v857
        %v3627 = vunpack.c.h.b16 %v857
        %v3628 = vunpack.c.l.b16 %v858
        %v3629 = vunpack.c.h.b16 %v858
        %v3630 = vunpack.c.l.b16 %v859
        %v3631 = vunpack.c.h.b16 %v859
        %v3632 = vunpack.c.l.b16 %v860
        %v3633 = vunpack.c.h.b16 %v860
        %v3634 = vunpack.c.l.b16 %v861
        %v3635 = vunpack.c.h.b16 %v861
        %v3636 = vunpack.c.l.b16 %v862
        %v3637 = vunpack.c.h.b16 %v862
        %v3638 = vunpack.c.l.b16 %v863
        %v3639 = vunpack.c.h.b16 %v863
        %v3640 = vunpack.c.l.b16 %v864
        %v3641 = vunpack.c.h.b16 %v864
        %v3642 = vunpack.c.l.b16 %v865
        %v3643 = vunpack.c.h.b16 %v865
        %v3644 = vunpack.c.l.b16 %v866
        %v3645 = vunpack.c.h.b16 %v866
        %v3646 = vunpack.c.l.b16 %v867
        %v3647 = vunpack.c.h.b16 %v867
        %v3648 = vunpack.c.l.b16 %v868
        %v3649 = vunpack.c.h.b16 %v868
        %v3650 = vunpack.c.l.b16 %v869
        %v3651 = vunpack.c.h.b16 %v869
        %v3652 = vunpack.c.l.b16 %v870
        %v3653 = vunpack.c.h.b16 %v870
        %v3654 = vunpack.c.l.b16 %v871
        %v3655 = vunpack.c.h.b16 %v871
        %v3656 = vunpack.c.l.b16 %v872
        %v3657 = vunpack.c.h.b16 %v872
        %v3658 = vunpack.c.l.b16 %v873
        %v3659 = vunpack.c.h.b16 %v873
        %v3660 = vunpack.c.l.b16 %v874
        %v3661 = vunpack.c.h.b16 %v874
        %v3662 = vunpack.c.l.b16 %v875
        %v3663 = vunpack.c.h.b16 %v875
        %v3664 = vunpack.c.l.b16 %v876
        %v3665 = vunpack.c.h.b16 %v876
        %v3666 = vunpack.c.l.b16 %v877
        %v3667 = vunpack.c.h.b16 %v877
        %v3668 = vunpack.c.l.b16 %v878
        %v3669 = vunpack.c.h.b16 %v878
        %v3670 = vunpack.c.l.b16 %v879
        %v3671 = vunpack.c.h.b16 %v879
        %v3672 = vunpack.c.l.b16 %v880
        %v3673 = vunpack.c.h.b16 %v880
        %v3674 = vunpack.c.l.b16 %v881
        %v3675 = vunpack.c.h.b16 %v881
        %v3676 = vunpack.c.l.b16 %v882
        %v3677 = vunpack.c.h.b16 %v882
        %v3678 = vunpack.c.l.b16 %v883
        %v3679 = vunpack.c.h.b16 %v883
        %v3680 = vunpack.c.l.b16 %v884
        %v3681 = vunpack.c.h.b16 %v884
        %v3682 = vunpack.c.l.b16 %v885
        %v3683 = vunpack.c.h.b16 %v885
        %v3684 = vunpack.c.l.b16 %v886
        %v3685 = vunpack.c.h.b16 %v886
        %v3686 = vunpack.c.l.b16 %v887
        %v3687 = vunpack.c.h.b16 %v887
        %v3688 = vunpack.c.l.b16 %v888
        %v3689 = vunpack.c.h.b16 %v888
        %v3690 = vunpack.c.l.b16 %v889
        %v3691 = vunpack.c.h.b16 %v889
        %v3692 = vunpack.c.l.b16 %v890
        %v3693 = vunpack.c.h.b16 %v890
        %v3694 = vunpack.c.l.b16 %v891
        %v3695 = vunpack.c.h.b16 %v891
        %v3696 = vunpack.c.l.b16 %v892
        %v3697 = vunpack.c.h.b16 %v892
        %v3698 = vunpack.c.l.b16 %v893
        %v3699 = vunpack.c.h.b16 %v893
        %v3700 = vunpack.c.l.b16 %v894
        %v3701 = vunpack.c.h.b16 %v894
        %v3702 = vunpack.c.l.b16 %v895
        %v3703 = vunpack.c.h.b16 %v895
        %v3704 = vunpack.c.l.b16 %v896
        %v3705 = vunpack.c.h.b16 %v896
        %v3706 = vunpack.c.l.b16 %v897
        %v3707 = vunpack.c.h.b16 %v897
        %v3708 = vunpack.c.l.b16 %v898
        %v3709 = vunpack.c.h.b16 %v898
        %v3710 = vunpack.c.l.b16 %v899
        %v3711 = vunpack.c.h.b16 %v899
        %v3712 = vunpack.c.l.b16 %v900
        %v3713 = vunpack.c.h.b16 %v900
        %v3714 = vunpack.c.l.b16 %v901
        %v3715 = vunpack.c.h.b16 %v901
        %v3716 = vunpack.c.l.b16 %v902
        %v3717 = vunpack.c.h.b16 %v902
        %v3718 = vunpack.c.l.b16 %v903
        %v3719 = vunpack.c.h.b16 %v903
        %v3720 = vunpack.c.l.b16 %v904
        %v3721 = vunpack.c.h.b16 %v904
        %v3722 = vunpack.c.l.b16 %v905
        %v3723 = vunpack.c.h.b16 %v905
        %v3724 = vunpack.c.l.b16 %v906
        %v3725 = vunpack.c.h.b16 %v906
        %v3726 = vunpack.c.l.b16 %v907
        %v3727 = vunpack.c.h.b16 %v907
        %v3728 = vunpack.c.l.b16 %v908
        %v3729 = vunpack.c.h.b16 %v908
        %v3730 = vunpack.c.l.b16 %v909
        %v3731 = vunpack.c.h.b16 %v909
        %v3732 = vunpack.c.l.b16 %v910
        %v3733 = vunpack.c.h.b16 %v910
        %v3734 = vunpack.c.l.b16 %v911
        %v3735 = vunpack.c.h.b16 %v911
        %v3736 = vunpack.c.l.b16 %v912
        %v3737 = vunpack.c.h.b16 %v912
        %v3738 = vunpack.c.l.b16 %v913
        %v3739 = vunpack.c.h.b16 %v913
        %v3740 = vunpack.c.l.b16 %v914
        %v3741 = vunpack.c.h.b16 %v914
        %v3742 = vunpack.c.l.b16 %v915
        %v3743 = vunpack.c.h.b16 %v915
        %v3744 = vunpack.c.l.b16 %v916
        %v3745 = vunpack.c.h.b16 %v916
        %v3746 = vunpack.c.l.b16 %v917
        %v3747 = vunpack.c.h.b16 %v917
        %v3748 = vunpack.c.l.b16 %v918
        %v3749 = vunpack.c.h.b16 %v918
        %v3750 = vunpack.c.l.b16 %v919
        %v3751 = vunpack.c.h.b16 %v919
        %v3752 = vunpack.c.l.b16 %v920
        %v3753 = vunpack.c.h.b16 %v920
        %v3754 = vunpack.c.l.b16 %v921
        %v3755 = vunpack.c.h.b16 %v921
        %v3756 = vunpack.c.l.b16 %v922
        %v3757 = vunpack.c.h.b16 %v922
        %v3758 = vunpack.c.l.b16 %v923
        %v3759 = vunpack.c.h.b16 %v923
        %v3760 = vunpack.c.l.b16 %v924
        %v3761 = vunpack.c.h.b16 %v924
        %v3762 = vunpack.c.l.b16 %v925
        %v3763 = vunpack.c.h.b16 %v925
        %v3764 = vunpack.c.l.b16 %v926
        %v3765 = vunpack.c.h.b16 %v926
        %v3766 = vunpack.c.l.b16 %v927
        %v3767 = vunpack.c.h.b16 %v927
        %v3768 = vunpack.c.l.b16 %v928
        %v3769 = vunpack.c.h.b16 %v928
        %v3770 = vunpack.c.l.b16 %v929
        %v3771 = vunpack.c.h.b16 %v929
        %v3772 = vunpack.c.l.b16 %v930
        %v3773 = vunpack.c.h.b16 %v930
        %v3774 = vunpack.c.l.b16 %v931
        %v3775 = vunpack.c.h.b16 %v931
        %v3776 = vunpack.c.l.b16 %v932
        %v3777 = vunpack.c.h.b16 %v932
        %v3778 = vunpack.c.l.b16 %v933
        %v3779 = vunpack.c.h.b16 %v933
        %v3780 = vunpack.c.l.b16 %v934
        %v3781 = vunpack.c.h.b16 %v934
        %v3782 = vunpack.c.l.b16 %v935
        %v3783 = vunpack.c.h.b16 %v935
        %v3784 = vunpack.c.l.b16 %v936
        %v3785 = vunpack.c.h.b16 %v936
        %v3786 = vunpack.c.l.b16 %v937
        %v3787 = vunpack.c.h.b16 %v937
        %v3788 = vunpack.c.l.b16 %v938
        %v3789 = vunpack.c.h.b16 %v938
        %v3790 = vunpack.c.l.b16 %v939
        %v3791 = vunpack.c.h.b16 %v939
        %v3792 = vunpack.c.l.b16 %v940
        %v3793 = vunpack.c.h.b16 %v940
        %v3794 = vunpack.c.l.b16 %v941
        %v3795 = vunpack.c.h.b16 %v941
        %v3796 = vunpack.c.l.b16 %v942
        %v3797 = vunpack.c.h.b16 %v942
        %v3798 = vunpack.c.l.b16 %v943
        %v3799 = vunpack.c.h.b16 %v943
        %v3800 = vunpack.c.l.b16 %v944
        %v3801 = vunpack.c.h.b16 %v944
        %v3802 = vunpack.c.l.b16 %v945
        %v3803 = vunpack.c.h.b16 %v945
        %v3804 = vunpack.c.l.b16 %v946
        %v3805 = vunpack.c.h.b16 %v946
        %v3806 = vunpack.c.l.b16 %v947
        %v3807 = vunpack.c.h.b16 %v947
        %v3808 = vunpack.c.l.b16 %v948
        %v3809 = vunpack.c.h.b16 %v948
        %v3810 = vunpack.c.l.b16 %v949
        %v3811 = vunpack.c.h.b16 %v949
        %v3812 = vunpack.c.l.b16 %v950
        %v3813 = vunpack.c.h.b16 %v950
        %v3814 = vunpack.c.l.b16 %v951
        %v3815 = vunpack.c.h.b16 %v951
        %v3816 = vunpack.c.l.b16 %v952
        %v3817 = vunpack.c.h.b16 %v952
        %v3818 = vunpack.c.l.b16 %v953
        %v3819 = vunpack.c.h.b16 %v953
        %v3820 = vunpack.c.l.b16 %v954
        %v3821 = vunpack.c.h.b16 %v954
        %v3822 = vunpack.c.l.b16 %v955
        %v3823 = vunpack.c.h.b16 %v955
        %v3824 = vunpack.c.l.b16 %v956
        %v3825 = vunpack.c.h.b16 %v956
        %v3826 = vunpack.c.l.b16 %v957
        %v3827 = vunpack.c.h.b16 %v957
        %v3828 = vunpack.c.l.b16 %v958
        %v3829 = vunpack.c.h.b16 %v958
        %v3830 = vunpack.c.l.b16 %v959
        %v3831 = vunpack.c.h.b16 %v959
        %v3832 = vunpack.c.l.b16 %v960
        %v3833 = vunpack.c.h.b16 %v960
        %v3834 = vunpack.c.l.b16 %v961
        %v3835 = vunpack.c.h.b16 %v961
        %v3836 = vunpack.c.l.b16 %v962
        %v3837 = vunpack.c.h.b16 %v962
        %v3838 = vunpack.c.l.b16 %v963
        %v3839 = vunpack.c.h.b16 %v963
        %v3840 = vunpack.c.l.b16 %v964
        %v3841 = vunpack.c.h.b16 %v964
        %v3842 = vunpack.c.l.b16 %v965
        %v3843 = vunpack.c.h.b16 %v965
        %v3844 = vunpack.c.l.b16 %v966
        %v3845 = vunpack.c.h.b16 %v966
        %v3846 = vunpack.c.l.b16 %v967
        %v3847 = vunpack.c.h.b16 %v967
        %v3848 = vunpack.c.l.b16 %v968
        %v3849 = vunpack.c.h.b16 %v968
        %v3850 = vunpack.c.l.b16 %v969
        %v3851 = vunpack.c.h.b16 %v969
        %v3852 = vunpack.c.l.b16 %v970
        %v3853 = vunpack.c.h.b16 %v970
        %v3854 = vunpack.c.l.b16 %v971
        %v3855 = vunpack.c.h.b16 %v971
        %v3856 = vunpack.c.l.b16 %v972
        %v3857 = vunpack.c.h.b16 %v972
        %v3858 = vunpack.c.l.b16 %v973
        %v3859 = vunpack.c.h.b16 %v973
        %v3860 = vunpack.c.l.b16 %v974
        %v3861 = vunpack.c.h.b16 %v974
        %v3862 = vunpack.c.l.b16 %v975
        %v3863 = vunpack.c.h.b16 %v975
        %v3864 = vunpack.c.l.b16 %v976
        %v3865 = vunpack.c.h.b16 %v976
        %v3866 = vunpack.c.l.b16 %v977
        %v3867 = vunpack.c.h.b16 %v977
        %v3868 = vunpack.c.l.b16 %v978
        %v3869 = vunpack.c.h.b16 %v978
        %v3870 = vunpack.c.l.b16 %v979
        %v3871 = vunpack.c.h.b16 %v979
        %v3872 = vunpack.c.l.b16 %v980
        %v3873 = vunpack.c.h.b16 %v980
        %v3874 = vunpack.c.l.b16 %v981
        %v3875 = vunpack.c.h.b16 %v981
        %v3876 = vunpack.c.l.b16 %v982
        %v3877 = vunpack.c.h.b16 %v982
        %v3878 = vunpack.c.l.b16 %v983
        %v3879 = vunpack.c.h.b16 %v983
        %v3880 = vunpack.c.l.b16 %v984
        %v3881 = vunpack.c.h.b16 %v984
        %v3882 = vunpack.c.l.b16 %v985
        %v3883 = vunpack.c.h.b16 %v985
        %v3884 = vunpack.c.l.b16 %v986
        %v3885 = vunpack.c.h.b16 %v986
        %v3886 = vunpack.c.l.b16 %v987
        %v3887 = vunpack.c.h.b16 %v987
        %v3888 = vunpack.c.l.b16 %v988
        %v3889 = vunpack.c.h.b16 %v988
        %v3890 = vunpack.c.l.b16 %v989
        %v3891 = vunpack.c.h.b16 %v989
        %v3892 = vunpack.c.l.b16 %v990
        %v3893 = vunpack.c.h.b16 %v990
        %v3894 = vunpack.c.l.b16 %v991
        %v3895 = vunpack.c.h.b16 %v991
        %v3896 = vunpack.c.l.b16 %v992
        %v3897 = vunpack.c.h.b16 %v992
        %v3898 = vunpack.c.l.b16 %v993
        %v3899 = vunpack.c.h.b16 %v993
        %v3900 = vunpack.c.l.b16 %v994
        %v3901 = vunpack.c.h.b16 %v994
        %v3902 = vunpack.c.l.b16 %v995
        %v3903 = vunpack.c.h.b16 %v995
        %v3904 = vunpack.c.l.b16 %v996
        %v3905 = vunpack.c.h.b16 %v996
        %v3906 = vunpack.c.l.b16 %v997
        %v3907 = vunpack.c.h.b16 %v997
        %v3908 = vunpack.c.l.b16 %v998
        %v3909 = vunpack.c.h.b16 %v998
        %v3910 = vunpack.c.l.b16 %v999
        %v3911 = vunpack.c.h.b16 %v999
        %v3912 = vunpack.c.l.b16 %v1000
        %v3913 = vunpack.c.h.b16 %v1000
        %v3914 = vunpack.c.l.b16 %v1001
        %v3915 = vunpack.c.h.b16 %v1001
        %v3916 = vunpack.c.l.b16 %v1002
        %v3917 = vunpack.c.h.b16 %v1002
        %v3918 = vunpack.c.l.b16 %v1003
        %v3919 = vunpack.c.h.b16 %v1003
        %v3920 = vunpack.c.l.b16 %v1004
        %v3921 = vunpack.c.h.b16 %v1004
        %v3922 = vunpack.c.l.b16 %v1005
        %v3923 = vunpack.c.h.b16 %v1005
        %v3924 = vunpack.c.l.b16 %v1006
        %v3925 = vunpack.c.h.b16 %v1006
        %v3926 = vunpack.c.l.b16 %v1007
        %v3927 = vunpack.c.h.b16 %v1007
        %v3928 = vunpack.c.l.b16 %v1008
        %v3929 = vunpack.c.h.b16 %v1008
        %v3930 = vunpack.c.l.b16 %v1009
        %v3931 = vunpack.c.h.b16 %v1009
        %v3932 = vunpack.c.l.b16 %v1010
        %v3933 = vunpack.c.h.b16 %v1010
        %v3934 = vunpack.c.l.b16 %v1011
        %v3935 = vunpack.c.h.b16 %v1011
        %v3936 = vunpack.c.l.b16 %v1012
        %v3937 = vunpack.c.h.b16 %v1012
        %v3938 = vunpack.c.l.b16 %v1013
        %v3939 = vunpack.c.h.b16 %v1013
        %v3940 = vunpack.c.l.b16 %v1014
        %v3941 = vunpack.c.h.b16 %v1014
        %v3942 = vunpack.c.l.b16 %v1015
        %v3943 = vunpack.c.h.b16 %v1015
        %v3944 = vunpack.c.l.b16 %v1016
        %v3945 = vunpack.c.h.b16 %v1016
        %v3946 = vunpack.c.l.b16 %v1017
        %v3947 = vunpack.c.h.b16 %v1017
        %v3948 = vunpack.c.l.b16 %v1018
        %v3949 = vunpack.c.h.b16 %v1018
        %v3950 = vunpack.c.l.b16 %v1019
        %v3951 = vunpack.c.h.b16 %v1019
        %v3952 = vunpack.c.l.b16 %v1020
        %v3953 = vunpack.c.h.b16 %v1020
        %v3954 = vunpack.c.l.b16 %v1021
        %v3955 = vunpack.c.h.b16 %v1021
        %v3956 = vunpack.c.l.b16 %v1022
        %v3957 = vunpack.c.h.b16 %v1022
        %v3958 = vunpack.c.l.b16 %v1023
        %v3959 = vunpack.c.h.b16 %v1023
        %v3960 = vunpack.c.l.b16 %v1024
        %v3961 = vunpack.c.h.b16 %v1024
        %v3962 = vunpack.c.l.b16 %v1025
        %v3963 = vunpack.c.h.b16 %v1025
        %v3964 = vunpack.c.l.b16 %v1026
        %v3965 = vunpack.c.h.b16 %v1026
        %v3966 = vunpack.c.l.b16 %v1027
        %v3967 = vunpack.c.h.b16 %v1027
        %v3968 = vunpack.c.l.b16 %v1028
        %v3969 = vunpack.c.h.b16 %v1028
        %v3970 = vunpack.c.l.b16 %v1029
        %v3971 = vunpack.c.h.b16 %v1029
        %v3972 = vunpack.c.l.b16 %v1030
        %v3973 = vunpack.c.h.b16 %v1030
        %v3974 = vunpack.c.l.b16 %v1031
        %v3975 = vunpack.c.h.b16 %v1031
        %v3976 = vunpack.c.l.b16 %v1032
        %v3977 = vunpack.c.h.b16 %v1032
        %v3978 = vunpack.c.l.b16 %v1033
        %v3979 = vunpack.c.h.b16 %v1033
        %v3980 = vunpack.c.l.b16 %v1034
        %v3981 = vunpack.c.h.b16 %v1034
        %v3982 = vunpack.c.l.b16 %v1035
        %v3983 = vunpack.c.h.b16 %v1035
        %v3984 = vunpack.c.l.b16 %v1036
        %v3985 = vunpack.c.h.b16 %v1036
        %v3986 = vunpack.c.l.b16 %v1037
        %v3987 = vunpack.c.h.b16 %v1037
        %v3988 = vunpack.c.l.b16 %v1038
        %v3989 = vunpack.c.h.b16 %v1038
        %v3990 = vunpack.c.l.b16 %v1039
        %v3991 = vunpack.c.h.b16 %v1039
        %v3992 = vunpack.c.l.b16 %v1040
        %v3993 = vunpack.c.h.b16 %v1040
        %v3994 = vunpack.c.l.b16 %v1041
        %v3995 = vunpack.c.h.b16 %v1041
        %v3996 = vunpack.c.l.b16 %v1042
        %v3997 = vunpack.c.h.b16 %v1042
        %v3998 = vunpack.c.l.b16 %v1043
        %v3999 = vunpack.c.h.b16 %v1043
        %v4000 = vunpack.c.l.b16 %v1044
        %v4001 = vunpack.c.h.b16 %v1044
        %v4002 = vunpack.c.l.b16 %v1045
        %v4003 = vunpack.c.h.b16 %v1045
        %v4004 = vunpack.c.l.b16 %v1046
        %v4005 = vunpack.c.h.b16 %v1046
        %v4006 = vunpack.c.l.b16 %v1047
        %v4007 = vunpack.c.h.b16 %v1047
        %v4008 = vunpack.c.l.b16 %v1048
        %v4009 = vunpack.c.h.b16 %v1048
        %v4010 = vunpack.c.l.b16 %v1049
        %v4011 = vunpack.c.h.b16 %v1049
        %v4012 = vunpack.c.l.b16 %v1050
        %v4013 = vunpack.c.h.b16 %v1050
        %v4014 = vunpack.c.l.b16 %v1051
        %v4015 = vunpack.c.h.b16 %v1051
        %v4016 = vunpack.c.l.b16 %v1052
        %v4017 = vunpack.c.h.b16 %v1052
        %v4018 = vunpack.c.l.b16 %v1053
        %v4019 = vunpack.c.h.b16 %v1053
        %v4020 = vunpack.c.l.b16 %v1054
        %v4021 = vunpack.c.h.b16 %v1054
        %v4022 = vunpack.c.l.b16 %v1055
        %v4023 = vunpack.c.h.b16 %v1055
        %v4024 = vunpack.c.l.b16 %v1056
        %v4025 = vunpack.c.h.b16 %v1056
        %v4026 = vunpack.c.l.b16 %v1057
        %v4027 = vunpack.c.h.b16 %v1057
        %v4028 = vunpack.c.l.b16 %v1058
        %v4029 = vunpack.c.h.b16 %v1058
        %v4030 = vunpack.c.l.b16 %v1059
        %v4031 = vunpack.c.h.b16 %v1059
        %v4032 = vunpack.c.l.b16 %v1060
        %v4033 = vunpack.c.h.b16 %v1060
        %v4034 = vunpack.c.l.b16 %v1061
        %v4035 = vunpack.c.h.b16 %v1061
        %v4036 = vunpack.c.l.b16 %v1062
        %v4037 = vunpack.c.h.b16 %v1062
        %v4038 = vunpack.c.l.b16 %v1063
        %v4039 = vunpack.c.h.b16 %v1063
        %v4040 = vunpack.c.l.b16 %v1064
        %v4041 = vunpack.c.h.b16 %v1064
        %v4042 = vunpack.c.l.b16 %v1065
        %v4043 = vunpack.c.h.b16 %v1065
        %v4044 = vunpack.c.l.b16 %v1066
        %v4045 = vunpack.c.h.b16 %v1066
        %v4046 = vunpack.c.l.b16 %v1067
        %v4047 = vunpack.c.h.b16 %v1067
        %v4048 = vunpack.c.l.b16 %v1068
        %v4049 = vunpack.c.h.b16 %v1068
        %v4050 = vunpack.c.l.b16 %v1069
        %v4051 = vunpack.c.h.b16 %v1069
        %v4052 = vunpack.c.l.b16 %v1070
        %v4053 = vunpack.c.h.b16 %v1070
        %v4054 = vunpack.c.l.b16 %v1071
        %v4055 = vunpack.c.h.b16 %v1071
        %v4056 = vunpack.c.l.b16 %v1072
        %v4057 = vunpack.c.h.b16 %v1072
        %v4058 = vunpack.c.l.b16 %v1073
        %v4059 = vunpack.c.h.b16 %v1073
        %v4060 = vunpack.c.l.b16 %v1074
        %v4061 = vunpack.c.h.b16 %v1074
        %v4062 = vunpack.c.l.b16 %v1075
        %v4063 = vunpack.c.h.b16 %v1075
        %v4064 = vunpack.c.l.b16 %v1076
        %v4065 = vunpack.c.h.b16 %v1076
        %v4066 = vunpack.c.l.b16 %v1077
        %v4067 = vunpack.c.h.b16 %v1077
        %v4068 = vunpack.c.l.b16 %v1078
        %v4069 = vunpack.c.h.b16 %v1078
        %v4070 = vunpack.c.l.b16 %v1079
        %v4071 = vunpack.c.h.b16 %v1079
        %v4072 = vunpack.c.l.b16 %v1080
        %v4073 = vunpack.c.h.b16 %v1080
        %v4074 = vunpack.c.l.b16 %v1081
        %v4075 = vunpack.c.h.b16 %v1081
        %v4076 = vunpack.c.l.b16 %v1082
        %v4077 = vunpack.c.h.b16 %v1082
        %v4078 = vunpack.c.l.b16 %v1083
        %v4079 = vunpack.c.h.b16 %v1083
        %v4080 = vunpack.c.l.b16 %v1084
        %v4081 = vunpack.c.h.b16 %v1084
        %v4082 = vunpack.c.l.b16 %v1085
        %v4083 = vunpack.c.h.b16 %v1085
        %v4084 = vunpack.c.l.b16 %v1086
        %v4085 = vunpack.c.h.b16 %v1086
        %v4086 = vunpack.c.l.b16 %v1087
        %v4087 = vunpack.c.h.b16 %v1087
        %v4088 = vunpack.c.l.b16 %v1088
        %v4089 = vunpack.c.h.b16 %v1088
        %v4090 = vunpack.c.l.b16 %v1089
        %v4091 = vunpack.c.h.b16 %v1089
        %v4092 = vunpack.c.l.b16 %v1090
        %v4093 = vunpack.c.h.b16 %v1090
        %v4094 = vunpack.c.l.b16 %v1091
        %v4095 = vunpack.c.h.b16 %v1091
        %v4096 = vunpack.c.l.b16 %v1092
        %v4097 = vunpack.c.h.b16 %v1092
        %v4098 = vunpack.c.l.b16 %v1093
        %v4099 = vunpack.c.h.b16 %v1093
        %v4100 = vunpack.c.l.b16 %v1094
        %v4101 = vunpack.c.h.b16 %v1094
        %v4102 = vunpack.c.l.b16 %v1095
        %v4103 = vunpack.c.h.b16 %v1095
        %v4104 = vunpack.c.l.b16 %v1096
        %v4105 = vunpack.c.h.b16 %v1096
        %v4106 = vunpack.c.l.b16 %v1097
        %v4107 = vunpack.c.h.b16 %v1097
        %v4108 = vunpack.c.l.b16 %v1098
        %v4109 = vunpack.c.h.b16 %v1098
        %v4110 = vunpack.c.l.b16 %v1099
        %v4111 = vunpack.c.h.b16 %v1099
        %v4112 = vunpack.c.l.b16 %v1100
        %v4113 = vunpack.c.h.b16 %v1100
        %v4114 = vunpack.c.l.b16 %v1101
        %v4115 = vunpack.c.h.b16 %v1101
        %v4116 = vunpack.c.l.b16 %v1102
        %v4117 = vunpack.c.h.b16 %v1102
        %v4118 = vunpack.c.l.b16 %v1103
        %v4119 = vunpack.c.h.b16 %v1103
        %v4120 = vunpack.c.l.b16 %v1104
        %v4121 = vunpack.c.h.b16 %v1104
        %v4122 = vunpack.c.l.b16 %v1105
        %v4123 = vunpack.c.h.b16 %v1105
        %v4124 = vunpack.c.l.b16 %v1106
        %v4125 = vunpack.c.h.b16 %v1106
        %v4126 = vunpack.c.l.b16 %v1107
        %v4127 = vunpack.c.h.b16 %v1107
        %v4128 = vunpack.c.l.b16 %v1108
        %v4129 = vunpack.c.h.b16 %v1108
        %v4130 = vunpack.c.l.b16 %v1109
        %v4131 = vunpack.c.h.b16 %v1109
        %v4132 = vunpack.c.l.b16 %v1110
        %v4133 = vunpack.c.h.b16 %v1110
        %v4134 = vunpack.c.l.b16 %v1111
        %v4135 = vunpack.c.h.b16 %v1111
        %v4136 = vunpack.c.l.b16 %v1112
        %v4137 = vunpack.c.h.b16 %v1112
        %v4138 = vunpack.c.l.b16 %v1113
        %v4139 = vunpack.c.h.b16 %v1113
        %v4140 = vunpack.c.l.b16 %v1114
        %v4141 = vunpack.c.h.b16 %v1114
        %v4142 = vunpack.c.l.b16 %v1115
        %v4143 = vunpack.c.h.b16 %v1115
        %v4144 = vunpack.c.l.b16 %v1116
        %v4145 = vunpack.c.h.b16 %v1116
        %v4146 = vunpack.c.l.b16 %v1117
        %v4147 = vunpack.c.h.b16 %v1117
        %v4148 = vunpack.c.l.b16 %v1118
        %v4149 = vunpack.c.h.b16 %v1118
        %v4150 = vunpack.c.l.b16 %v1119
        %v4151 = vunpack.c.h.b16 %v1119
        %v4152 = vunpack.c.l.b16 %v1120
        %v4153 = vunpack.c.h.b16 %v1120
        %v4154 = vunpack.c.l.b16 %v1121
        %v4155 = vunpack.c.h.b16 %v1121
        %v4156 = vunpack.c.l.b16 %v1122
        %v4157 = vunpack.c.h.b16 %v1122
        %v4158 = vunpack.c.l.b16 %v1123
        %v4159 = vunpack.c.h.b16 %v1123
        %v4160 = vunpack.c.l.b16 %v1124
        %v4161 = vunpack.c.h.b16 %v1124
        %v4162 = vunpack.c.l.b16 %v1125
        %v4163 = vunpack.c.h.b16 %v1125
        %v4164 = vunpack.c.l.b16 %v1126
        %v4165 = vunpack.c.h.b16 %v1126
        %v4166 = vunpack.c.l.b16 %v1127
        %v4167 = vunpack.c.h.b16 %v1127
        %v4168 = vunpack.c.l.b16 %v1128
        %v4169 = vunpack.c.h.b16 %v1128
        %v4170 = vunpack.c.l.b16 %v1129
        %v4171 = vunpack.c.h.b16 %v1129
        %v4172 = vunpack.c.l.b16 %v1130
        %v4173 = vunpack.c.h.b16 %v1130
        %v4174 = vunpack.c.l.b16 %v1131
        %v4175 = vunpack.c.h.b16 %v1131
        %v4176 = vunpack.c.l.b16 %v1132
        %v4177 = vunpack.c.h.b16 %v1132
        %v4178 = vunpack.c.l.b16 %v1133
        %v4179 = vunpack.c.h.b16 %v1133
        %v4180 = vunpack.c.l.b16 %v1134
        %v4181 = vunpack.c.h.b16 %v1134
        %v4182 = vunpack.c.l.b16 %v1135
        %v4183 = vunpack.c.h.b16 %v1135
        %v4184 = vunpack.c.l.b16 %v1136
        %v4185 = vunpack.c.h.b16 %v1136
        %v4186 = vunpack.c.l.b16 %v1137
        %v4187 = vunpack.c.h.b16 %v1137
        %v4188 = vunpack.c.l.b16 %v1138
        %v4189 = vunpack.c.h.b16 %v1138
        %v4190 = vunpack.c.l.b16 %v1139
        %v4191 = vunpack.c.h.b16 %v1139
        %v4192 = vunpack.c.l.b16 %v1140
        %v4193 = vunpack.c.h.b16 %v1140
        %v4194 = vunpack.c.l.b16 %v1141
        %v4195 = vunpack.c.h.b16 %v1141
        %v4196 = vunpack.c.l.b16 %v1142
        %v4197 = vunpack.c.h.b16 %v1142
        %v4198 = vunpack.c.l.b16 %v1143
        %v4199 = vunpack.c.h.b16 %v1143
        %v4200 = vunpack.c.l.b16 %v1144
        %v4201 = vunpack.c.h.b16 %v1144
        %v4202 = vunpack.c.l.b16 %v1145
        %v4203 = vunpack.c.h.b16 %v1145
        %v4204 = vunpack.c.l.b16 %v1146
        %v4205 = vunpack.c.h.b16 %v1146
        %v4206 = vunpack.c.l.b16 %v1147
        %v4207 = vunpack.c.h.b16 %v1147
        %v4208 = vunpack.c.l.b16 %v1148
        %v4209 = vunpack.c.h.b16 %v1148
        %v4210 = vunpack.c.l.b16 %v1149
        %v4211 = vunpack.c.h.b16 %v1149
        %v4212 = vunpack.c.l.b16 %v1150
        %v4213 = vunpack.c.h.b16 %v1150
        %v4214 = vunpack.c.l.b16 %v1151
        %v4215 = vunpack.c.h.b16 %v1151
        %v4216 = vunpack.c.l.b16 %v1152
        %v4217 = vunpack.c.h.b16 %v1152
        %v4218 = vunpack.c.l.b16 %v1153
        %v4219 = vunpack.c.h.b16 %v1153
        %v4220 = vunpack.c.l.b16 %v1154
        %v4221 = vunpack.c.h.b16 %v1154
        %v4222 = vunpack.c.l.b16 %v1155
        %v4223 = vunpack.c.h.b16 %v1155
        %v4224 = vunpack.c.l.b16 %v1156
        %v4225 = vunpack.c.h.b16 %v1156
        %v4226 = vunpack.c.l.b16 %v1157
        %v4227 = vunpack.c.h.b16 %v1157
        %v4228 = vunpack.c.l.b16 %v1158
        %v4229 = vunpack.c.h.b16 %v1158
        %v4230 = vunpack.c.l.b16 %v1159
        %v4231 = vunpack.c.h.b16 %v1159
        %v4232 = vunpack.c.l.b16 %v1160
        %v4233 = vunpack.c.h.b16 %v1160
        %v4234 = vunpack.c.l.b16 %v1161
        %v4235 = vunpack.c.h.b16 %v1161
        %v4236 = vunpack.c.l.b16 %v1162
        %v4237 = vunpack.c.h.b16 %v1162
        %v4238 = vunpack.c.l.b16 %v1163
        %v4239 = vunpack.c.h.b16 %v1163
        %v4240 = vunpack.c.l.b16 %v1164
        %v4241 = vunpack.c.h.b16 %v1164
        %v4242 = vunpack.c.l.b16 %v1165
        %v4243 = vunpack.c.h.b16 %v1165
        %v4244 = vunpack.c.l.b16 %v1166
        %v4245 = vunpack.c.h.b16 %v1166
        %v4246 = vunpack.c.l.b16 %v1167
        %v4247 = vunpack.c.h.b16 %v1167
        %v4248 = vunpack.c.l.b16 %v1168
        %v4249 = vunpack.c.h.b16 %v1168
        %v4250 = vunpack.c.l.b16 %v1169
        %v4251 = vunpack.c.h.b16 %v1169
        %v4252 = vunpack.c.l.b16 %v1170
        %v4253 = vunpack.c.h.b16 %v1170
        %v4254 = vunpack.c.l.b16 %v1171
        %v4255 = vunpack.c.h.b16 %v1171
        %v4256 = vunpack.c.l.b16 %v1172
        %v4257 = vunpack.c.h.b16 %v1172
        %v4258 = vunpack.c.l.b16 %v1173
        %v4259 = vunpack.c.h.b16 %v1173
        %v4260 = vunpack.c.l.b16 %v1174
        %v4261 = vunpack.c.h.b16 %v1174
        %v4262 = vunpack.c.l.b16 %v1175
        %v4263 = vunpack.c.h.b16 %v1175
        %v4264 = vunpack.c.l.b16 %v1176
        %v4265 = vunpack.c.h.b16 %v1176
        %v4266 = vunpack.c.l.b16 %v1177
        %v4267 = vunpack.c.h.b16 %v1177
        %v4268 = vunpack.c.l.b16 %v1178
        %v4269 = vunpack.c.h.b16 %v1178
        %v4270 = vunpack.c.l.b16 %v1179
        %v4271 = vunpack.c.h.b16 %v1179
        %v4272 = vunpack.c.l.b16 %v1180
        %v4273 = vunpack.c.h.b16 %v1180
        %v4274 = vunpack.c.l.b16 %v1181
        %v4275 = vunpack.c.h.b16 %v1181
        %v4276 = vunpack.c.l.b16 %v1182
        %v4277 = vunpack.c.h.b16 %v1182
        %v4278 = vunpack.c.l.b16 %v1183
        %v4279 = vunpack.c.h.b16 %v1183
        %v4280 = vunpack.c.l.b16 %v1184
        %v4281 = vunpack.c.h.b16 %v1184
        %v4282 = vunpack.c.l.b16 %v1185
        %v4283 = vunpack.c.h.b16 %v1185
        %v4284 = vunpack.c.l.b16 %v1186
        %v4285 = vunpack.c.h.b16 %v1186
        %v4286 = vunpack.c.l.b16 %v1187
        %v4287 = vunpack.c.h.b16 %v1187
        %v4288 = vunpack.c.l.b16 %v1188
        %v4289 = vunpack.c.h.b16 %v1188
        %v4290 = vunpack.c.l.b16 %v1189
        %v4291 = vunpack.c.h.b16 %v1189
        %v4292 = vunpack.c.l.b16 %v1190
        %v4293 = vunpack.c.h.b16 %v1190
        %v4294 = vunpack.c.l.b16 %v1191
        %v4295 = vunpack.c.h.b16 %v1191
        %v4296 = vunpack.c.l.b16 %v1192
        %v4297 = vunpack.c.h.b16 %v1192
        %v4298 = vunpack.c.l.b16 %v1193
        %v4299 = vunpack.c.h.b16 %v1193
        %v4300 = vunpack.c.l.b16 %v1194
        %v4301 = vunpack.c.h.b16 %v1194
        %v4302 = vunpack.c.l.b16 %v1195
        %v4303 = vunpack.c.h.b16 %v1195
        %v4304 = vunpack.c.l.b16 %v1196
        %v4305 = vunpack.c.h.b16 %v1196
        %v4306 = vunpack.c.l.b16 %v1197
        %v4307 = vunpack.c.h.b16 %v1197
        %v4308 = vunpack.c.l.b16 %v1198
        %v4309 = vunpack.c.h.b16 %v1198
        %v4310 = vunpack.c.l.b16 %v1199
        %v4311 = vunpack.c.h.b16 %v1199
        %v4312 = vunpack.c.l.b16 %v1200
        %v4313 = vunpack.c.h.b16 %v1200
        %v4314 = vunpack.c.l.b16 %v1201
        %v4315 = vunpack.c.h.b16 %v1201
        %v4316 = vunpack.c.l.b16 %v1202
        %v4317 = vunpack.c.h.b16 %v1202
        %v4318 = vunpack.c.l.b16 %v1203
        %v4319 = vunpack.c.h.b16 %v1203
        %v4320 = vunpack.c.l.b16 %v1204
        %v4321 = vunpack.c.h.b16 %v1204
        %v4322 = vunpack.c.l.b16 %v1205
        %v4323 = vunpack.c.h.b16 %v1205
        %v4324 = vunpack.c.l.b16 %v1206
        %v4325 = vunpack.c.h.b16 %v1206
        %v4326 = vunpack.c.l.b16 %v1207
        %v4327 = vunpack.c.h.b16 %v1207
        %v4328 = vunpack.c.l.b16 %v1208
        %v4329 = vunpack.c.h.b16 %v1208
        %v4330 = vunpack.c.l.b16 %v1209
        %v4331 = vunpack.c.h.b16 %v1209
        %v4332 = vunpack.c.l.b16 %v1210
        %v4333 = vunpack.c.h.b16 %v1210
        %v4334 = vunpack.c.l.b16 %v1211
        %v4335 = vunpack.c.h.b16 %v1211
        %v4336 = vunpack.c.l.b16 %v1212
        %v4337 = vunpack.c.h.b16 %v1212
        %v4338 = vunpack.c.l.b16 %v1213
        %v4339 = vunpack.c.h.b16 %v1213
        %v4340 = vunpack.c.l.b16 %v1214
        %v4341 = vunpack.c.h.b16 %v1214
        %v4342 = vunpack.c.l.b16 %v1215
        %v4343 = vunpack.c.h.b16 %v1215
        %v4344 = vunpack.c.l.b16 %v1216
        %v4345 = vunpack.c.h.b16 %v1216
        %v4346 = vunpack.c.l.b16 %v1217
        %v4347 = vunpack.c.h.b16 %v1217
        %v4348 = vunpack.c.l.b16 %v1218
        %v4349 = vunpack.c.h.b16 %v1218
        %v4350 = vunpack.c.l.b16 %v1219
        %v4351 = vunpack.c.h.b16 %v1219
        %v4352 = vunpack.c.l.b16 %v1220
        %v4353 = vunpack.c.h.b16 %v1220
        %v4354 = vunpack.c.l.b16 %v1221
        %v4355 = vunpack.c.h.b16 %v1221
        %v4356 = vunpack.c.l.b16 %v1222
        %v4357 = vunpack.c.h.b16 %v1222
        %v4358 = vunpack.c.l.b16 %v1223
        %v4359 = vunpack.c.h.b16 %v1223
        %v4360 = vunpack.c.l.b16 %v1224
        %v4361 = vunpack.c.h.b16 %v1224
        %v4362 = vunpack.c.l.b16 %v1225
        %v4363 = vunpack.c.h.b16 %v1225
        %v4364 = vunpack.c.l.b16 %v1226
        %v4365 = vunpack.c.h.b16 %v1226
        %v4366 = vunpack.c.l.b16 %v1227
        %v4367 = vunpack.c.h.b16 %v1227
        %v4368 = vunpack.c.l.b16 %v1228
        %v4369 = vunpack.c.h.b16 %v1228
        %v4370 = vunpack.c.l.b16 %v1229
        %v4371 = vunpack.c.h.b16 %v1229
        %v4372 = vunpack.c.l.b16 %v1230
        %v4373 = vunpack.c.h.b16 %v1230
        %v4374 = vunpack.c.l.b16 %v1231
        %v4375 = vunpack.c.h.b16 %v1231
        %v4376 = vunpack.c.l.b16 %v1232
        %v4377 = vunpack.c.h.b16 %v1232
        %v4378 = vunpack.c.l.b16 %v1233
        %v4379 = vunpack.c.h.b16 %v1233
        %v4380 = vunpack.c.l.b16 %v1234
        %v4381 = vunpack.c.h.b16 %v1234
        %v4382 = vunpack.c.l.b16 %v1235
        %v4383 = vunpack.c.h.b16 %v1235
        %v4384 = vunpack.c.l.b16 %v1236
        %v4385 = vunpack.c.h.b16 %v1236
        %v4386 = vunpack.c.l.b16 %v1237
        %v4387 = vunpack.c.h.b16 %v1237
        %v4388 = vunpack.c.l.b16 %v1238
        %v4389 = vunpack.c.h.b16 %v1238
        %v4390 = vunpack.c.l.b16 %v1239
        %v4391 = vunpack.c.h.b16 %v1239
        %v4392 = vunpack.c.l.b16 %v1240
        %v4393 = vunpack.c.h.b16 %v1240
        %v4394 = vunpack.c.l.b16 %v1241
        %v4395 = vunpack.c.h.b16 %v1241
        %v4396 = vunpack.c.l.b16 %v1242
        %v4397 = vunpack.c.h.b16 %v1242
        %v4398 = vunpack.c.l.b16 %v1243
        %v4399 = vunpack.c.h.b16 %v1243
        %v4400 = vunpack.c.l.b16 %v1244
        %v4401 = vunpack.c.h.b16 %v1244
        %v4402 = vunpack.c.l.b16 %v1245
        %v4403 = vunpack.c.h.b16 %v1245
        %v4404 = vunpack.c.l.b16 %v1246
        %v4405 = vunpack.c.h.b16 %v1246
        %v4406 = vunpack.c.l.b16 %v1247
        %v4407 = vunpack.c.h.b16 %v1247
        %v4408 = vunpack.c.l.b16 %v1248
        %v4409 = vunpack.c.h.b16 %v1248
        %v4410 = vunpack.c.l.b16 %v1249
        %v4411 = vunpack.c.h.b16 %v1249
        %v4412 = vunpack.c.l.b16 %v1250
        %v4413 = vunpack.c.h.b16 %v1250
        %v4414 = vunpack.c.l.b16 %v1251
        %v4415 = vunpack.c.h.b16 %v1251
        %v4416 = vunpack.c.l.b16 %v1252
        %v4417 = vunpack.c.h.b16 %v1252
        %v4418 = vunpack.c.l.b16 %v1253
        %v4419 = vunpack.c.h.b16 %v1253
        %v4420 = vunpack.c.l.b16 %v1254
        %v4421 = vunpack.c.h.b16 %v1254
        %v4422 = vunpack.c.l.b16 %v1255
        %v4423 = vunpack.c.h.b16 %v1255
        %v4424 = vunpack.c.l.b16 %v1256
        %v4425 = vunpack.c.h.b16 %v1256
        %v4426 = vunpack.c.l.b16 %v1257
        %v4427 = vunpack.c.h.b16 %v1257
        %v4428 = vunpack.c.l.b16 %v1258
        %v4429 = vunpack.c.h.b16 %v1258
        %v4430 = vunpack.c.l.b16 %v1259
        %v4431 = vunpack.c.h.b16 %v1259
        %v4432 = vunpack.c.l.b16 %v1260
        %v4433 = vunpack.c.h.b16 %v1260
        %v4434 = vunpack.c.l.b16 %v1261
        %v4435 = vunpack.c.h.b16 %v1261
        %v4436 = vunpack.c.l.b16 %v1262
        %v4437 = vunpack.c.h.b16 %v1262
        %v4438 = vunpack.c.l.b16 %v1263
        %v4439 = vunpack.c.h.b16 %v1263
        %v4440 = vunpack.c.l.b16 %v1264
        %v4441 = vunpack.c.h.b16 %v1264
        %v4442 = vunpack.c.l.b16 %v1265
        %v4443 = vunpack.c.h.b16 %v1265
        %v4444 = vunpack.c.l.b16 %v1266
        %v4445 = vunpack.c.h.b16 %v1266
        %v4446 = vunpack.c.l.b16 %v1267
        %v4447 = vunpack.c.h.b16 %v1267
        %v4448 = vunpack.c.l.b16 %v1268
        %v4449 = vunpack.c.h.b16 %v1268
        %v4450 = vunpack.c.l.b16 %v1269
        %v4451 = vunpack.c.h.b16 %v1269
        %v4452 = vunpack.c.l.b16 %v1270
        %v4453 = vunpack.c.h.b16 %v1270
        %v4454 = vunpack.c.l.b16 %v1271
        %v4455 = vunpack.c.h.b16 %v1271
        %v4456 = vunpack.c.l.b16 %v1272
        %v4457 = vunpack.c.h.b16 %v1272
        %v4458 = vunpack.c.l.b16 %v1273
        %v4459 = vunpack.c.h.b16 %v1273
        %v4460 = vunpack.c.l.b16 %v1274
        %v4461 = vunpack.c.h.b16 %v1274
        %v4462 = vunpack.c.l.b16 %v1275
        %v4463 = vunpack.c.h.b16 %v1275
        %v4464 = vunpack.c.l.b16 %v1276
        %v4465 = vunpack.c.h.b16 %v1276
        %v4466 = vunpack.c.l.b16 %v1277
        %v4467 = vunpack.c.h.b16 %v1277
        %v4468 = vunpack.c.l.b16 %v1278
        %v4469 = vunpack.c.h.b16 %v1278
        %v4470 = vunpack.c.l.b16 %v1279
        %v4471 = vunpack.c.h.b16 %v1279
        %v4472 = vunpack.c.l.b16 %v1280
        %v4473 = vunpack.c.h.b16 %v1280
        %v4474 = vunpack.c.l.b16 %v1281
        %v4475 = vunpack.c.h.b16 %v1281
        %v4476 = vunpack.c.l.b16 %v1282
        %v4477 = vunpack.c.h.b16 %v1282
        %v4478 = vunpack.c.l.b16 %v1283
        %v4479 = vunpack.c.h.b16 %v1283
        %v4480 = vunpack.c.l.b16 %v1284
        %v4481 = vunpack.c.h.b16 %v1284
        %v4482 = vunpack.c.l.b16 %v1285
        %v4483 = vunpack.c.h.b16 %v1285
        %v4484 = vunpack.c.l.b16 %v1286
        %v4485 = vunpack.c.h.b16 %v1286
        %v4486 = vunpack.c.l.b16 %v1287
        %v4487 = vunpack.c.h.b16 %v1287
        %v4488 = vunpack.c.l.b16 %v1288
        %v4489 = vunpack.c.h.b16 %v1288
        %v4490 = vunpack.c.l.b16 %v1289
        %v4491 = vunpack.c.h.b16 %v1289
        %v4492 = vpack.c.b16 %v2452, %v2444
        %v4493 = vpack.c.b16 %v2453, %v2445
        %v4494 = vpack.c.b16 %v2454, %v2446
        %v4495 = vpack.c.b16 %v2455, %v2447
        %v4496 = vpack.c.b16 %v2456, %v2448
        %v4497 = vpack.c.b16 %v2457, %v2449
        %v4498 = vpack.c.b16 %v2458, %v2450
        %v4499 = vpack.c.b16 %v2459, %v2451
        %v4500 = vpack.c.b16 %v2468, %v2460
        %v4501 = vpack.c.b16 %v2469, %v2461
        %v4502 = vpack.c.b16 %v2470, %v2462
        %v4503 = vpack.c.b16 %v2471, %v2463
        %v4504 = vpack.c.b16 %v2472, %v2464
        %v4505 = vpack.c.b16 %v2473, %v2465
        %v4506 = vpack.c.b16 %v2474, %v2466
        %v4507 = vpack.c.b16 %v2475, %v2467
        %v4508 = vpack.c.b16 %v2484, %v2476
        %v4509 = vpack.c.b16 %v2485, %v2477
        %v4510 = vpack.c.b16 %v2486, %v2478
        %v4511 = vpack.c.b16 %v2487, %v2479
        %v4512 = vpack.c.b16 %v2488, %v2480
        %v4513 = vpack.c.b16 %v2489, %v2481
        %v4514 = vpack.c.b16 %v2490, %v2482
        %v4515 = vpack.c.b16 %v2491, %v2483
        %v4516 = vpack.c.b16 %v2500, %v2492
        %v4517 = vpack.c.b16 %v2501, %v2493
        %v4518 = vpack.c.b16 %v2502, %v2494
        %v4519 = vpack.c.b16 %v2503, %v2495
        %v4520 = vpack.c.b16 %v2504, %v2496
        %v4521 = vpack.c.b16 %v2505, %v2497
        %v4522 = vpack.c.b16 %v2506, %v2498
        %v4523 = vpack.c.b16 %v2507, %v2499
        %v4524 = vpack.c.b16 %v2516, %v2508
        %v4525 = vpack.c.b16 %v2517, %v2509
        %v4526 = vpack.c.b16 %v2518, %v2510
        %v4527 = vpack.c.b16 %v2519, %v2511
        %v4528 = vpack.c.b16 %v2520, %v2512
        %v4529 = vpack.c.b16 %v2521, %v2513
        %v4530 = vpack.c.b16 %v2522, %v2514
        %v4531 = vpack.c.b16 %v2523, %v2515
        %v4532 = vpack.c.b16 %v2532, %v2524
        %v4533 = vpack.c.b16 %v2533, %v2525
        %v4534 = vpack.c.b16 %v2534, %v2526
        %v4535 = vpack.c.b16 %v2535, %v2527
        %v4536 = vpack.c.b16 %v2536, %v2528
        %v4537 = vpack.c.b16 %v2537, %v2529
        %v4538 = vpack.c.b16 %v2538, %v2530
        %v4539 = vpack.c.b16 %v2539, %v2531
        %v4540 = vpack.c.b16 %v2548, %v2540
        %v4541 = vpack.c.b16 %v2549, %v2541
        %v4542 = vpack.c.b16 %v2550, %v2542
        %v4543 = vpack.c.b16 %v2551, %v2543
        %v4544 = vpack.c.b16 %v2552, %v2544
        %v4545 = vpack.c.b16 %v2553, %v2545
        %v4546 = vpack.c.b16 %v2554, %v2546
        %v4547 = vpack.c.b16 %v2555, %v2547
        %v4548 = vpack.c.b16 %v2564, %v2556
        %v4549 = vpack.c.b16 %v2565, %v2557
        %v4550 = vpack.c.b16 %v2566, %v2558
        %v4551 = vpack.c.b16 %v2567, %v2559
        %v4552 = vpack.c.b16 %v2568, %v2560
        %v4553 = vpack.c.b16 %v2569, %v2561
        %v4554 = vpack.c.b16 %v2570, %v2562
        %v4555 = vpack.c.b16 %v2571, %v2563
        %v4556 = vpack.c.b16 %v2580, %v2572
        %v4557 = vpack.c.b16 %v2581, %v2573
        %v4558 = vpack.c.b16 %v2582, %v2574
        %v4559 = vpack.c.b16 %v2583, %v2575
        %v4560 = vpack.c.b16 %v2584, %v2576
        %v4561 = vpack.c.b16 %v2585, %v2577
        %v4562 = vpack.c.b16 %v2586, %v2578
        %v4563 = vpack.c.b16 %v2587, %v2579
        %v4564 = vpack.c.b16 %v2596, %v2588
        %v4565 = vpack.c.b16 %v2597, %v2589
        %v4566 = vpack.c.b16 %v2598, %v2590
        %v4567 = vpack.c.b16 %v2599, %v2591
        %v4568 = vpack.c.b16 %v2600, %v2592
        %v4569 = vpack.c.b16 %v2601, %v2593
        %v4570 = vpack.c.b16 %v2602, %v2594
        %v4571 = vpack.c.b16 %v2603, %v2595
        %v4572 = vpack.c.b16 %v2612, %v2604
        %v4573 = vpack.c.b16 %v2613, %v2605
        %v4574 = vpack.c.b16 %v2614, %v2606
        %v4575 = vpack.c.b16 %v2615, %v2607
        %v4576 = vpack.c.b16 %v2616, %v2608
        %v4577 = vpack.c.b16 %v2617, %v2609
        %v4578 = vpack.c.b16 %v2618, %v2610
        %v4579 = vpack.c.b16 %v2619, %v2611
        %v4580 = vpack.c.b16 %v2628, %v2620
        %v4581 = vpack.c.b16 %v2629, %v2621
        %v4582 = vpack.c.b16 %v2630, %v2622
        %v4583 = vpack.c.b16 %v2631, %v2623
        %v4584 = vpack.c.b16 %v2632, %v2624
        %v4585 = vpack.c.b16 %v2633, %v2625
        %v4586 = vpack.c.b16 %v2634, %v2626
        %v4587 = vpack.c.b16 %v2635, %v2627
        %v4588 = vpack.c.b16 %v2644, %v2636
        %v4589 = vpack.c.b16 %v2645, %v2637
        %v4590 = vpack.c.b16 %v2646, %v2638
        %v4591 = vpack.c.b16 %v2647, %v2639
        %v4592 = vpack.c.b16 %v2648, %v2640
        %v4593 = vpack.c.b16 %v2649, %v2641
        %v4594 = vpack.c.b16 %v2650, %v2642
        %v4595 = vpack.c.b16 %v2651, %v2643
        %v4596 = vpack.c.b16 %v2660, %v2652
        %v4597 = vpack.c.b16 %v2661, %v2653
        %v4598 = vpack.c.b16 %v2662, %v2654
        %v4599 = vpack.c.b16 %v2663, %v2655
        %v4600 = vpack.c.b16 %v2664, %v2656
        %v4601 = vpack.c.b16 %v2665, %v2657
        %v4602 = vpack.c.b16 %v2666, %v2658
        %v4603 = vpack.c.b16 %v2667, %v2659
        %v4604 = vpack.c.b16 %v2676, %v2668
        %v4605 = vpack.c.b16 %v2677, %v2669
        %v4606 = vpack.c.b16 %v2678, %v2670
        %v4607 = vpack.c.b16 %v2679, %v2671
        %v4608 = vpack.c.b16 %v2680, %v2672
        %v4609 = vpack.c.b16 %v2681, %v2673
        %v4610 = vpack.c.b16 %v2682, %v2674
        %v4611 = vpack.c.b16 %v2683, %v2675
        %v4612 = vpack.c.b16 %v2692, %v2684
        %v4613 = vpack.c.b16 %v2693, %v2685
        %v4614 = vpack.c.b16 %v2694, %v2686
        %v4615 = vpack.c.b16 %v2695, %v2687
        %v4616 = vpack.c.b16 %v2696, %v2688
        %v4617 = vpack.c.b16 %v2697, %v2689
        %v4618 = vpack.c.b16 %v2698, %v2690
        %v4619 = vpack.c.b16 %v2699, %v2691
        %v4620 = vpack.c.b16 %v2708, %v2700
        %v4621 = vpack.c.b16 %v2709, %v2701
        %v4622 = vpack.c.b16 %v2710, %v2702
        %v4623 = vpack.c.b16 %v2711, %v2703
        %v4624 = vpack.c.b16 %v2712, %v2704
        %v4625 = vpack.c.b16 %v2713, %v2705
        %v4626 = vpack.c.b16 %v2714, %v2706
        %v4627 = vpack.c.b16 %v2715, %v2707
        %v4628 = vpack.c.b16 %v2724, %v2716
        %v4629 = vpack.c.b16 %v2725, %v2717
        %v4630 = vpack.c.b16 %v2726, %v2718
        %v4631 = vpack.c.b16 %v2727, %v2719
        %v4632 = vpack.c.b16 %v2728, %v2720
        %v4633 = vpack.c.b16 %v2729, %v2721
        %v4634 = vpack.c.b16 %v2730, %v2722
        %v4635 = vpack.c.b16 %v2731, %v2723
        %v4636 = vpack.c.b16 %v2740, %v2732
        %v4637 = vpack.c.b16 %v2741, %v2733
        %v4638 = vpack.c.b16 %v2742, %v2734
        %v4639 = vpack.c.b16 %v2743, %v2735
        %v4640 = vpack.c.b16 %v2744, %v2736
        %v4641 = vpack.c.b16 %v2745, %v2737
        %v4642 = vpack.c.b16 %v2746, %v2738
        %v4643 = vpack.c.b16 %v2747, %v2739
        %v4644 = vpack.c.b16 %v2756, %v2748
        %v4645 = vpack.c.b16 %v2757, %v2749
        %v4646 = vpack.c.b16 %v2758, %v2750
        %v4647 = vpack.c.b16 %v2759, %v2751
        %v4648 = vpack.c.b16 %v2760, %v2752
        %v4649 = vpack.c.b16 %v2761, %v2753
        %v4650 = vpack.c.b16 %v2762, %v2754
        %v4651 = vpack.c.b16 %v2763, %v2755
        %v4652 = vpack.c.b16 %v2772, %v2764
        %v4653 = vpack.c.b16 %v2773, %v2765
        %v4654 = vpack.c.b16 %v2774, %v2766
        %v4655 = vpack.c.b16 %v2775, %v2767
        %v4656 = vpack.c.b16 %v2776, %v2768
        %v4657 = vpack.c.b16 %v2777, %v2769
        %v4658 = vpack.c.b16 %v2778, %v2770
        %v4659 = vpack.c.b16 %v2779, %v2771
        %v4660 = vpack.c.b16 %v2788, %v2780
        %v4661 = vpack.c.b16 %v2789, %v2781
        %v4662 = vpack.c.b16 %v2790, %v2782
        %v4663 = vpack.c.b16 %v2791, %v2783
        %v4664 = vpack.c.b16 %v2792, %v2784
        %v4665 = vpack.c.b16 %v2793, %v2785
        %v4666 = vpack.c.b16 %v2794, %v2786
        %v4667 = vpack.c.b16 %v2795, %v2787
        %v4668 = vpack.c.b16 %v2804, %v2796
        %v4669 = vpack.c.b16 %v2805, %v2797
        %v4670 = vpack.c.b16 %v2806, %v2798
        %v4671 = vpack.c.b16 %v2807, %v2799
        %v4672 = vpack.c.b16 %v2808, %v2800
        %v4673 = vpack.c.b16 %v2809, %v2801
        %v4674 = vpack.c.b16 %v2810, %v2802
        %v4675 = vpack.c.b16 %v2811, %v2803
        %v4676 = vpack.c.b16 %v2820, %v2812
        %v4677 = vpack.c.b16 %v2821, %v2813
        %v4678 = vpack.c.b16 %v2822, %v2814
        %v4679 = vpack.c.b16 %v2823, %v2815
        %v4680 = vpack.c.b16 %v2824, %v2816
        %v4681 = vpack.c.b16 %v2825, %v2817
        %v4682 = vpack.c.b16 %v2826, %v2818
        %v4683 = vpack.c.b16 %v2827, %v2819
        %v4684 = vpack.c.b16 %v2836, %v2828
        %v4685 = vpack.c.b16 %v2837, %v2829
        %v4686 = vpack.c.b16 %v2838, %v2830
        %v4687 = vpack.c.b16 %v2839, %v2831
        %v4688 = vpack.c.b16 %v2840, %v2832
        %v4689 = vpack.c.b16 %v2841, %v2833
        %v4690 = vpack.c.b16 %v2842, %v2834
        %v4691 = vpack.c.b16 %v2843, %v2835
        %v4692 = vpack.c.b16 %v2852, %v2844
        %v4693 = vpack.c.b16 %v2853, %v2845
        %v4694 = vpack.c.b16 %v2854, %v2846
        %v4695 = vpack.c.b16 %v2855, %v2847
        %v4696 = vpack.c.b16 %v2856, %v2848
        %v4697 = vpack.c.b16 %v2857, %v2849
        %v4698 = vpack.c.b16 %v2858, %v2850
        %v4699 = vpack.c.b16 %v2859, %v2851
        %v4700 = vpack.c.b16 %v2868, %v2860
        %v4701 = vpack.c.b16 %v2869, %v2861
        %v4702 = vpack.c.b16 %v2870, %v2862
        %v4703 = vpack.c.b16 %v2871, %v2863
        %v4704 = vpack.c.b16 %v2872, %v2864
        %v4705 = vpack.c.b16 %v2873, %v2865
        %v4706 = vpack.c.b16 %v2874, %v2866
        %v4707 = vpack.c.b16 %v2875, %v2867
        %v4708 = vpack.c.b16 %v2884, %v2876
        %v4709 = vpack.c.b16 %v2885, %v2877
        %v4710 = vpack.c.b16 %v2886, %v2878
        %v4711 = vpack.c.b16 %v2887, %v2879
        %v4712 = vpack.c.b16 %v2888, %v2880
        %v4713 = vpack.c.b16 %v2889, %v2881
        %v4714 = vpack.c.b16 %v2890, %v2882
        %v4715 = vpack.c.b16 %v2891, %v2883
        %v4716 = vpack.c.b16 %v2900, %v2892
        %v4717 = vpack.c.b16 %v2901, %v2893
        %v4718 = vpack.c.b16 %v2902, %v2894
        %v4719 = vpack.c.b16 %v2903, %v2895
        %v4720 = vpack.c.b16 %v2904, %v2896
        %v4721 = vpack.c.b16 %v2905, %v2897
        %v4722 = vpack.c.b16 %v2906, %v2898
        %v4723 = vpack.c.b16 %v2907, %v2899
        %v4724 = vpack.c.b16 %v2916, %v2908
        %v4725 = vpack.c.b16 %v2917, %v2909
        %v4726 = vpack.c.b16 %v2918, %v2910
        %v4727 = vpack.c.b16 %v2919, %v2911
        %v4728 = vpack.c.b16 %v2920, %v2912
        %v4729 = vpack.c.b16 %v2921, %v2913
        %v4730 = vpack.c.b16 %v2922, %v2914
        %v4731 = vpack.c.b16 %v2923, %v2915
        %v4732 = vpack.c.b16 %v2932, %v2924
        %v4733 = vpack.c.b16 %v2933, %v2925
        %v4734 = vpack.c.b16 %v2934, %v2926
        %v4735 = vpack.c.b16 %v2935, %v2927
        %v4736 = vpack.c.b16 %v2936, %v2928
        %v4737 = vpack.c.b16 %v2937, %v2929
        %v4738 = vpack.c.b16 %v2938, %v2930
        %v4739 = vpack.c.b16 %v2939, %v2931
        %v4740 = vpack.c.b16 %v2948, %v2940
        %v4741 = vpack.c.b16 %v2949, %v2941
        %v4742 = vpack.c.b16 %v2950, %v2942
        %v4743 = vpack.c.b16 %v2951, %v2943
        %v4744 = vpack.c.b16 %v2952, %v2944
        %v4745 = vpack.c.b16 %v2953, %v2945
        %v4746 = vpack.c.b16 %v2954, %v2946
        %v4747 = vpack.c.b16 %v2955, %v2947
        %v4748 = vpack.c.b16 %v2964, %v2956
        %v4749 = vpack.c.b16 %v2965, %v2957
        %v4750 = vpack.c.b16 %v2966, %v2958
        %v4751 = vpack.c.b16 %v2967, %v2959
        %v4752 = vpack.c.b16 %v2968, %v2960
        %v4753 = vpack.c.b16 %v2969, %v2961
        %v4754 = vpack.c.b16 %v2970, %v2962
        %v4755 = vpack.c.b16 %v2971, %v2963
        %v4756 = vpack.c.b16 %v2980, %v2972
        %v4757 = vpack.c.b16 %v2981, %v2973
        %v4758 = vpack.c.b16 %v2982, %v2974
        %v4759 = vpack.c.b16 %v2983, %v2975
        %v4760 = vpack.c.b16 %v2984, %v2976
        %v4761 = vpack.c.b16 %v2985, %v2977
        %v4762 = vpack.c.b16 %v2986, %v2978
        %v4763 = vpack.c.b16 %v2987, %v2979
        %v4764 = vpack.c.b16 %v2996, %v2988
        %v4765 = vpack.c.b16 %v2997, %v2989
        %v4766 = vpack.c.b16 %v2998, %v2990
        %v4767 = vpack.c.b16 %v2999, %v2991
        %v4768 = vpack.c.b16 %v3000, %v2992
        %v4769 = vpack.c.b16 %v3001, %v2993
        %v4770 = vpack.c.b16 %v3002, %v2994
        %v4771 = vpack.c.b16 %v3003, %v2995
        %v4772 = vpack.c.b16 %v3012, %v3004
        %v4773 = vpack.c.b16 %v3013, %v3005
        %v4774 = vpack.c.b16 %v3014, %v3006
        %v4775 = vpack.c.b16 %v3015, %v3007
        %v4776 = vpack.c.b16 %v3016, %v3008
        %v4777 = vpack.c.b16 %v3017, %v3009
        %v4778 = vpack.c.b16 %v3018, %v3010
        %v4779 = vpack.c.b16 %v3019, %v3011
        %v4780 = vpack.c.b16 %v3028, %v3020
        %v4781 = vpack.c.b16 %v3029, %v3021
        %v4782 = vpack.c.b16 %v3030, %v3022
        %v4783 = vpack.c.b16 %v3031, %v3023
        %v4784 = vpack.c.b16 %v3032, %v3024
        %v4785 = vpack.c.b16 %v3033, %v3025
        %v4786 = vpack.c.b16 %v3034, %v3026
        %v4787 = vpack.c.b16 %v3035, %v3027
        %v4788 = vpack.c.b16 %v3044, %v3036
        %v4789 = vpack.c.b16 %v3045, %v3037
        %v4790 = vpack.c.b16 %v3046, %v3038
        %v4791 = vpack.c.b16 %v3047, %v3039
        %v4792 = vpack.c.b16 %v3048, %v3040
        %v4793 = vpack.c.b16 %v3049, %v3041
        %v4794 = vpack.c.b16 %v3050, %v3042
        %v4795 = vpack.c.b16 %v3051, %v3043
        %v4796 = vpack.c.b16 %v3060, %v3052
        %v4797 = vpack.c.b16 %v3061, %v3053
        %v4798 = vpack.c.b16 %v3062, %v3054
        %v4799 = vpack.c.b16 %v3063, %v3055
        %v4800 = vpack.c.b16 %v3064, %v3056
        %v4801 = vpack.c.b16 %v3065, %v3057
        %v4802 = vpack.c.b16 %v3066, %v3058
        %v4803 = vpack.c.b16 %v3067, %v3059
        %v4804 = vpack.c.b16 %v3076, %v3068
        %v4805 = vpack.c.b16 %v3077, %v3069
        %v4806 = vpack.c.b16 %v3078, %v3070
        %v4807 = vpack.c.b16 %v3079, %v3071
        %v4808 = vpack.c.b16 %v3080, %v3072
        %v4809 = vpack.c.b16 %v3081, %v3073
        %v4810 = vpack.c.b16 %v3082, %v3074
        %v4811 = vpack.c.b16 %v3083, %v3075
        %v4812 = vpack.c.b16 %v3092, %v3084
        %v4813 = vpack.c.b16 %v3093, %v3085
        %v4814 = vpack.c.b16 %v3094, %v3086
        %v4815 = vpack.c.b16 %v3095, %v3087
        %v4816 = vpack.c.b16 %v3096, %v3088
        %v4817 = vpack.c.b16 %v3097, %v3089
        %v4818 = vpack.c.b16 %v3098, %v3090
        %v4819 = vpack.c.b16 %v3099, %v3091
        %v4820 = vpack.c.b16 %v3108, %v3100
        %v4821 = vpack.c.b16 %v3109, %v3101
        %v4822 = vpack.c.b16 %v3110, %v3102
        %v4823 = vpack.c.b16 %v3111, %v3103
        %v4824 = vpack.c.b16 %v3112, %v3104
        %v4825 = vpack.c.b16 %v3113, %v3105
        %v4826 = vpack.c.b16 %v3114, %v3106
        %v4827 = vpack.c.b16 %v3115, %v3107
        %v4828 = vpack.c.b16 %v3124, %v3116
        %v4829 = vpack.c.b16 %v3125, %v3117
        %v4830 = vpack.c.b16 %v3126, %v3118
        %v4831 = vpack.c.b16 %v3127, %v3119
        %v4832 = vpack.c.b16 %v3128, %v3120
        %v4833 = vpack.c.b16 %v3129, %v3121
        %v4834 = vpack.c.b16 %v3130, %v3122
        %v4835 = vpack.c.b16 %v3131, %v3123
        %v4836 = vpack.c.b16 %v3140, %v3132
        %v4837 = vpack.c.b16 %v3141, %v3133
        %v4838 = vpack.c.b16 %v3142, %v3134
        %v4839 = vpack.c.b16 %v3143, %v3135
        %v4840 = vpack.c.b16 %v3144, %v3136
        %v4841 = vpack.c.b16 %v3145, %v3137
        %v4842 = vpack.c.b16 %v3146, %v3138
        %v4843 = vpack.c.b16 %v3147, %v3139
        %v4844 = vpack.c.b16 %v3156, %v3148
        %v4845 = vpack.c.b16 %v3157, %v3149
        %v4846 = vpack.c.b16 %v3158, %v3150
        %v4847 = vpack.c.b16 %v3159, %v3151
        %v4848 = vpack.c.b16 %v3160, %v3152
        %v4849 = vpack.c.b16 %v3161, %v3153
        %v4850 = vpack.c.b16 %v3162, %v3154
        %v4851 = vpack.c.b16 %v3163, %v3155
        %v4852 = vpack.c.b16 %v3172, %v3164
        %v4853 = vpack.c.b16 %v3173, %v3165
        %v4854 = vpack.c.b16 %v3174, %v3166
        %v4855 = vpack.c.b16 %v3175, %v3167
        %v4856 = vpack.c.b16 %v3176, %v3168
        %v4857 = vpack.c.b16 %v3177, %v3169
        %v4858 = vpack.c.b16 %v3178, %v3170
        %v4859 = vpack.c.b16 %v3179, %v3171
        %v4860 = vpack.c.b16 %v3188, %v3180
        %v4861 = vpack.c.b16 %v3189, %v3181
        %v4862 = vpack.c.b16 %v3190, %v3182
        %v4863 = vpack.c.b16 %v3191, %v3183
        %v4864 = vpack.c.b16 %v3192, %v3184
        %v4865 = vpack.c.b16 %v3193, %v3185
        %v4866 = vpack.c.b16 %v3194, %v3186
        %v4867 = vpack.c.b16 %v3195, %v3187
        %v4868 = vpack.c.b16 %v3204, %v3196
        %v4869 = vpack.c.b16 %v3205, %v3197
        %v4870 = vpack.c.b16 %v3206, %v3198
        %v4871 = vpack.c.b16 %v3207, %v3199
        %v4872 = vpack.c.b16 %v3208, %v3200
        %v4873 = vpack.c.b16 %v3209, %v3201
        %v4874 = vpack.c.b16 %v3210, %v3202
        %v4875 = vpack.c.b16 %v3211, %v3203
        %v4876 = vpack.c.b16 %v3220, %v3212
        %v4877 = vpack.c.b16 %v3221, %v3213
        %v4878 = vpack.c.b16 %v3222, %v3214
        %v4879 = vpack.c.b16 %v3223, %v3215
        %v4880 = vpack.c.b16 %v3224, %v3216
        %v4881 = vpack.c.b16 %v3225, %v3217
        %v4882 = vpack.c.b16 %v3226, %v3218
        %v4883 = vpack.c.b16 %v3227, %v3219
        %v4884 = vpack.c.b16 %v3236, %v3228
        %v4885 = vpack.c.b16 %v3237, %v3229
        %v4886 = vpack.c.b16 %v3238, %v3230
        %v4887 = vpack.c.b16 %v3239, %v3231
        %v4888 = vpack.c.b16 %v3240, %v3232
        %v4889 = vpack.c.b16 %v3241, %v3233
        %v4890 = vpack.c.b16 %v3242, %v3234
        %v4891 = vpack.c.b16 %v3243, %v3235
        %v4892 = vpack.c.b16 %v3252, %v3244
        %v4893 = vpack.c.b16 %v3253, %v3245
        %v4894 = vpack.c.b16 %v3254, %v3246
        %v4895 = vpack.c.b16 %v3255, %v3247
        %v4896 = vpack.c.b16 %v3256, %v3248
        %v4897 = vpack.c.b16 %v3257, %v3249
        %v4898 = vpack.c.b16 %v3258, %v3250
        %v4899 = vpack.c.b16 %v3259, %v3251
        %v4900 = vpack.c.b16 %v3268, %v3260
        %v4901 = vpack.c.b16 %v3269, %v3261
        %v4902 = vpack.c.b16 %v3270, %v3262
        %v4903 = vpack.c.b16 %v3271, %v3263
        %v4904 = vpack.c.b16 %v3272, %v3264
        %v4905 = vpack.c.b16 %v3273, %v3265
        %v4906 = vpack.c.b16 %v3274, %v3266
        %v4907 = vpack.c.b16 %v3275, %v3267
        %v4908 = vpack.c.b16 %v3284, %v3276
        %v4909 = vpack.c.b16 %v3285, %v3277
        %v4910 = vpack.c.b16 %v3286, %v3278
        %v4911 = vpack.c.b16 %v3287, %v3279
        %v4912 = vpack.c.b16 %v3288, %v3280
        %v4913 = vpack.c.b16 %v3289, %v3281
        %v4914 = vpack.c.b16 %v3290, %v3282
        %v4915 = vpack.c.b16 %v3291, %v3283
        %v4916 = vpack.c.b16 %v3300, %v3292
        %v4917 = vpack.c.b16 %v3301, %v3293
        %v4918 = vpack.c.b16 %v3302, %v3294
        %v4919 = vpack.c.b16 %v3303, %v3295
        %v4920 = vpack.c.b16 %v3304, %v3296
        %v4921 = vpack.c.b16 %v3305, %v3297
        %v4922 = vpack.c.b16 %v3306, %v3298
        %v4923 = vpack.c.b16 %v3307, %v3299
        %v4924 = vpack.c.b16 %v3316, %v3308
        %v4925 = vpack.c.b16 %v3317, %v3309
        %v4926 = vpack.c.b16 %v3318, %v3310
        %v4927 = vpack.c.b16 %v3319, %v3311
        %v4928 = vpack.c.b16 %v3320, %v3312
        %v4929 = vpack.c.b16 %v3321, %v3313
        %v4930 = vpack.c.b16 %v3322, %v3314
        %v4931 = vpack.c.b16 %v3323, %v3315
        %v4932 = vpack.c.b16 %v3332, %v3324
        %v4933 = vpack.c.b16 %v3333, %v3325
        %v4934 = vpack.c.b16 %v3334, %v3326
        %v4935 = vpack.c.b16 %v3335, %v3327
        %v4936 = vpack.c.b16 %v3336, %v3328
        %v4937 = vpack.c.b16 %v3337, %v3329
        %v4938 = vpack.c.b16 %v3338, %v3330
        %v4939 = vpack.c.b16 %v3339, %v3331
        %v4940 = vpack.c.b16 %v3348, %v3340
        %v4941 = vpack.c.b16 %v3349, %v3341
        %v4942 = vpack.c.b16 %v3350, %v3342
        %v4943 = vpack.c.b16 %v3351, %v3343
        %v4944 = vpack.c.b16 %v3352, %v3344
        %v4945 = vpack.c.b16 %v3353, %v3345
        %v4946 = vpack.c.b16 %v3354, %v3346
        %v4947 = vpack.c.b16 %v3355, %v3347
        %v4948 = vpack.c.b16 %v3364, %v3356
        %v4949 = vpack.c.b16 %v3365, %v3357
        %v4950 = vpack.c.b16 %v3366, %v3358
        %v4951 = vpack.c.b16 %v3367, %v3359
        %v4952 = vpack.c.b16 %v3368, %v3360
        %v4953 = vpack.c.b16 %v3369, %v3361
        %v4954 = vpack.c.b16 %v3370, %v3362
        %v4955 = vpack.c.b16 %v3371, %v3363
        %v4956 = vpack.c.b16 %v3380, %v3372
        %v4957 = vpack.c.b16 %v3381, %v3373
        %v4958 = vpack.c.b16 %v3382, %v3374
        %v4959 = vpack.c.b16 %v3383, %v3375
        %v4960 = vpack.c.b16 %v3384, %v3376
        %v4961 = vpack.c.b16 %v3385, %v3377
        %v4962 = vpack.c.b16 %v3386, %v3378
        %v4963 = vpack.c.b16 %v3387, %v3379
        %v4964 = vpack.c.b16 %v3396, %v3388
        %v4965 = vpack.c.b16 %v3397, %v3389
        %v4966 = vpack.c.b16 %v3398, %v3390
        %v4967 = vpack.c.b16 %v3399, %v3391
        %v4968 = vpack.c.b16 %v3400, %v3392
        %v4969 = vpack.c.b16 %v3401, %v3393
        %v4970 = vpack.c.b16 %v3402, %v3394
        %v4971 = vpack.c.b16 %v3403, %v3395
        %v4972 = vpack.c.b16 %v3412, %v3404
        %v4973 = vpack.c.b16 %v3413, %v3405
        %v4974 = vpack.c.b16 %v3414, %v3406
        %v4975 = vpack.c.b16 %v3415, %v3407
        %v4976 = vpack.c.b16 %v3416, %v3408
        %v4977 = vpack.c.b16 %v3417, %v3409
        %v4978 = vpack.c.b16 %v3418, %v3410
        %v4979 = vpack.c.b16 %v3419, %v3411
        %v4980 = vpack.c.b16 %v3428, %v3420
        %v4981 = vpack.c.b16 %v3429, %v3421
        %v4982 = vpack.c.b16 %v3430, %v3422
        %v4983 = vpack.c.b16 %v3431, %v3423
        %v4984 = vpack.c.b16 %v3432, %v3424
        %v4985 = vpack.c.b16 %v3433, %v3425
        %v4986 = vpack.c.b16 %v3434, %v3426
        %v4987 = vpack.c.b16 %v3435, %v3427
        %v4988 = vpack.c.b16 %v3444, %v3436
        %v4989 = vpack.c.b16 %v3445, %v3437
        %v4990 = vpack.c.b16 %v3446, %v3438
        %v4991 = vpack.c.b16 %v3447, %v3439
        %v4992 = vpack.c.b16 %v3448, %v3440
        %v4993 = vpack.c.b16 %v3449, %v3441
        %v4994 = vpack.c.b16 %v3450, %v3442
        %v4995 = vpack.c.b16 %v3451, %v3443
        %v4996 = vpack.c.b16 %v3460, %v3452
        %v4997 = vpack.c.b16 %v3461, %v3453
        %v4998 = vpack.c.b16 %v3462, %v3454
        %v4999 = vpack.c.b16 %v3463, %v3455
        %v5000 = vpack.c.b16 %v3464, %v3456
        %v5001 = vpack.c.b16 %v3465, %v3457
        %v5002 = vpack.c.b16 %v3466, %v3458
        %v5003 = vpack.c.b16 %v3467, %v3459
        %v5004 = vpack.c.b16 %v3476, %v3468
        %v5005 = vpack.c.b16 %v3477, %v3469
        %v5006 = vpack.c.b16 %v3478, %v3470
        %v5007 = vpack.c.b16 %v3479, %v3471
        %v5008 = vpack.c.b16 %v3480, %v3472
        %v5009 = vpack.c.b16 %v3481, %v3473
        %v5010 = vpack.c.b16 %v3482, %v3474
        %v5011 = vpack.c.b16 %v3483, %v3475
        %v5012 = vpack.c.b16 %v3492, %v3484
        %v5013 = vpack.c.b16 %v3493, %v3485
        %v5014 = vpack.c.b16 %v3494, %v3486
        %v5015 = vpack.c.b16 %v3495, %v3487
        %v5016 = vpack.c.b16 %v3496, %v3488
        %v5017 = vpack.c.b16 %v3497, %v3489
        %v5018 = vpack.c.b16 %v3498, %v3490
        %v5019 = vpack.c.b16 %v3499, %v3491
        %v5020 = vpack.c.b16 %v3508, %v3500
        %v5021 = vpack.c.b16 %v3509, %v3501
        %v5022 = vpack.c.b16 %v3510, %v3502
        %v5023 = vpack.c.b16 %v3511, %v3503
        %v5024 = vpack.c.b16 %v3512, %v3504
        %v5025 = vpack.c.b16 %v3513, %v3505
        %v5026 = vpack.c.b16 %v3514, %v3506
        %v5027 = vpack.c.b16 %v3515, %v3507
        %v5028 = vpack.c.b16 %v3524, %v3516
        %v5029 = vpack.c.b16 %v3525, %v3517
        %v5030 = vpack.c.b16 %v3526, %v3518
        %v5031 = vpack.c.b16 %v3527, %v3519
        %v5032 = vpack.c.b16 %v3528, %v3520
        %v5033 = vpack.c.b16 %v3529, %v3521
        %v5034 = vpack.c.b16 %v3530, %v3522
        %v5035 = vpack.c.b16 %v3531, %v3523
        %v5036 = vpack.c.b16 %v3540, %v3532
        %v5037 = vpack.c.b16 %v3541, %v3533
        %v5038 = vpack.c.b16 %v3542, %v3534
        %v5039 = vpack.c.b16 %v3543, %v3535
        %v5040 = vpack.c.b16 %v3544, %v3536
        %v5041 = vpack.c.b16 %v3545, %v3537
        %v5042 = vpack.c.b16 %v3546, %v3538
        %v5043 = vpack.c.b16 %v3547, %v3539
        %v5044 = vpack.c.b16 %v3556, %v3548
        %v5045 = vpack.c.b16 %v3557, %v3549
        %v5046 = vpack.c.b16 %v3558, %v3550
        %v5047 = vpack.c.b16 %v3559, %v3551
        %v5048 = vpack.c.b16 %v3560, %v3552
        %v5049 = vpack.c.b16 %v3561, %v3553
        %v5050 = vpack.c.b16 %v3562, %v3554
        %v5051 = vpack.c.b16 %v3563, %v3555
        %v5052 = vpack.c.b16 %v3572, %v3564
        %v5053 = vpack.c.b16 %v3573, %v3565
        %v5054 = vpack.c.b16 %v3574, %v3566
        %v5055 = vpack.c.b16 %v3575, %v3567
        %v5056 = vpack.c.b16 %v3576, %v3568
        %v5057 = vpack.c.b16 %v3577, %v3569
        %v5058 = vpack.c.b16 %v3578, %v3570
        %v5059 = vpack.c.b16 %v3579, %v3571
        %v5060 = vpack.c.b16 %v3588, %v3580
        %v5061 = vpack.c.b16 %v3589, %v3581
        %v5062 = vpack.c.b16 %v3590, %v3582
        %v5063 = vpack.c.b16 %v3591, %v3583
        %v5064 = vpack.c.b16 %v3592, %v3584
        %v5065 = vpack.c.b16 %v3593, %v3585
        %v5066 = vpack.c.b16 %v3594, %v3586
        %v5067 = vpack.c.b16 %v3595, %v3587
        %v5068 = vpack.c.b16 %v3604, %v3596
        %v5069 = vpack.c.b16 %v3605, %v3597
        %v5070 = vpack.c.b16 %v3606, %v3598
        %v5071 = vpack.c.b16 %v3607, %v3599
        %v5072 = vpack.c.b16 %v3608, %v3600
        %v5073 = vpack.c.b16 %v3609, %v3601
        %v5074 = vpack.c.b16 %v3610, %v3602
        %v5075 = vpack.c.b16 %v3611, %v3603
        %v5076 = vpack.c.b16 %v3620, %v3612
        %v5077 = vpack.c.b16 %v3621, %v3613
        %v5078 = vpack.c.b16 %v3622, %v3614
        %v5079 = vpack.c.b16 %v3623, %v3615
        %v5080 = vpack.c.b16 %v3624, %v3616
        %v5081 = vpack.c.b16 %v3625, %v3617
        %v5082 = vpack.c.b16 %v3626, %v3618
        %v5083 = vpack.c.b16 %v3627, %v3619
        %v5084 = vpack.c.b16 %v3636, %v3628
        %v5085 = vpack.c.b16 %v3637, %v3629
        %v5086 = vpack.c.b16 %v3638, %v3630
        %v5087 = vpack.c.b16 %v3639, %v3631
        %v5088 = vpack.c.b16 %v3640, %v3632
        %v5089 = vpack.c.b16 %v3641, %v3633
        %v5090 = vpack.c.b16 %v3642, %v3634
        %v5091 = vpack.c.b16 %v3643, %v3635
        %v5092 = vpack.c.b16 %v3652, %v3644
        %v5093 = vpack.c.b16 %v3653, %v3645
        %v5094 = vpack.c.b16 %v3654, %v3646
        %v5095 = vpack.c.b16 %v3655, %v3647
        %v5096 = vpack.c.b16 %v3656, %v3648
        %v5097 = vpack.c.b16 %v3657, %v3649
        %v5098 = vpack.c.b16 %v3658, %v3650
        %v5099 = vpack.c.b16 %v3659, %v3651
        %v5100 = vpack.c.b16 %v3668, %v3660
        %v5101 = vpack.c.b16 %v3669, %v3661
        %v5102 = vpack.c.b16 %v3670, %v3662
        %v5103 = vpack.c.b16 %v3671, %v3663
        %v5104 = vpack.c.b16 %v3672, %v3664
        %v5105 = vpack.c.b16 %v3673, %v3665
        %v5106 = vpack.c.b16 %v3674, %v3666
        %v5107 = vpack.c.b16 %v3675, %v3667
        %v5108 = vpack.c.b16 %v3684, %v3676
        %v5109 = vpack.c.b16 %v3685, %v3677
        %v5110 = vpack.c.b16 %v3686, %v3678
        %v5111 = vpack.c.b16 %v3687, %v3679
        %v5112 = vpack.c.b16 %v3688, %v3680
        %v5113 = vpack.c.b16 %v3689, %v3681
        %v5114 = vpack.c.b16 %v3690, %v3682
        %v5115 = vpack.c.b16 %v3691, %v3683
        %v5116 = vpack.c.b16 %v3700, %v3692
        %v5117 = vpack.c.b16 %v3701, %v3693
        %v5118 = vpack.c.b16 %v3702, %v3694
        %v5119 = vpack.c.b16 %v3703, %v3695
        %v5120 = vpack.c.b16 %v3704, %v3696
        %v5121 = vpack.c.b16 %v3705, %v3697
        %v5122 = vpack.c.b16 %v3706, %v3698
        %v5123 = vpack.c.b16 %v3707, %v3699
        %v5124 = vpack.c.b16 %v3716, %v3708
        %v5125 = vpack.c.b16 %v3717, %v3709
        %v5126 = vpack.c.b16 %v3718, %v3710
        %v5127 = vpack.c.b16 %v3719, %v3711
        %v5128 = vpack.c.b16 %v3720, %v3712
        %v5129 = vpack.c.b16 %v3721, %v3713
        %v5130 = vpack.c.b16 %v3722, %v3714
        %v5131 = vpack.c.b16 %v3723, %v3715
        %v5132 = vpack.c.b16 %v3732, %v3724
        %v5133 = vpack.c.b16 %v3733, %v3725
        %v5134 = vpack.c.b16 %v3734, %v3726
        %v5135 = vpack.c.b16 %v3735, %v3727
        %v5136 = vpack.c.b16 %v3736, %v3728
        %v5137 = vpack.c.b16 %v3737, %v3729
        %v5138 = vpack.c.b16 %v3738, %v3730
        %v5139 = vpack.c.b16 %v3739, %v3731
        %v5140 = vpack.c.b16 %v3748, %v3740
        %v5141 = vpack.c.b16 %v3749, %v3741
        %v5142 = vpack.c.b16 %v3750, %v3742
        %v5143 = vpack.c.b16 %v3751, %v3743
        %v5144 = vpack.c.b16 %v3752, %v3744
        %v5145 = vpack.c.b16 %v3753, %v3745
        %v5146 = vpack.c.b16 %v3754, %v3746
        %v5147 = vpack.c.b16 %v3755, %v3747
        %v5148 = vpack.c.b16 %v3764, %v3756
        %v5149 = vpack.c.b16 %v3765, %v3757
        %v5150 = vpack.c.b16 %v3766, %v3758
        %v5151 = vpack.c.b16 %v3767, %v3759
        %v5152 = vpack.c.b16 %v3768, %v3760
        %v5153 = vpack.c.b16 %v3769, %v3761
        %v5154 = vpack.c.b16 %v3770, %v3762
        %v5155 = vpack.c.b16 %v3771, %v3763
        %v5156 = vpack.c.b16 %v3780, %v3772
        %v5157 = vpack.c.b16 %v3781, %v3773
        %v5158 = vpack.c.b16 %v3782, %v3774
        %v5159 = vpack.c.b16 %v3783, %v3775
        %v5160 = vpack.c.b16 %v3784, %v3776
        %v5161 = vpack.c.b16 %v3785, %v3777
        %v5162 = vpack.c.b16 %v3786, %v3778
        %v5163 = vpack.c.b16 %v3787, %v3779
        %v5164 = vpack.c.b16 %v3796, %v3788
        %v5165 = vpack.c.b16 %v3797, %v3789
        %v5166 = vpack.c.b16 %v3798, %v3790
        %v5167 = vpack.c.b16 %v3799, %v3791
        %v5168 = vpack.c.b16 %v3800, %v3792
        %v5169 = vpack.c.b16 %v3801, %v3793
        %v5170 = vpack.c.b16 %v3802, %v3794
        %v5171 = vpack.c.b16 %v3803, %v3795
        %v5172 = vpack.c.b16 %v3812, %v3804
        %v5173 = vpack.c.b16 %v3813, %v3805
        %v5174 = vpack.c.b16 %v3814, %v3806
        %v5175 = vpack.c.b16 %v3815, %v3807
        %v5176 = vpack.c.b16 %v3816, %v3808
        %v5177 = vpack.c.b16 %v3817, %v3809
        %v5178 = vpack.c.b16 %v3818, %v3810
        %v5179 = vpack.c.b16 %v3819, %v3811
        %v5180 = vpack.c.b16 %v3828, %v3820
        %v5181 = vpack.c.b16 %v3829, %v3821
        %v5182 = vpack.c.b16 %v3830, %v3822
        %v5183 = vpack.c.b16 %v3831, %v3823
        %v5184 = vpack.c.b16 %v3832, %v3824
        %v5185 = vpack.c.b16 %v3833, %v3825
        %v5186 = vpack.c.b16 %v3834, %v3826
        %v5187 = vpack.c.b16 %v3835, %v3827
        %v5188 = vpack.c.b16 %v3844, %v3836
        %v5189 = vpack.c.b16 %v3845, %v3837
        %v5190 = vpack.c.b16 %v3846, %v3838
        %v5191 = vpack.c.b16 %v3847, %v3839
        %v5192 = vpack.c.b16 %v3848, %v3840
        %v5193 = vpack.c.b16 %v3849, %v3841
        %v5194 = vpack.c.b16 %v3850, %v3842
        %v5195 = vpack.c.b16 %v3851, %v3843
        %v5196 = vpack.c.b16 %v3860, %v3852
        %v5197 = vpack.c.b16 %v3861, %v3853
        %v5198 = vpack.c.b16 %v3862, %v3854
        %v5199 = vpack.c.b16 %v3863, %v3855
        %v5200 = vpack.c.b16 %v3864, %v3856
        %v5201 = vpack.c.b16 %v3865, %v3857
        %v5202 = vpack.c.b16 %v3866, %v3858
        %v5203 = vpack.c.b16 %v3867, %v3859
        %v5204 = vpack.c.b16 %v3876, %v3868
        %v5205 = vpack.c.b16 %v3877, %v3869
        %v5206 = vpack.c.b16 %v3878, %v3870
        %v5207 = vpack.c.b16 %v3879, %v3871
        %v5208 = vpack.c.b16 %v3880, %v3872
        %v5209 = vpack.c.b16 %v3881, %v3873
        %v5210 = vpack.c.b16 %v3882, %v3874
        %v5211 = vpack.c.b16 %v3883, %v3875
        %v5212 = vpack.c.b16 %v3892, %v3884
        %v5213 = vpack.c.b16 %v3893, %v3885
        %v5214 = vpack.c.b16 %v3894, %v3886
        %v5215 = vpack.c.b16 %v3895, %v3887
        %v5216 = vpack.c.b16 %v3896, %v3888
        %v5217 = vpack.c.b16 %v3897, %v3889
        %v5218 = vpack.c.b16 %v3898, %v3890
        %v5219 = vpack.c.b16 %v3899, %v3891
        %v5220 = vpack.c.b16 %v3908, %v3900
        %v5221 = vpack.c.b16 %v3909, %v3901
        %v5222 = vpack.c.b16 %v3910, %v3902
        %v5223 = vpack.c.b16 %v3911, %v3903
        %v5224 = vpack.c.b16 %v3912, %v3904
        %v5225 = vpack.c.b16 %v3913, %v3905
        %v5226 = vpack.c.b16 %v3914, %v3906
        %v5227 = vpack.c.b16 %v3915, %v3907
        %v5228 = vpack.c.b16 %v3924, %v3916
        %v5229 = vpack.c.b16 %v3925, %v3917
        %v5230 = vpack.c.b16 %v3926, %v3918
        %v5231 = vpack.c.b16 %v3927, %v3919
        %v5232 = vpack.c.b16 %v3928, %v3920
        %v5233 = vpack.c.b16 %v3929, %v3921
        %v5234 = vpack.c.b16 %v3930, %v3922
        %v5235 = vpack.c.b16 %v3931, %v3923
        %v5236 = vpack.c.b16 %v3940, %v3932
        %v5237 = vpack.c.b16 %v3941, %v3933
        %v5238 = vpack.c.b16 %v3942, %v3934
        %v5239 = vpack.c.b16 %v3943, %v3935
        %v5240 = vpack.c.b16 %v3944, %v3936
        %v5241 = vpack.c.b16 %v3945, %v3937
        %v5242 = vpack.c.b16 %v3946, %v3938
        %v5243 = vpack.c.b16 %v3947, %v3939
        %v5244 = vpack.c.b16 %v3956, %v3948
        %v5245 = vpack.c.b16 %v3957, %v3949
        %v5246 = vpack.c.b16 %v3958, %v3950
        %v5247 = vpack.c.b16 %v3959, %v3951
        %v5248 = vpack.c.b16 %v3960, %v3952
        %v5249 = vpack.c.b16 %v3961, %v3953
        %v5250 = vpack.c.b16 %v3962, %v3954
        %v5251 = vpack.c.b16 %v3963, %v3955
        %v5252 = vpack.c.b16 %v3972, %v3964
        %v5253 = vpack.c.b16 %v3973, %v3965
        %v5254 = vpack.c.b16 %v3974, %v3966
        %v5255 = vpack.c.b16 %v3975, %v3967
        %v5256 = vpack.c.b16 %v3976, %v3968
        %v5257 = vpack.c.b16 %v3977, %v3969
        %v5258 = vpack.c.b16 %v3978, %v3970
        %v5259 = vpack.c.b16 %v3979, %v3971
        %v5260 = vpack.c.b16 %v3988, %v3980
        %v5261 = vpack.c.b16 %v3989, %v3981
        %v5262 = vpack.c.b16 %v3990, %v3982
        %v5263 = vpack.c.b16 %v3991, %v3983
        %v5264 = vpack.c.b16 %v3992, %v3984
        %v5265 = vpack.c.b16 %v3993, %v3985
        %v5266 = vpack.c.b16 %v3994, %v3986
        %v5267 = vpack.c.b16 %v3995, %v3987
        %v5268 = vpack.c.b16 %v4004, %v3996
        %v5269 = vpack.c.b16 %v4005, %v3997
        %v5270 = vpack.c.b16 %v4006, %v3998
        %v5271 = vpack.c.b16 %v4007, %v3999
        %v5272 = vpack.c.b16 %v4008, %v4000
        %v5273 = vpack.c.b16 %v4009, %v4001
        %v5274 = vpack.c.b16 %v4010, %v4002
        %v5275 = vpack.c.b16 %v4011, %v4003
        %v5276 = vpack.c.b16 %v4020, %v4012
        %v5277 = vpack.c.b16 %v4021, %v4013
        %v5278 = vpack.c.b16 %v4022, %v4014
        %v5279 = vpack.c.b16 %v4023, %v4015
        %v5280 = vpack.c.b16 %v4024, %v4016
        %v5281 = vpack.c.b16 %v4025, %v4017
        %v5282 = vpack.c.b16 %v4026, %v4018
        %v5283 = vpack.c.b16 %v4027, %v4019
        %v5284 = vpack.c.b16 %v4036, %v4028
        %v5285 = vpack.c.b16 %v4037, %v4029
        %v5286 = vpack.c.b16 %v4038, %v4030
        %v5287 = vpack.c.b16 %v4039, %v4031
        %v5288 = vpack.c.b16 %v4040, %v4032
        %v5289 = vpack.c.b16 %v4041, %v4033
        %v5290 = vpack.c.b16 %v4042, %v4034
        %v5291 = vpack.c.b16 %v4043, %v4035
        %v5292 = vpack.c.b16 %v4052, %v4044
        %v5293 = vpack.c.b16 %v4053, %v4045
        %v5294 = vpack.c.b16 %v4054, %v4046
        %v5295 = vpack.c.b16 %v4055, %v4047
        %v5296 = vpack.c.b16 %v4056, %v4048
        %v5297 = vpack.c.b16 %v4057, %v4049
        %v5298 = vpack.c.b16 %v4058, %v4050
        %v5299 = vpack.c.b16 %v4059, %v4051
        %v5300 = vpack.c.b16 %v4068, %v4060
        %v5301 = vpack.c.b16 %v4069, %v4061
        %v5302 = vpack.c.b16 %v4070, %v4062
        %v5303 = vpack.c.b16 %v4071, %v4063
        %v5304 = vpack.c.b16 %v4072, %v4064
        %v5305 = vpack.c.b16 %v4073, %v4065
        %v5306 = vpack.c.b16 %v4074, %v4066
        %v5307 = vpack.c.b16 %v4075, %v4067
        %v5308 = vpack.c.b16 %v4084, %v4076
        %v5309 = vpack.c.b16 %v4085, %v4077
        %v5310 = vpack.c.b16 %v4086, %v4078
        %v5311 = vpack.c.b16 %v4087, %v4079
        %v5312 = vpack.c.b16 %v4088, %v4080
        %v5313 = vpack.c.b16 %v4089, %v4081
        %v5314 = vpack.c.b16 %v4090, %v4082
        %v5315 = vpack.c.b16 %v4091, %v4083
        %v5316 = vpack.c.b16 %v4100, %v4092
        %v5317 = vpack.c.b16 %v4101, %v4093
        %v5318 = vpack.c.b16 %v4102, %v4094
        %v5319 = vpack.c.b16 %v4103, %v4095
        %v5320 = vpack.c.b16 %v4104, %v4096
        %v5321 = vpack.c.b16 %v4105, %v4097
        %v5322 = vpack.c.b16 %v4106, %v4098
        %v5323 = vpack.c.b16 %v4107, %v4099
        %v5324 = vpack.c.b16 %v4116, %v4108
        %v5325 = vpack.c.b16 %v4117, %v4109
        %v5326 = vpack.c.b16 %v4118, %v4110
        %v5327 = vpack.c.b16 %v4119, %v4111
        %v5328 = vpack.c.b16 %v4120, %v4112
        %v5329 = vpack.c.b16 %v4121, %v4113
        %v5330 = vpack.c.b16 %v4122, %v4114
        %v5331 = vpack.c.b16 %v4123, %v4115
        %v5332 = vpack.c.b16 %v4132, %v4124
        %v5333 = vpack.c.b16 %v4133, %v4125
        %v5334 = vpack.c.b16 %v4134, %v4126
        %v5335 = vpack.c.b16 %v4135, %v4127
        %v5336 = vpack.c.b16 %v4136, %v4128
        %v5337 = vpack.c.b16 %v4137, %v4129
        %v5338 = vpack.c.b16 %v4138, %v4130
        %v5339 = vpack.c.b16 %v4139, %v4131
        %v5340 = vpack.c.b16 %v4148, %v4140
        %v5341 = vpack.c.b16 %v4149, %v4141
        %v5342 = vpack.c.b16 %v4150, %v4142
        %v5343 = vpack.c.b16 %v4151, %v4143
        %v5344 = vpack.c.b16 %v4152, %v4144
        %v5345 = vpack.c.b16 %v4153, %v4145
        %v5346 = vpack.c.b16 %v4154, %v4146
        %v5347 = vpack.c.b16 %v4155, %v4147
        %v5348 = vpack.c.b16 %v4164, %v4156
        %v5349 = vpack.c.b16 %v4165, %v4157
        %v5350 = vpack.c.b16 %v4166, %v4158
        %v5351 = vpack.c.b16 %v4167, %v4159
        %v5352 = vpack.c.b16 %v4168, %v4160
        %v5353 = vpack.c.b16 %v4169, %v4161
        %v5354 = vpack.c.b16 %v4170, %v4162
        %v5355 = vpack.c.b16 %v4171, %v4163
        %v5356 = vpack.c.b16 %v4180, %v4172
        %v5357 = vpack.c.b16 %v4181, %v4173
        %v5358 = vpack.c.b16 %v4182, %v4174
        %v5359 = vpack.c.b16 %v4183, %v4175
        %v5360 = vpack.c.b16 %v4184, %v4176
        %v5361 = vpack.c.b16 %v4185, %v4177
        %v5362 = vpack.c.b16 %v4186, %v4178
        %v5363 = vpack.c.b16 %v4187, %v4179
        %v5364 = vpack.c.b16 %v4196, %v4188
        %v5365 = vpack.c.b16 %v4197, %v4189
        %v5366 = vpack.c.b16 %v4198, %v4190
        %v5367 = vpack.c.b16 %v4199, %v4191
        %v5368 = vpack.c.b16 %v4200, %v4192
        %v5369 = vpack.c.b16 %v4201, %v4193
        %v5370 = vpack.c.b16 %v4202, %v4194
        %v5371 = vpack.c.b16 %v4203, %v4195
        %v5372 = vpack.c.b16 %v4212, %v4204
        %v5373 = vpack.c.b16 %v4213, %v4205
        %v5374 = vpack.c.b16 %v4214, %v4206
        %v5375 = vpack.c.b16 %v4215, %v4207
        %v5376 = vpack.c.b16 %v4216, %v4208
        %v5377 = vpack.c.b16 %v4217, %v4209
        %v5378 = vpack.c.b16 %v4218, %v4210
        %v5379 = vpack.c.b16 %v4219, %v4211
        %v5380 = vpack.c.b16 %v4228, %v4220
        %v5381 = vpack.c.b16 %v4229, %v4221
        %v5382 = vpack.c.b16 %v4230, %v4222
        %v5383 = vpack.c.b16 %v4231, %v4223
        %v5384 = vpack.c.b16 %v4232, %v4224
        %v5385 = vpack.c.b16 %v4233, %v4225
        %v5386 = vpack.c.b16 %v4234, %v4226
        %v5387 = vpack.c.b16 %v4235, %v4227
        %v5388 = vpack.c.b16 %v4244, %v4236
        %v5389 = vpack.c.b16 %v4245, %v4237
        %v5390 = vpack.c.b16 %v4246, %v4238
        %v5391 = vpack.c.b16 %v4247, %v4239
        %v5392 = vpack.c.b16 %v4248, %v4240
        %v5393 = vpack.c.b16 %v4249, %v4241
        %v5394 = vpack.c.b16 %v4250, %v4242
        %v5395 = vpack.c.b16 %v4251, %v4243
        %v5396 = vpack.c.b16 %v4260, %v4252
        %v5397 = vpack.c.b16 %v4261, %v4253
        %v5398 = vpack.c.b16 %v4262, %v4254
        %v5399 = vpack.c.b16 %v4263, %v4255
        %v5400 = vpack.c.b16 %v4264, %v4256
        %v5401 = vpack.c.b16 %v4265, %v4257
        %v5402 = vpack.c.b16 %v4266, %v4258
        %v5403 = vpack.c.b16 %v4267, %v4259
        %v5404 = vpack.c.b16 %v4276, %v4268
        %v5405 = vpack.c.b16 %v4277, %v4269
        %v5406 = vpack.c.b16 %v4278, %v4270
        %v5407 = vpack.c.b16 %v4279, %v4271
        %v5408 = vpack.c.b16 %v4280, %v4272
        %v5409 = vpack.c.b16 %v4281, %v4273
        %v5410 = vpack.c.b16 %v4282, %v4274
        %v5411 = vpack.c.b16 %v4283, %v4275
        %v5412 = vpack.c.b16 %v4292, %v4284
        %v5413 = vpack.c.b16 %v4293, %v4285
        %v5414 = vpack.c.b16 %v4294, %v4286
        %v5415 = vpack.c.b16 %v4295, %v4287
        %v5416 = vpack.c.b16 %v4296, %v4288
        %v5417 = vpack.c.b16 %v4297, %v4289
        %v5418 = vpack.c.b16 %v4298, %v4290
        %v5419 = vpack.c.b16 %v4299, %v4291
        %v5420 = vpack.c.b16 %v4308, %v4300
        %v5421 = vpack.c.b16 %v4309, %v4301
        %v5422 = vpack.c.b16 %v4310, %v4302
        %v5423 = vpack.c.b16 %v4311, %v4303
        %v5424 = vpack.c.b16 %v4312, %v4304
        %v5425 = vpack.c.b16 %v4313, %v4305
        %v5426 = vpack.c.b16 %v4314, %v4306
        %v5427 = vpack.c.b16 %v4315, %v4307
        %v5428 = vpack.c.b16 %v4324, %v4316
        %v5429 = vpack.c.b16 %v4325, %v4317
        %v5430 = vpack.c.b16 %v4326, %v4318
        %v5431 = vpack.c.b16 %v4327, %v4319
        %v5432 = vpack.c.b16 %v4328, %v4320
        %v5433 = vpack.c.b16 %v4329, %v4321
        %v5434 = vpack.c.b16 %v4330, %v4322
        %v5435 = vpack.c.b16 %v4331, %v4323
        %v5436 = vpack.c.b16 %v4340, %v4332
        %v5437 = vpack.c.b16 %v4341, %v4333
        %v5438 = vpack.c.b16 %v4342, %v4334
        %v5439 = vpack.c.b16 %v4343, %v4335
        %v5440 = vpack.c.b16 %v4344, %v4336
        %v5441 = vpack.c.b16 %v4345, %v4337
        %v5442 = vpack.c.b16 %v4346, %v4338
        %v5443 = vpack.c.b16 %v4347, %v4339
        %v5444 = vpack.c.b16 %v4356, %v4348
        %v5445 = vpack.c.b16 %v4357, %v4349
        %v5446 = vpack.c.b16 %v4358, %v4350
        %v5447 = vpack.c.b16 %v4359, %v4351
        %v5448 = vpack.c.b16 %v4360, %v4352
        %v5449 = vpack.c.b16 %v4361, %v4353
        %v5450 = vpack.c.b16 %v4362, %v4354
        %v5451 = vpack.c.b16 %v4363, %v4355
        %v5452 = vpack.c.b16 %v4372, %v4364
        %v5453 = vpack.c.b16 %v4373, %v4365
        %v5454 = vpack.c.b16 %v4374, %v4366
        %v5455 = vpack.c.b16 %v4375, %v4367
        %v5456 = vpack.c.b16 %v4376, %v4368
        %v5457 = vpack.c.b16 %v4377, %v4369
        %v5458 = vpack.c.b16 %v4378, %v4370
        %v5459 = vpack.c.b16 %v4379, %v4371
        %v5460 = vpack.c.b16 %v4388, %v4380
        %v5461 = vpack.c.b16 %v4389, %v4381
        %v5462 = vpack.c.b16 %v4390, %v4382
        %v5463 = vpack.c.b16 %v4391, %v4383
        %v5464 = vpack.c.b16 %v4392, %v4384
        %v5465 = vpack.c.b16 %v4393, %v4385
        %v5466 = vpack.c.b16 %v4394, %v4386
        %v5467 = vpack.c.b16 %v4395, %v4387
        %v5468 = vpack.c.b16 %v4404, %v4396
        %v5469 = vpack.c.b16 %v4405, %v4397
        %v5470 = vpack.c.b16 %v4406, %v4398
        %v5471 = vpack.c.b16 %v4407, %v4399
        %v5472 = vpack.c.b16 %v4408, %v4400
        %v5473 = vpack.c.b16 %v4409, %v4401
        %v5474 = vpack.c.b16 %v4410, %v4402
        %v5475 = vpack.c.b16 %v4411, %v4403
        %v5476 = vpack.c.b16 %v4420, %v4412
        %v5477 = vpack.c.b16 %v4421, %v4413
        %v5478 = vpack.c.b16 %v4422, %v4414
        %v5479 = vpack.c.b16 %v4423, %v4415
        %v5480 = vpack.c.b16 %v4424, %v4416
        %v5481 = vpack.c.b16 %v4425, %v4417
        %v5482 = vpack.c.b16 %v4426, %v4418
        %v5483 = vpack.c.b16 %v4427, %v4419
        %v5484 = vpack.c.b16 %v4436, %v4428
        %v5485 = vpack.c.b16 %v4437, %v4429
        %v5486 = vpack.c.b16 %v4438, %v4430
        %v5487 = vpack.c.b16 %v4439, %v4431
        %v5488 = vpack.c.b16 %v4440, %v4432
        %v5489 = vpack.c.b16 %v4441, %v4433
        %v5490 = vpack.c.b16 %v4442, %v4434
        %v5491 = vpack.c.b16 %v4443, %v4435
        %v5492 = vpack.c.b16 %v4452, %v4444
        %v5493 = vpack.c.b16 %v4453, %v4445
        %v5494 = vpack.c.b16 %v4454, %v4446
        %v5495 = vpack.c.b16 %v4455, %v4447
        %v5496 = vpack.c.b16 %v4456, %v4448
        %v5497 = vpack.c.b16 %v4457, %v4449
        %v5498 = vpack.c.b16 %v4458, %v4450
        %v5499 = vpack.c.b16 %v4459, %v4451
        %v5500 = vpack.c.b16 %v4468, %v4460
        %v5501 = vpack.c.b16 %v4469, %v4461
        %v5502 = vpack.c.b16 %v4470, %v4462
        %v5503 = vpack.c.b16 %v4471, %v4463
        %v5504 = vpack.c.b16 %v4472, %v4464
        %v5505 = vpack.c.b16 %v4473, %v4465
        %v5506 = vpack.c.b16 %v4474, %v4466
        %v5507 = vpack.c.b16 %v4475, %v4467
        %v5508 = vpack.c.b16 %v4484, %v4476
        %v5509 = vpack.c.b16 %v4485, %v4477
        %v5510 = vpack.c.b16 %v4486, %v4478
        %v5511 = vpack.c.b16 %v4487, %v4479
        %v5512 = vpack.c.b16 %v4488, %v4480
        %v5513 = vpack.c.b16 %v4489, %v4481
        %v5514 = vpack.c.b16 %v4490, %v4482
        %v5515 = vpack.c.b16 %v4491, %v4483
        %6540 = vmatprep.subr.bf16.mxu0 %v4493
        %6541 = vmatpush1.bf16.msra.mxu0 %v4492
        %6542 = vmatprep.subr.bf16.mxu0 %v4501
        %6543 = vmatpush1.bf16.msra.mxu0 %v4500
        %6544 = vmatprep.subr.bf16.mxu0 %v4509
        %6545 = vmatpush1.bf16.msra.mxu0 %v4508
        %6546 = vmatprep.subr.bf16.mxu0 %v4517
        %6547 = vmatpush1.bf16.msra.mxu0 %v4516
        %6548 = vmatprep.subr.bf16.mxu0 %v4525
        %6549 = vmatpush1.bf16.msra.mxu0 %v4524
        %6550 = vmatprep.subr.bf16.mxu0 %v4533
        %6551 = vmatpush1.bf16.msra.mxu0 %v4532
        %6552 = vmatprep.subr.bf16.mxu0 %v4541
        %6553 = vmatpush1.bf16.msra.mxu0 %v4540
        %6554 = vmatprep.subr.bf16.mxu0 %v4549
        %6555 = vmatpush1.bf16.msra.mxu0 %v4548
        %6556 = vmatprep.subr.bf16.mxu0 %v4557
        %6557 = vmatpush1.bf16.msra.mxu0 %v4556
        %6558 = vmatprep.subr.bf16.mxu0 %v4565
        %6559 = vmatpush1.bf16.msra.mxu0 %v4564
        %6560 = vmatprep.subr.bf16.mxu0 %v4573
        %6561 = vmatpush1.bf16.msra.mxu0 %v4572
        %6562 = vmatprep.subr.bf16.mxu0 %v4581
        %6563 = vmatpush1.bf16.msra.mxu0 %v4580
        %6564 = vmatprep.subr.bf16.mxu0 %v4589
        %6565 = vmatpush1.bf16.msra.mxu0 %v4588
        %6566 = vmatprep.subr.bf16.mxu0 %v4597
        %6567 = vmatpush1.bf16.msra.mxu0 %v4596
        %6568 = vmatprep.subr.bf16.mxu0 %v4605
        %6569 = vmatpush1.bf16.msra.mxu0 %v4604
        %6570 = vmatprep.subr.bf16.mxu0 %v4613
        %6571 = vmatpush1.bf16.msra.mxu0 %v4612
        %6572 = vmatprep.mubr.bf16.mxu0 %v1351
        %6573 = vmatmul.mubr.bf16.gmra.mrb[0].mxu0 %v1343
        %v6574 = vpop.f32.mrb[0].mxu0
        %v6575 = vadd.f32 %v1295, %v6574
        %v6576 = vpop.f32.mrb[0].mxu0
        %v6577 = vadd.f32 %v1299, %v6576
        %v6578 = vpop.f32.mrb[0].mxu0
        %v6579 = vpop.f32.mrb[0].mxu0
        %6580 = vdwg.mxu0
        %6581 = vmatprep.subr.bf16.mxu0 %v4621
        %6582 = vmatpush1.bf16.msra.mxu0 %v4620
        %6583 = vmatprep.subr.bf16.mxu0 %v4629
        %6584 = vmatpush1.bf16.msra.mxu0 %v4628
        %6585 = vmatprep.subr.bf16.mxu0 %v4637
        %6586 = vmatpush1.bf16.msra.mxu0 %v4636
        %6587 = vmatprep.subr.bf16.mxu0 %v4645
        %6588 = vmatpush1.bf16.msra.mxu0 %v4644
        %6589 = vmatprep.subr.bf16.mxu0 %v4653
        %6590 = vmatpush1.bf16.msra.mxu0 %v4652
        %6591 = vmatprep.subr.bf16.mxu0 %v4661
        %6592 = vmatpush1.bf16.msra.mxu0 %v4660
        %6593 = vmatprep.subr.bf16.mxu0 %v4669
        %6594 = vmatpush1.bf16.msra.mxu0 %v4668
        %6595 = vmatprep.subr.bf16.mxu0 %v4677
        %6596 = vmatpush1.bf16.msra.mxu0 %v4676
        %6597 = vmatprep.subr.bf16.mxu0 %v4685
        %6598 = vmatpush1.bf16.msra.mxu0 %v4684
        %6599 = vmatprep.subr.bf16.mxu0 %v4693
        %6600 = vmatpush1.bf16.msra.mxu0 %v4692
        %6601 = vmatprep.subr.bf16.mxu0 %v4701
        %6602 = vmatpush1.bf16.msra.mxu0 %v4700
        %6603 = vmatprep.subr.bf16.mxu0 %v4709
        %6604 = vmatpush1.bf16.msra.mxu0 %v4708
        %6605 = vmatprep.subr.bf16.mxu0 %v4717
        %6606 = vmatpush1.bf16.msra.mxu0 %v4716
        %6607 = vmatprep.subr.bf16.mxu0 %v4725
        %6608 = vmatpush1.bf16.msra.mxu0 %v4724
        %6609 = vmatprep.subr.bf16.mxu0 %v4733
        %6610 = vmatpush1.bf16.msra.mxu0 %v4732
        %6611 = vmatprep.subr.bf16.mxu0 %v4741
        %6612 = vmatpush1.bf16.msra.mxu0 %v4740
        %6613 = vmatprep.mubr.bf16.mxu0 %v1352
        %6614 = vmatmul.mubr.bf16.gmra.mrb[0].mxu0 %v1350
        %v6615 = vpop.f32.mrb[0].mxu0
        %v6616 = vadd.f32 %v6575, %v6615
        %v6617 = vpop.f32.mrb[0].mxu0
        %v6618 = vadd.f32 %v6577, %v6617
        %v6619 = vpop.f32.mrb[0].mxu0
        %v6620 = vpop.f32.mrb[0].mxu0
        %6621 = vdwg.mxu0
        %6622 = vmatprep.subr.bf16.mxu0 %v4749
        %6623 = vmatpush1.bf16.msra.mxu0 %v4748
        %6624 = vmatprep.subr.bf16.mxu0 %v4757
        %6625 = vmatpush1.bf16.msra.mxu0 %v4756
        %6626 = vmatprep.subr.bf16.mxu0 %v4765
        %6627 = vmatpush1.bf16.msra.mxu0 %v4764
        %6628 = vmatprep.subr.bf16.mxu0 %v4773
        %6629 = vmatpush1.bf16.msra.mxu0 %v4772
        %6630 = vmatprep.subr.bf16.mxu0 %v4781
        %6631 = vmatpush1.bf16.msra.mxu0 %v4780
        %6632 = vmatprep.subr.bf16.mxu0 %v4789
        %6633 = vmatpush1.bf16.msra.mxu0 %v4788
        %6634 = vmatprep.subr.bf16.mxu0 %v4797
        %6635 = vmatpush1.bf16.msra.mxu0 %v4796
        %6636 = vmatprep.subr.bf16.mxu0 %v4805
        %6637 = vmatpush1.bf16.msra.mxu0 %v4804
        %6638 = vmatprep.subr.bf16.mxu0 %v4813
        %6639 = vmatpush1.bf16.msra.mxu0 %v4812
        %6640 = vmatprep.subr.bf16.mxu0 %v4821
        %6641 = vmatpush1.bf16.msra.mxu0 %v4820
        %6642 = vmatprep.subr.bf16.mxu0 %v4829
        %6643 = vmatpush1.bf16.msra.mxu0 %v4828
        %6644 = vmatprep.subr.bf16.mxu0 %v4837
        %6645 = vmatpush1.bf16.msra.mxu0 %v4836
        %6646 = vmatprep.subr.bf16.mxu0 %v4845
        %6647 = vmatpush1.bf16.msra.mxu0 %v4844
        %6648 = vmatprep.subr.bf16.mxu0 %v4853
        %6649 = vmatpush1.bf16.msra.mxu0 %v4852
        %6650 = vmatprep.subr.bf16.mxu0 %v4861
        %6651 = vmatpush1.bf16.msra.mxu0 %v4860
        %6652 = vmatprep.subr.bf16.mxu0 %v4869
        %6653 = vmatpush1.bf16.msra.mxu0 %v4868
        %6654 = vmatprep.mubr.bf16.mxu0 %v1368
        %6655 = vmatmul.mubr.bf16.gmra.mrb[0].mxu0 %v1360
        %v6656 = vpop.f32.mrb[0].mxu0
        %v6657 = vadd.f32 %v6616, %v6656
        %v6658 = vpop.f32.mrb[0].mxu0
        %v6659 = vadd.f32 %v6618, %v6658
        %v6660 = vpop.f32.mrb[0].mxu0
        %v6661 = vpop.f32.mrb[0].mxu0
        %6662 = vdwg.mxu0
        %6663 = vmatprep.subr.bf16.mxu0 %v4877
        %6664 = vmatpush1.bf16.msra.mxu0 %v4876
        %6665 = vmatprep.subr.bf16.mxu0 %v4885
        %6666 = vmatpush1.bf16.msra.mxu0 %v4884
        %6667 = vmatprep.subr.bf16.mxu0 %v4893
        %6668 = vmatpush1.bf16.msra.mxu0 %v4892
        %6669 = vmatprep.subr.bf16.mxu0 %v4901
        %6670 = vmatpush1.bf16.msra.mxu0 %v4900
        %6671 = vmatprep.subr.bf16.mxu0 %v4909
        %6672 = vmatpush1.bf16.msra.mxu0 %v4908
        %6673 = vmatprep.subr.bf16.mxu0 %v4917
        %6674 = vmatpush1.bf16.msra.mxu0 %v4916
        %6675 = vmatprep.subr.bf16.mxu0 %v4925
        %6676 = vmatpush1.bf16.msra.mxu0 %v4924
        %6677 = vmatprep.subr.bf16.mxu0 %v4933
        %6678 = vmatpush1.bf16.msra.mxu0 %v4932
        %6679 = vmatprep.subr.bf16.mxu0 %v4941
        %6680 = vmatpush1.bf16.msra.mxu0 %v4940
        %6681 = vmatprep.subr.bf16.mxu0 %v4949
        %6682 = vmatpush1.bf16.msra.mxu0 %v4948
        %6683 = vmatprep.subr.bf16.mxu0 %v4957
        %6684 = vmatpush1.bf16.msra.mxu0 %v4956
        %6685 = vmatprep.subr.bf16.mxu0 %v4965
        %6686 = vmatpush1.bf16.msra.mxu0 %v4964
        %6687 = vmatprep.subr.bf16.mxu0 %v4973
        %6688 = vmatpush1.bf16.msra.mxu0 %v4972
        %6689 = vmatprep.subr.bf16.mxu0 %v4981
        %6690 = vmatpush1.bf16.msra.mxu0 %v4980
        %6691 = vmatprep.subr.bf16.mxu0 %v4989
        %6692 = vmatpush1.bf16.msra.mxu0 %v4988
        %6693 = vmatprep.subr.bf16.mxu0 %v4997
        %6694 = vmatpush1.bf16.msra.mxu0 %v4996
        %6695 = vmatprep.mubr.bf16.mxu0 %v1369
        %6696 = vmatmul.mubr.bf16.gmra.mrb[0].mxu0 %v1367
        %v6697 = vpop.f32.mrb[0].mxu0
        %v6698 = vadd.f32 %v6657, %v6697
        %v6699 = vpop.f32.mrb[0].mxu0
        %v6700 = vadd.f32 %v6659, %v6699
        %v6701 = vpop.f32.mrb[0].mxu0
        %v6702 = vpop.f32.mrb[0].mxu0
        %6703 = vdwg.mxu0
        %6704 = vmatprep.subr.bf16.mxu0 %v5005
        %6705 = vmatpush1.bf16.msra.mxu0 %v5004
        %6706 = vmatprep.subr.bf16.mxu0 %v5013
        %6707 = vmatpush1.bf16.msra.mxu0 %v5012
        %6708 = vmatprep.subr.bf16.mxu0 %v5021
        %6709 = vmatpush1.bf16.msra.mxu0 %v5020
        %6710 = vmatprep.subr.bf16.mxu0 %v5029
        %6711 = vmatpush1.bf16.msra.mxu0 %v5028
        %6712 = vmatprep.subr.bf16.mxu0 %v5037
        %6713 = vmatpush1.bf16.msra.mxu0 %v5036
        %6714 = vmatprep.subr.bf16.mxu0 %v5045
        %6715 = vmatpush1.bf16.msra.mxu0 %v5044
        %6716 = vmatprep.subr.bf16.mxu0 %v5053
        %6717 = vmatpush1.bf16.msra.mxu0 %v5052
        %6718 = vmatprep.subr.bf16.mxu0 %v5061
        %6719 = vmatpush1.bf16.msra.mxu0 %v5060
        %6720 = vmatprep.subr.bf16.mxu0 %v5069
        %6721 = vmatpush1.bf16.msra.mxu0 %v5068
        %6722 = vmatprep.subr.bf16.mxu0 %v5077
        %6723 = vmatpush1.bf16.msra.mxu0 %v5076
        %6724 = vmatprep.subr.bf16.mxu0 %v5085
        %6725 = vmatpush1.bf16.msra.mxu0 %v5084
        %6726 = vmatprep.subr.bf16.mxu0 %v5093
        %6727 = vmatpush1.bf16.msra.mxu0 %v5092
        %6728 = vmatprep.subr.bf16.mxu0 %v5101
        %6729 = vmatpush1.bf16.msra.mxu0 %v5100
        %6730 = vmatprep.subr.bf16.mxu0 %v5109
        %6731 = vmatpush1.bf16.msra.mxu0 %v5108
        %6732 = vmatprep.subr.bf16.mxu0 %v5117
        %6733 = vmatpush1.bf16.msra.mxu0 %v5116
        %6734 = vmatprep.subr.bf16.mxu0 %v5125
        %6735 = vmatpush1.bf16.msra.mxu0 %v5124
        %6736 = vmatprep.mubr.bf16.mxu0 %v1385
        %6737 = vmatmul.mubr.bf16.gmra.mrb[0].mxu0 %v1377
        %v6738 = vpop.f32.mrb[0].mxu0
        %v6739 = vadd.f32 %v6698, %v6738
        %v6740 = vpop.f32.mrb[0].mxu0
        %v6741 = vadd.f32 %v6700, %v6740
        %v6742 = vpop.f32.mrb[0].mxu0
        %v6743 = vpop.f32.mrb[0].mxu0
        %6744 = vdwg.mxu0
        %6745 = vmatprep.subr.bf16.mxu0 %v5133
        %6746 = vmatpush1.bf16.msra.mxu0 %v5132
        %6747 = vmatprep.subr.bf16.mxu0 %v5141
        %6748 = vmatpush1.bf16.msra.mxu0 %v5140
        %6749 = vmatprep.subr.bf16.mxu0 %v5149
        %6750 = vmatpush1.bf16.msra.mxu0 %v5148
        %6751 = vmatprep.subr.bf16.mxu0 %v5157
        %6752 = vmatpush1.bf16.msra.mxu0 %v5156
        %6753 = vmatprep.subr.bf16.mxu0 %v5165
        %6754 = vmatpush1.bf16.msra.mxu0 %v5164
        %6755 = vmatprep.subr.bf16.mxu0 %v5173
        %6756 = vmatpush1.bf16.msra.mxu0 %v5172
        %6757 = vmatprep.subr.bf16.mxu0 %v5181
        %6758 = vmatpush1.bf16.msra.mxu0 %v5180
        %6759 = vmatprep.subr.bf16.mxu0 %v5189
        %6760 = vmatpush1.bf16.msra.mxu0 %v5188
        %6761 = vmatprep.subr.bf16.mxu0 %v5197
        %6762 = vmatpush1.bf16.msra.mxu0 %v5196
        %6763 = vmatprep.subr.bf16.mxu0 %v5205
        %6764 = vmatpush1.bf16.msra.mxu0 %v5204
        %6765 = vmatprep.subr.bf16.mxu0 %v5213
        %6766 = vmatpush1.bf16.msra.mxu0 %v5212
        %6767 = vmatprep.subr.bf16.mxu0 %v5221
        %6768 = vmatpush1.bf16.msra.mxu0 %v5220
        %6769 = vmatprep.subr.bf16.mxu0 %v5229
        %6770 = vmatpush1.bf16.msra.mxu0 %v5228
        %6771 = vmatprep.subr.bf16.mxu0 %v5237
        %6772 = vmatpush1.bf16.msra.mxu0 %v5236
        %6773 = vmatprep.subr.bf16.mxu0 %v5245
        %6774 = vmatpush1.bf16.msra.mxu0 %v5244
        %6775 = vmatprep.subr.bf16.mxu0 %v5253
        %6776 = vmatpush1.bf16.msra.mxu0 %v5252
        %6777 = vmatprep.mubr.bf16.mxu0 %v1386
        %6778 = vmatmul.mubr.bf16.gmra.mrb[0].mxu0 %v1384
        %v6779 = vpop.f32.mrb[0].mxu0
        %v6780 = vadd.f32 %v6739, %v6779
        %v6781 = vpop.f32.mrb[0].mxu0
        %v6782 = vadd.f32 %v6741, %v6781
        %v6783 = vpop.f32.mrb[0].mxu0
        %v6784 = vpop.f32.mrb[0].mxu0
        %6785 = vdwg.mxu0
        %6786 = vmatprep.subr.bf16.mxu0 %v5261
        %6787 = vmatpush1.bf16.msra.mxu0 %v5260
        %6788 = vmatprep.subr.bf16.mxu0 %v5269
        %6789 = vmatpush1.bf16.msra.mxu0 %v5268
        %6790 = vmatprep.subr.bf16.mxu0 %v5277
        %6791 = vmatpush1.bf16.msra.mxu0 %v5276
        %6792 = vmatprep.subr.bf16.mxu0 %v5285
        %6793 = vmatpush1.bf16.msra.mxu0 %v5284
        %6794 = vmatprep.subr.bf16.mxu0 %v5293
        %6795 = vmatpush1.bf16.msra.mxu0 %v5292
        %6796 = vmatprep.subr.bf16.mxu0 %v5301
        %6797 = vmatpush1.bf16.msra.mxu0 %v5300
        %6798 = vmatprep.subr.bf16.mxu0 %v5309
        %6799 = vmatpush1.bf16.msra.mxu0 %v5308
        %6800 = vmatprep.subr.bf16.mxu0 %v5317
        %6801 = vmatpush1.bf16.msra.mxu0 %v5316
        %6802 = vmatprep.subr.bf16.mxu0 %v5325
        %6803 = vmatpush1.bf16.msra.mxu0 %v5324
        %6804 = vmatprep.subr.bf16.mxu0 %v5333
        %6805 = vmatpush1.bf16.msra.mxu0 %v5332
        %6806 = vmatprep.subr.bf16.mxu0 %v5341
        %6807 = vmatpush1.bf16.msra.mxu0 %v5340
        %6808 = vmatprep.subr.bf16.mxu0 %v5349
        %6809 = vmatpush1.bf16.msra.mxu0 %v5348
        %6810 = vmatprep.subr.bf16.mxu0 %v5357
        %6811 = vmatpush1.bf16.msra.mxu0 %v5356
        %6812 = vmatprep.subr.bf16.mxu0 %v5365
        %6813 = vmatpush1.bf16.msra.mxu0 %v5364
        %6814 = vmatprep.subr.bf16.mxu0 %v5373
        %6815 = vmatpush1.bf16.msra.mxu0 %v5372
        %6816 = vmatprep.subr.bf16.mxu0 %v5381
        %6817 = vmatpush1.bf16.msra.mxu0 %v5380
        %6818 = vmatprep.mubr.bf16.mxu0 %v1402
        %6819 = vmatmul.mubr.bf16.gmra.mrb[0].mxu0 %v1394
        %v6820 = vpop.f32.mrb[0].mxu0
        %v6821 = vadd.f32 %v6780, %v6820
        %v6822 = vpop.f32.mrb[0].mxu0
        %v6823 = vadd.f32 %v6782, %v6822
        %v6824 = vpop.f32.mrb[0].mxu0
        %v6825 = vpop.f32.mrb[0].mxu0
        %6826 = vdwg.mxu0
        %6827 = vmatprep.subr.bf16.mxu0 %v5389
        %6828 = vmatpush1.bf16.msra.mxu0 %v5388
        %6829 = vmatprep.subr.bf16.mxu0 %v5397
        %6830 = vmatpush1.bf16.msra.mxu0 %v5396
        %6831 = vmatprep.subr.bf16.mxu0 %v5405
        %6832 = vmatpush1.bf16.msra.mxu0 %v5404
        %6833 = vmatprep.subr.bf16.mxu0 %v5413
        %6834 = vmatpush1.bf16.msra.mxu0 %v5412
        %6835 = vmatprep.subr.bf16.mxu0 %v5421
        %6836 = vmatpush1.bf16.msra.mxu0 %v5420
        %6837 = vmatprep.subr.bf16.mxu0 %v5429
        %6838 = vmatpush1.bf16.msra.mxu0 %v5428
        %6839 = vmatprep.subr.bf16.mxu0 %v5437
        %6840 = vmatpush1.bf16.msra.mxu0 %v5436
        %6841 = vmatprep.subr.bf16.mxu0 %v5445
        %6842 = vmatpush1.bf16.msra.mxu0 %v5444
        %6843 = vmatprep.subr.bf16.mxu0 %v5453
        %6844 = vmatpush1.bf16.msra.mxu0 %v5452
        %6845 = vmatprep.subr.bf16.mxu0 %v5461
        %6846 = vmatpush1.bf16.msra.mxu0 %v5460
        %6847 = vmatprep.subr.bf16.mxu0 %v5469
        %6848 = vmatpush1.bf16.msra.mxu0 %v5468
        %6849 = vmatprep.subr.bf16.mxu0 %v5477
        %6850 = vmatpush1.bf16.msra.mxu0 %v5476
        %6851 = vmatprep.subr.bf16.mxu0 %v5485
        %6852 = vmatpush1.bf16.msra.mxu0 %v5484
        %6853 = vmatprep.subr.bf16.mxu0 %v5493
        %6854 = vmatpush1.bf16.msra.mxu0 %v5492
        %6855 = vmatprep.subr.bf16.mxu0 %v5501
        %6856 = vmatpush1.bf16.msra.mxu0 %v5500
        %6857 = vmatprep.subr.bf16.mxu0 %v5509
        %6858 = vmatpush1.bf16.msra.mxu0 %v5508
        %6859 = vmatprep.mubr.bf16.mxu0 %v1403
        %6860 = vmatmul.mubr.bf16.gmra.mrb[0].mxu0 %v1401
        %v6861 = vpop.f32.mrb[0].mxu0
        %v6862 = vadd.f32 %v6821, %v6861
        %v6863 = vpop.f32.mrb[0].mxu0
        %v6864 = vadd.f32 %v6823, %v6863
        %v6865 = vpop.f32.mrb[0].mxu0
        %v6866 = vpop.f32.mrb[0].mxu0
        %6867 = vdwg.mxu0
        %6868 = vmatprep.subr.bf16.mxu0 %v4495
        %6869 = vmatpush1.bf16.msra.mxu0 %v4494
        %6870 = vmatprep.subr.bf16.mxu0 %v4503
        %6871 = vmatpush1.bf16.msra.mxu0 %v4502
        %6872 = vmatprep.subr.bf16.mxu0 %v4511
        %6873 = vmatpush1.bf16.msra.mxu0 %v4510
        %6874 = vmatprep.subr.bf16.mxu0 %v4519
        %6875 = vmatpush1.bf16.msra.mxu0 %v4518
        %6876 = vmatprep.subr.bf16.mxu0 %v4527
        %6877 = vmatpush1.bf16.msra.mxu0 %v4526
        %6878 = vmatprep.subr.bf16.mxu0 %v4535
        %6879 = vmatpush1.bf16.msra.mxu0 %v4534
        %6880 = vmatprep.subr.bf16.mxu0 %v4543
        %6881 = vmatpush1.bf16.msra.mxu0 %v4542
        %6882 = vmatprep.subr.bf16.mxu0 %v4551
        %6883 = vmatpush1.bf16.msra.mxu0 %v4550
        %6884 = vmatprep.subr.bf16.mxu0 %v4559
        %6885 = vmatpush1.bf16.msra.mxu0 %v4558
        %6886 = vmatprep.subr.bf16.mxu0 %v4567
        %6887 = vmatpush1.bf16.msra.mxu0 %v4566
        %6888 = vmatprep.subr.bf16.mxu0 %v4575
        %6889 = vmatpush1.bf16.msra.mxu0 %v4574
        %6890 = vmatprep.subr.bf16.mxu0 %v4583
        %6891 = vmatpush1.bf16.msra.mxu0 %v4582
        %6892 = vmatprep.subr.bf16.mxu0 %v4591
        %6893 = vmatpush1.bf16.msra.mxu0 %v4590
        %6894 = vmatprep.subr.bf16.mxu0 %v4599
        %6895 = vmatpush1.bf16.msra.mxu0 %v4598
        %6896 = vmatprep.subr.bf16.mxu0 %v4607
        %6897 = vmatpush1.bf16.msra.mxu0 %v4606
        %6898 = vmatprep.subr.bf16.mxu0 %v4615
        %6899 = vmatpush1.bf16.msra.mxu0 %v4614
        %6900 = vmatprep.mubr.bf16.mxu0 %v1351
        %6901 = vmatmul.mubr.bf16.gmra.mrb[0].mxu0 %v1343
        %v6902 = vpop.f32.mrb[0].mxu0
        %v6903 = vadd.f32 %v1303, %v6902
        %v6904 = vpop.f32.mrb[0].mxu0
        %v6905 = vadd.f32 %v1307, %v6904
        %v6906 = vpop.f32.mrb[0].mxu0
        %v6907 = vpop.f32.mrb[0].mxu0
        %6908 = vdwg.mxu0
        %6909 = vmatprep.subr.bf16.mxu0 %v4623
        %6910 = vmatpush1.bf16.msra.mxu0 %v4622
        %6911 = vmatprep.subr.bf16.mxu0 %v4631
        %6912 = vmatpush1.bf16.msra.mxu0 %v4630
        %6913 = vmatprep.subr.bf16.mxu0 %v4639
        %6914 = vmatpush1.bf16.msra.mxu0 %v4638
        %6915 = vmatprep.subr.bf16.mxu0 %v4647
        %6916 = vmatpush1.bf16.msra.mxu0 %v4646
        %6917 = vmatprep.subr.bf16.mxu0 %v4655
        %6918 = vmatpush1.bf16.msra.mxu0 %v4654
        %6919 = vmatprep.subr.bf16.mxu0 %v4663
        %6920 = vmatpush1.bf16.msra.mxu0 %v4662
        %6921 = vmatprep.subr.bf16.mxu0 %v4671
        %6922 = vmatpush1.bf16.msra.mxu0 %v4670
        %6923 = vmatprep.subr.bf16.mxu0 %v4679
        %6924 = vmatpush1.bf16.msra.mxu0 %v4678
        %6925 = vmatprep.subr.bf16.mxu0 %v4687
        %6926 = vmatpush1.bf16.msra.mxu0 %v4686
        %6927 = vmatprep.subr.bf16.mxu0 %v4695
        %6928 = vmatpush1.bf16.msra.mxu0 %v4694
        %6929 = vmatprep.subr.bf16.mxu0 %v4703
        %6930 = vmatpush1.bf16.msra.mxu0 %v4702
        %6931 = vmatprep.subr.bf16.mxu0 %v4711
        %6932 = vmatpush1.bf16.msra.mxu0 %v4710
        %6933 = vmatprep.subr.bf16.mxu0 %v4719
        %6934 = vmatpush1.bf16.msra.mxu0 %v4718
        %6935 = vmatprep.subr.bf16.mxu0 %v4727
        %6936 = vmatpush1.bf16.msra.mxu0 %v4726
        %6937 = vmatprep.subr.bf16.mxu0 %v4735
        %6938 = vmatpush1.bf16.msra.mxu0 %v4734
        %6939 = vmatprep.subr.bf16.mxu0 %v4743
        %6940 = vmatpush1.bf16.msra.mxu0 %v4742
        %6941 = vmatprep.mubr.bf16.mxu0 %v1352
        %6942 = vmatmul.mubr.bf16.gmra.mrb[0].mxu0 %v1350
        %v6943 = vpop.f32.mrb[0].mxu0
        %v6944 = vadd.f32 %v6903, %v6943
        %v6945 = vpop.f32.mrb[0].mxu0
        %v6946 = vadd.f32 %v6905, %v6945
        %v6947 = vpop.f32.mrb[0].mxu0
        %v6948 = vpop.f32.mrb[0].mxu0
        %6949 = vdwg.mxu0
        %6950 = vmatprep.subr.bf16.mxu0 %v4751
        %6951 = vmatpush1.bf16.msra.mxu0 %v4750
        %6952 = vmatprep.subr.bf16.mxu0 %v4759
        %6953 = vmatpush1.bf16.msra.mxu0 %v4758
        %6954 = vmatprep.subr.bf16.mxu0 %v4767
        %6955 = vmatpush1.bf16.msra.mxu0 %v4766
        %6956 = vmatprep.subr.bf16.mxu0 %v4775
        %6957 = vmatpush1.bf16.msra.mxu0 %v4774
        %6958 = vmatprep.subr.bf16.mxu0 %v4783
        %6959 = vmatpush1.bf16.msra.mxu0 %v4782
        %6960 = vmatprep.subr.bf16.mxu0 %v4791
        %6961 = vmatpush1.bf16.msra.mxu0 %v4790
        %6962 = vmatprep.subr.bf16.mxu0 %v4799
        %6963 = vmatpush1.bf16.msra.mxu0 %v4798
        %6964 = vmatprep.subr.bf16.mxu0 %v4807
        %6965 = vmatpush1.bf16.msra.mxu0 %v4806
        %6966 = vmatprep.subr.bf16.mxu0 %v4815
        %6967 = vmatpush1.bf16.msra.mxu0 %v4814
        %6968 = vmatprep.subr.bf16.mxu0 %v4823
        %6969 = vmatpush1.bf16.msra.mxu0 %v4822
        %6970 = vmatprep.subr.bf16.mxu0 %v4831
        %6971 = vmatpush1.bf16.msra.mxu0 %v4830
        %6972 = vmatprep.subr.bf16.mxu0 %v4839
        %6973 = vmatpush1.bf16.msra.mxu0 %v4838
        %6974 = vmatprep.subr.bf16.mxu0 %v4847
        %6975 = vmatpush1.bf16.msra.mxu0 %v4846
        %6976 = vmatprep.subr.bf16.mxu0 %v4855
        %6977 = vmatpush1.bf16.msra.mxu0 %v4854
        %6978 = vmatprep.subr.bf16.mxu0 %v4863
        %6979 = vmatpush1.bf16.msra.mxu0 %v4862
        %6980 = vmatprep.subr.bf16.mxu0 %v4871
        %6981 = vmatpush1.bf16.msra.mxu0 %v4870
        %6982 = vmatprep.mubr.bf16.mxu0 %v1368
        %6983 = vmatmul.mubr.bf16.gmra.mrb[0].mxu0 %v1360
        %v6984 = vpop.f32.mrb[0].mxu0
        %v6985 = vadd.f32 %v6944, %v6984
        %v6986 = vpop.f32.mrb[0].mxu0
        %v6987 = vadd.f32 %v6946, %v6986
        %v6988 = vpop.f32.mrb[0].mxu0
        %v6989 = vpop.f32.mrb[0].mxu0
        %6990 = vdwg.mxu0
        %6991 = vmatprep.subr.bf16.mxu0 %v4879
        %6992 = vmatpush1.bf16.msra.mxu0 %v4878
        %6993 = vmatprep.subr.bf16.mxu0 %v4887
        %6994 = vmatpush1.bf16.msra.mxu0 %v4886
        %6995 = vmatprep.subr.bf16.mxu0 %v4895
        %6996 = vmatpush1.bf16.msra.mxu0 %v4894
        %6997 = vmatprep.subr.bf16.mxu0 %v4903
        %6998 = vmatpush1.bf16.msra.mxu0 %v4902
        %6999 = vmatprep.subr.bf16.mxu0 %v4911
        %7000 = vmatpush1.bf16.msra.mxu0 %v4910
        %7001 = vmatprep.subr.bf16.mxu0 %v4919
        %7002 = vmatpush1.bf16.msra.mxu0 %v4918
        %7003 = vmatprep.subr.bf16.mxu0 %v4927
        %7004 = vmatpush1.bf16.msra.mxu0 %v4926
        %7005 = vmatprep.subr.bf16.mxu0 %v4935
        %7006 = vmatpush1.bf16.msra.mxu0 %v4934
        %7007 = vmatprep.subr.bf16.mxu0 %v4943
        %7008 = vmatpush1.bf16.msra.mxu0 %v4942
        %7009 = vmatprep.subr.bf16.mxu0 %v4951
        %7010 = vmatpush1.bf16.msra.mxu0 %v4950
        %7011 = vmatprep.subr.bf16.mxu0 %v4959
        %7012 = vmatpush1.bf16.msra.mxu0 %v4958
        %7013 = vmatprep.subr.bf16.mxu0 %v4967
        %7014 = vmatpush1.bf16.msra.mxu0 %v4966
        %7015 = vmatprep.subr.bf16.mxu0 %v4975
        %7016 = vmatpush1.bf16.msra.mxu0 %v4974
        %7017 = vmatprep.subr.bf16.mxu0 %v4983
        %7018 = vmatpush1.bf16.msra.mxu0 %v4982
        %7019 = vmatprep.subr.bf16.mxu0 %v4991
        %7020 = vmatpush1.bf16.msra.mxu0 %v4990
        %7021 = vmatprep.subr.bf16.mxu0 %v4999
        %7022 = vmatpush1.bf16.msra.mxu0 %v4998
        %7023 = vmatprep.mubr.bf16.mxu0 %v1369
        %7024 = vmatmul.mubr.bf16.gmra.mrb[0].mxu0 %v1367
        %v7025 = vpop.f32.mrb[0].mxu0
        %v7026 = vadd.f32 %v6985, %v7025
        %v7027 = vpop.f32.mrb[0].mxu0
        %v7028 = vadd.f32 %v6987, %v7027
        %v7029 = vpop.f32.mrb[0].mxu0
        %v7030 = vpop.f32.mrb[0].mxu0
        %7031 = vdwg.mxu0
        %7032 = vmatprep.subr.bf16.mxu0 %v5007
        %7033 = vmatpush1.bf16.msra.mxu0 %v5006
        %7034 = vmatprep.subr.bf16.mxu0 %v5015
        %7035 = vmatpush1.bf16.msra.mxu0 %v5014
        %7036 = vmatprep.subr.bf16.mxu0 %v5023
        %7037 = vmatpush1.bf16.msra.mxu0 %v5022
        %7038 = vmatprep.subr.bf16.mxu0 %v5031
        %7039 = vmatpush1.bf16.msra.mxu0 %v5030
        %7040 = vmatprep.subr.bf16.mxu0 %v5039
        %7041 = vmatpush1.bf16.msra.mxu0 %v5038
        %7042 = vmatprep.subr.bf16.mxu0 %v5047
        %7043 = vmatpush1.bf16.msra.mxu0 %v5046
        %7044 = vmatprep.subr.bf16.mxu0 %v5055
        %7045 = vmatpush1.bf16.msra.mxu0 %v5054
        %7046 = vmatprep.subr.bf16.mxu0 %v5063
        %7047 = vmatpush1.bf16.msra.mxu0 %v5062
        %7048 = vmatprep.subr.bf16.mxu0 %v5071
        %7049 = vmatpush1.bf16.msra.mxu0 %v5070
        %7050 = vmatprep.subr.bf16.mxu0 %v5079
        %7051 = vmatpush1.bf16.msra.mxu0 %v5078
        %7052 = vmatprep.subr.bf16.mxu0 %v5087
        %7053 = vmatpush1.bf16.msra.mxu0 %v5086
        %7054 = vmatprep.subr.bf16.mxu0 %v5095
        %7055 = vmatpush1.bf16.msra.mxu0 %v5094
        %7056 = vmatprep.subr.bf16.mxu0 %v5103
        %7057 = vmatpush1.bf16.msra.mxu0 %v5102
        %7058 = vmatprep.subr.bf16.mxu0 %v5111
        %7059 = vmatpush1.bf16.msra.mxu0 %v5110
        %7060 = vmatprep.subr.bf16.mxu0 %v5119
        %7061 = vmatpush1.bf16.msra.mxu0 %v5118
        %7062 = vmatprep.subr.bf16.mxu0 %v5127
        %7063 = vmatpush1.bf16.msra.mxu0 %v5126
        %7064 = vmatprep.mubr.bf16.mxu0 %v1385
        %7065 = vmatmul.mubr.bf16.gmra.mrb[0].mxu0 %v1377
        %v7066 = vpop.f32.mrb[0].mxu0
        %v7067 = vadd.f32 %v7026, %v7066
        %v7068 = vpop.f32.mrb[0].mxu0
        %v7069 = vadd.f32 %v7028, %v7068
        %v7070 = vpop.f32.mrb[0].mxu0
        %v7071 = vpop.f32.mrb[0].mxu0
        %7072 = vdwg.mxu0
        %7073 = vmatprep.subr.bf16.mxu0 %v5135
        %7074 = vmatpush1.bf16.msra.mxu0 %v5134
        %7075 = vmatprep.subr.bf16.mxu0 %v5143
        %7076 = vmatpush1.bf16.msra.mxu0 %v5142
        %7077 = vmatprep.subr.bf16.mxu0 %v5151
        %7078 = vmatpush1.bf16.msra.mxu0 %v5150
        %7079 = vmatprep.subr.bf16.mxu0 %v5159
        %7080 = vmatpush1.bf16.msra.mxu0 %v5158
        %7081 = vmatprep.subr.bf16.mxu0 %v5167
        %7082 = vmatpush1.bf16.msra.mxu0 %v5166
        %7083 = vmatprep.subr.bf16.mxu0 %v5175
        %7084 = vmatpush1.bf16.msra.mxu0 %v5174
        %7085 = vmatprep.subr.bf16.mxu0 %v5183
        %7086 = vmatpush1.bf16.msra.mxu0 %v5182
        %7087 = vmatprep.subr.bf16.mxu0 %v5191
        %7088 = vmatpush1.bf16.msra.mxu0 %v5190
        %7089 = vmatprep.subr.bf16.mxu0 %v5199
        %7090 = vmatpush1.bf16.msra.mxu0 %v5198
        %7091 = vmatprep.subr.bf16.mxu0 %v5207
        %7092 = vmatpush1.bf16.msra.mxu0 %v5206
        %7093 = vmatprep.subr.bf16.mxu0 %v5215
        %7094 = vmatpush1.bf16.msra.mxu0 %v5214
        %7095 = vmatprep.subr.bf16.mxu0 %v5223
        %7096 = vmatpush1.bf16.msra.mxu0 %v5222
        %7097 = vmatprep.subr.bf16.mxu0 %v5231
        %7098 = vmatpush1.bf16.msra.mxu0 %v5230
        %7099 = vmatprep.subr.bf16.mxu0 %v5239
        %7100 = vmatpush1.bf16.msra.mxu0 %v5238
        %7101 = vmatprep.subr.bf16.mxu0 %v5247
        %7102 = vmatpush1.bf16.msra.mxu0 %v5246
        %7103 = vmatprep.subr.bf16.mxu0 %v5255
        %7104 = vmatpush1.bf16.msra.mxu0 %v5254
        %7105 = vmatprep.mubr.bf16.mxu0 %v1386
        %7106 = vmatmul.mubr.bf16.gmra.mrb[0].mxu0 %v1384
        %v7107 = vpop.f32.mrb[0].mxu0
        %v7108 = vadd.f32 %v7067, %v7107
        %v7109 = vpop.f32.mrb[0].mxu0
        %v7110 = vadd.f32 %v7069, %v7109
        %v7111 = vpop.f32.mrb[0].mxu0
        %v7112 = vpop.f32.mrb[0].mxu0
        %7113 = vdwg.mxu0
        %7114 = vmatprep.subr.bf16.mxu0 %v5263
        %7115 = vmatpush1.bf16.msra.mxu0 %v5262
        %7116 = vmatprep.subr.bf16.mxu0 %v5271
        %7117 = vmatpush1.bf16.msra.mxu0 %v5270
        %7118 = vmatprep.subr.bf16.mxu0 %v5279
        %7119 = vmatpush1.bf16.msra.mxu0 %v5278
        %7120 = vmatprep.subr.bf16.mxu0 %v5287
        %7121 = vmatpush1.bf16.msra.mxu0 %v5286
        %7122 = vmatprep.subr.bf16.mxu0 %v5295
        %7123 = vmatpush1.bf16.msra.mxu0 %v5294
        %7124 = vmatprep.subr.bf16.mxu0 %v5303
        %7125 = vmatpush1.bf16.msra.mxu0 %v5302
        %7126 = vmatprep.subr.bf16.mxu0 %v5311
        %7127 = vmatpush1.bf16.msra.mxu0 %v5310
        %7128 = vmatprep.subr.bf16.mxu0 %v5319
        %7129 = vmatpush1.bf16.msra.mxu0 %v5318
        %7130 = vmatprep.subr.bf16.mxu0 %v5327
        %7131 = vmatpush1.bf16.msra.mxu0 %v5326
        %7132 = vmatprep.subr.bf16.mxu0 %v5335
        %7133 = vmatpush1.bf16.msra.mxu0 %v5334
        %7134 = vmatprep.subr.bf16.mxu0 %v5343
        %7135 = vmatpush1.bf16.msra.mxu0 %v5342
        %7136 = vmatprep.subr.bf16.mxu0 %v5351
        %7137 = vmatpush1.bf16.msra.mxu0 %v5350
        %7138 = vmatprep.subr.bf16.mxu0 %v5359
        %7139 = vmatpush1.bf16.msra.mxu0 %v5358
        %7140 = vmatprep.subr.bf16.mxu0 %v5367
        %7141 = vmatpush1.bf16.msra.mxu0 %v5366
        %7142 = vmatprep.subr.bf16.mxu0 %v5375
        %7143 = vmatpush1.bf16.msra.mxu0 %v5374
        %7144 = vmatprep.subr.bf16.mxu0 %v5383
        %7145 = vmatpush1.bf16.msra.mxu0 %v5382
        %7146 = vmatprep.mubr.bf16.mxu0 %v1402
        %7147 = vmatmul.mubr.bf16.gmra.mrb[0].mxu0 %v1394
        %v7148 = vpop.f32.mrb[0].mxu0
        %v7149 = vadd.f32 %v7108, %v7148
        %v7150 = vpop.f32.mrb[0].mxu0
        %v7151 = vadd.f32 %v7110, %v7150
        %v7152 = vpop.f32.mrb[0].mxu0
        %v7153 = vpop.f32.mrb[0].mxu0
        %7154 = vdwg.mxu0
        %7155 = vmatprep.subr.bf16.mxu0 %v5391
        %7156 = vmatpush1.bf16.msra.mxu0 %v5390
        %7157 = vmatprep.subr.bf16.mxu0 %v5399
        %7158 = vmatpush1.bf16.msra.mxu0 %v5398
        %7159 = vmatprep.subr.bf16.mxu0 %v5407
        %7160 = vmatpush1.bf16.msra.mxu0 %v5406
        %7161 = vmatprep.subr.bf16.mxu0 %v5415
        %7162 = vmatpush1.bf16.msra.mxu0 %v5414
        %7163 = vmatprep.subr.bf16.mxu0 %v5423
        %7164 = vmatpush1.bf16.msra.mxu0 %v5422
        %7165 = vmatprep.subr.bf16.mxu0 %v5431
        %7166 = vmatpush1.bf16.msra.mxu0 %v5430
        %7167 = vmatprep.subr.bf16.mxu0 %v5439
        %7168 = vmatpush1.bf16.msra.mxu0 %v5438
        %7169 = vmatprep.subr.bf16.mxu0 %v5447
        %7170 = vmatpush1.bf16.msra.mxu0 %v5446
        %7171 = vmatprep.subr.bf16.mxu0 %v5455
        %7172 = vmatpush1.bf16.msra.mxu0 %v5454
        %7173 = vmatprep.subr.bf16.mxu0 %v5463
        %7174 = vmatpush1.bf16.msra.mxu0 %v5462
        %7175 = vmatprep.subr.bf16.mxu0 %v5471
        %7176 = vmatpush1.bf16.msra.mxu0 %v5470
        %7177 = vmatprep.subr.bf16.mxu0 %v5479
        %7178 = vmatpush1.bf16.msra.mxu0 %v5478
        %7179 = vmatprep.subr.bf16.mxu0 %v5487
        %7180 = vmatpush1.bf16.msra.mxu0 %v5486
        %7181 = vmatprep.subr.bf16.mxu0 %v5495
        %7182 = vmatpush1.bf16.msra.mxu0 %v5494
        %7183 = vmatprep.subr.bf16.mxu0 %v5503
        %7184 = vmatpush1.bf16.msra.mxu0 %v5502
        %7185 = vmatprep.subr.bf16.mxu0 %v5511
        %7186 = vmatpush1.bf16.msra.mxu0 %v5510
        %7187 = vmatprep.mubr.bf16.mxu0 %v1403
        %7188 = vmatmul.mubr.bf16.gmra.mrb[0].mxu0 %v1401
        %v7189 = vpop.f32.mrb[0].mxu0
        %v7190 = vadd.f32 %v7149, %v7189
        %v7191 = vpop.f32.mrb[0].mxu0
        %v7192 = vadd.f32 %v7151, %v7191
        %v7193 = vpop.f32.mrb[0].mxu0
        %v7194 = vpop.f32.mrb[0].mxu0
        %7195 = vdwg.mxu0
        %7196 = vmatprep.subr.bf16.mxu0 %v4497
        %7197 = vmatpush1.bf16.msra.mxu0 %v4496
        %7198 = vmatprep.subr.bf16.mxu0 %v4505
        %7199 = vmatpush1.bf16.msra.mxu0 %v4504
        %7200 = vmatprep.subr.bf16.mxu0 %v4513
        %7201 = vmatpush1.bf16.msra.mxu0 %v4512
        %7202 = vmatprep.subr.bf16.mxu0 %v4521
        %7203 = vmatpush1.bf16.msra.mxu0 %v4520
        %7204 = vmatprep.subr.bf16.mxu0 %v4529
        %7205 = vmatpush1.bf16.msra.mxu0 %v4528
        %7206 = vmatprep.subr.bf16.mxu0 %v4537
        %7207 = vmatpush1.bf16.msra.mxu0 %v4536
        %7208 = vmatprep.subr.bf16.mxu0 %v4545
        %7209 = vmatpush1.bf16.msra.mxu0 %v4544
        %7210 = vmatprep.subr.bf16.mxu0 %v4553
        %7211 = vmatpush1.bf16.msra.mxu0 %v4552
        %7212 = vmatprep.subr.bf16.mxu0 %v4561
        %7213 = vmatpush1.bf16.msra.mxu0 %v4560
        %7214 = vmatprep.subr.bf16.mxu0 %v4569
        %7215 = vmatpush1.bf16.msra.mxu0 %v4568
        %7216 = vmatprep.subr.bf16.mxu0 %v4577
        %7217 = vmatpush1.bf16.msra.mxu0 %v4576
        %7218 = vmatprep.subr.bf16.mxu0 %v4585
        %7219 = vmatpush1.bf16.msra.mxu0 %v4584
        %7220 = vmatprep.subr.bf16.mxu0 %v4593
        %7221 = vmatpush1.bf16.msra.mxu0 %v4592
        %7222 = vmatprep.subr.bf16.mxu0 %v4601
        %7223 = vmatpush1.bf16.msra.mxu0 %v4600
        %7224 = vmatprep.subr.bf16.mxu0 %v4609
        %7225 = vmatpush1.bf16.msra.mxu0 %v4608
        %7226 = vmatprep.subr.bf16.mxu0 %v4617
        %7227 = vmatpush1.bf16.msra.mxu0 %v4616
        %7228 = vmatprep.mubr.bf16.mxu0 %v1351
        %7229 = vmatmul.mubr.bf16.gmra.mrb[0].mxu0 %v1343
        %v7230 = vpop.f32.mrb[0].mxu0
        %v7231 = vadd.f32 %v1311, %v7230
        %v7232 = vpop.f32.mrb[0].mxu0
        %v7233 = vadd.f32 %v1315, %v7232
        %v7234 = vpop.f32.mrb[0].mxu0
        %v7235 = vpop.f32.mrb[0].mxu0
        %7236 = vdwg.mxu0
        %7237 = vmatprep.subr.bf16.mxu0 %v4625
        %7238 = vmatpush1.bf16.msra.mxu0 %v4624
        %7239 = vmatprep.subr.bf16.mxu0 %v4633
        %7240 = vmatpush1.bf16.msra.mxu0 %v4632
        %7241 = vmatprep.subr.bf16.mxu0 %v4641
        %7242 = vmatpush1.bf16.msra.mxu0 %v4640
        %7243 = vmatprep.subr.bf16.mxu0 %v4649
        %7244 = vmatpush1.bf16.msra.mxu0 %v4648
        %7245 = vmatprep.subr.bf16.mxu0 %v4657
        %7246 = vmatpush1.bf16.msra.mxu0 %v4656
        %7247 = vmatprep.subr.bf16.mxu0 %v4665
        %7248 = vmatpush1.bf16.msra.mxu0 %v4664
        %7249 = vmatprep.subr.bf16.mxu0 %v4673
        %7250 = vmatpush1.bf16.msra.mxu0 %v4672
        %7251 = vmatprep.subr.bf16.mxu0 %v4681
        %7252 = vmatpush1.bf16.msra.mxu0 %v4680
        %7253 = vmatprep.subr.bf16.mxu0 %v4689
        %7254 = vmatpush1.bf16.msra.mxu0 %v4688
        %7255 = vmatprep.subr.bf16.mxu0 %v4697
        %7256 = vmatpush1.bf16.msra.mxu0 %v4696
        %7257 = vmatprep.subr.bf16.mxu0 %v4705
        %7258 = vmatpush1.bf16.msra.mxu0 %v4704
        %7259 = vmatprep.subr.bf16.mxu0 %v4713
        %7260 = vmatpush1.bf16.msra.mxu0 %v4712
        %7261 = vmatprep.subr.bf16.mxu0 %v4721
        %7262 = vmatpush1.bf16.msra.mxu0 %v4720
        %7263 = vmatprep.subr.bf16.mxu0 %v4729
        %7264 = vmatpush1.bf16.msra.mxu0 %v4728
        %7265 = vmatprep.subr.bf16.mxu0 %v4737
        %7266 = vmatpush1.bf16.msra.mxu0 %v4736
        %7267 = vmatprep.subr.bf16.mxu0 %v4745
        %7268 = vmatpush1.bf16.msra.mxu0 %v4744
        %7269 = vmatprep.mubr.bf16.mxu0 %v1352
        %7270 = vmatmul.mubr.bf16.gmra.mrb[0].mxu0 %v1350
        %v7271 = vpop.f32.mrb[0].mxu0
        %v7272 = vadd.f32 %v7231, %v7271
        %v7273 = vpop.f32.mrb[0].mxu0
        %v7274 = vadd.f32 %v7233, %v7273
        %v7275 = vpop.f32.mrb[0].mxu0
        %v7276 = vpop.f32.mrb[0].mxu0
        %7277 = vdwg.mxu0
        %7278 = vmatprep.subr.bf16.mxu0 %v4753
        %7279 = vmatpush1.bf16.msra.mxu0 %v4752
        %7280 = vmatprep.subr.bf16.mxu0 %v4761
        %7281 = vmatpush1.bf16.msra.mxu0 %v4760
        %7282 = vmatprep.subr.bf16.mxu0 %v4769
        %7283 = vmatpush1.bf16.msra.mxu0 %v4768
        %7284 = vmatprep.subr.bf16.mxu0 %v4777
        %7285 = vmatpush1.bf16.msra.mxu0 %v4776
        %7286 = vmatprep.subr.bf16.mxu0 %v4785
        %7287 = vmatpush1.bf16.msra.mxu0 %v4784
        %7288 = vmatprep.subr.bf16.mxu0 %v4793
        %7289 = vmatpush1.bf16.msra.mxu0 %v4792
        %7290 = vmatprep.subr.bf16.mxu0 %v4801
        %7291 = vmatpush1.bf16.msra.mxu0 %v4800
        %7292 = vmatprep.subr.bf16.mxu0 %v4809
        %7293 = vmatpush1.bf16.msra.mxu0 %v4808
        %7294 = vmatprep.subr.bf16.mxu0 %v4817
        %7295 = vmatpush1.bf16.msra.mxu0 %v4816
        %7296 = vmatprep.subr.bf16.mxu0 %v4825
        %7297 = vmatpush1.bf16.msra.mxu0 %v4824
        %7298 = vmatprep.subr.bf16.mxu0 %v4833
        %7299 = vmatpush1.bf16.msra.mxu0 %v4832
        %7300 = vmatprep.subr.bf16.mxu0 %v4841
        %7301 = vmatpush1.bf16.msra.mxu0 %v4840
        %7302 = vmatprep.subr.bf16.mxu0 %v4849
        %7303 = vmatpush1.bf16.msra.mxu0 %v4848
        %7304 = vmatprep.subr.bf16.mxu0 %v4857
        %7305 = vmatpush1.bf16.msra.mxu0 %v4856
        %7306 = vmatprep.subr.bf16.mxu0 %v4865
        %7307 = vmatpush1.bf16.msra.mxu0 %v4864
        %7308 = vmatprep.subr.bf16.mxu0 %v4873
        %7309 = vmatpush1.bf16.msra.mxu0 %v4872
        %7310 = vmatprep.mubr.bf16.mxu0 %v1368
        %7311 = vmatmul.mubr.bf16.gmra.mrb[0].mxu0 %v1360
        %v7312 = vpop.f32.mrb[0].mxu0
        %v7313 = vadd.f32 %v7272, %v7312
        %v7314 = vpop.f32.mrb[0].mxu0
        %v7315 = vadd.f32 %v7274, %v7314
        %v7316 = vpop.f32.mrb[0].mxu0
        %v7317 = vpop.f32.mrb[0].mxu0
        %7318 = vdwg.mxu0
        %7319 = vmatprep.subr.bf16.mxu0 %v4881
        %7320 = vmatpush1.bf16.msra.mxu0 %v4880
        %7321 = vmatprep.subr.bf16.mxu0 %v4889
        %7322 = vmatpush1.bf16.msra.mxu0 %v4888
        %7323 = vmatprep.subr.bf16.mxu0 %v4897
        %7324 = vmatpush1.bf16.msra.mxu0 %v4896
        %7325 = vmatprep.subr.bf16.mxu0 %v4905
        %7326 = vmatpush1.bf16.msra.mxu0 %v4904
        %7327 = vmatprep.subr.bf16.mxu0 %v4913
        %7328 = vmatpush1.bf16.msra.mxu0 %v4912
        %7329 = vmatprep.subr.bf16.mxu0 %v4921
        %7330 = vmatpush1.bf16.msra.mxu0 %v4920
        %7331 = vmatprep.subr.bf16.mxu0 %v4929
        %7332 = vmatpush1.bf16.msra.mxu0 %v4928
        %7333 = vmatprep.subr.bf16.mxu0 %v4937
        %7334 = vmatpush1.bf16.msra.mxu0 %v4936
        %7335 = vmatprep.subr.bf16.mxu0 %v4945
        %7336 = vmatpush1.bf16.msra.mxu0 %v4944
        %7337 = vmatprep.subr.bf16.mxu0 %v4953
        %7338 = vmatpush1.bf16.msra.mxu0 %v4952
        %7339 = vmatprep.subr.bf16.mxu0 %v4961
        %7340 = vmatpush1.bf16.msra.mxu0 %v4960
        %7341 = vmatprep.subr.bf16.mxu0 %v4969
        %7342 = vmatpush1.bf16.msra.mxu0 %v4968
        %7343 = vmatprep.subr.bf16.mxu0 %v4977
        %7344 = vmatpush1.bf16.msra.mxu0 %v4976
        %7345 = vmatprep.subr.bf16.mxu0 %v4985
        %7346 = vmatpush1.bf16.msra.mxu0 %v4984
        %7347 = vmatprep.subr.bf16.mxu0 %v4993
        %7348 = vmatpush1.bf16.msra.mxu0 %v4992
        %7349 = vmatprep.subr.bf16.mxu0 %v5001
        %7350 = vmatpush1.bf16.msra.mxu0 %v5000
        %7351 = vmatprep.mubr.bf16.mxu0 %v1369
        %7352 = vmatmul.mubr.bf16.gmra.mrb[0].mxu0 %v1367
        %v7353 = vpop.f32.mrb[0].mxu0
        %v7354 = vadd.f32 %v7313, %v7353
        %v7355 = vpop.f32.mrb[0].mxu0
        %v7356 = vadd.f32 %v7315, %v7355
        %v7357 = vpop.f32.mrb[0].mxu0
        %v7358 = vpop.f32.mrb[0].mxu0
        %7359 = vdwg.mxu0
        %7360 = vmatprep.subr.bf16.mxu0 %v5009
        %7361 = vmatpush1.bf16.msra.mxu0 %v5008
        %7362 = vmatprep.subr.bf16.mxu0 %v5017
        %7363 = vmatpush1.bf16.msra.mxu0 %v5016
        %7364 = vmatprep.subr.bf16.mxu0 %v5025
        %7365 = vmatpush1.bf16.msra.mxu0 %v5024
        %7366 = vmatprep.subr.bf16.mxu0 %v5033
        %7367 = vmatpush1.bf16.msra.mxu0 %v5032
        %7368 = vmatprep.subr.bf16.mxu0 %v5041
        %7369 = vmatpush1.bf16.msra.mxu0 %v5040
        %7370 = vmatprep.subr.bf16.mxu0 %v5049
        %7371 = vmatpush1.bf16.msra.mxu0 %v5048
        %7372 = vmatprep.subr.bf16.mxu0 %v5057
        %7373 = vmatpush1.bf16.msra.mxu0 %v5056
        %7374 = vmatprep.subr.bf16.mxu0 %v5065
        %7375 = vmatpush1.bf16.msra.mxu0 %v5064
        %7376 = vmatprep.subr.bf16.mxu0 %v5073
        %7377 = vmatpush1.bf16.msra.mxu0 %v5072
        %7378 = vmatprep.subr.bf16.mxu0 %v5081
        %7379 = vmatpush1.bf16.msra.mxu0 %v5080
        %7380 = vmatprep.subr.bf16.mxu0 %v5089
        %7381 = vmatpush1.bf16.msra.mxu0 %v5088
        %7382 = vmatprep.subr.bf16.mxu0 %v5097
        %7383 = vmatpush1.bf16.msra.mxu0 %v5096
        %7384 = vmatprep.subr.bf16.mxu0 %v5105
        %7385 = vmatpush1.bf16.msra.mxu0 %v5104
        %7386 = vmatprep.subr.bf16.mxu0 %v5113
        %7387 = vmatpush1.bf16.msra.mxu0 %v5112
        %7388 = vmatprep.subr.bf16.mxu0 %v5121
        %7389 = vmatpush1.bf16.msra.mxu0 %v5120
        %7390 = vmatprep.subr.bf16.mxu0 %v5129
        %7391 = vmatpush1.bf16.msra.mxu0 %v5128
        %7392 = vmatprep.mubr.bf16.mxu0 %v1385
        %7393 = vmatmul.mubr.bf16.gmra.mrb[0].mxu0 %v1377
        %v7394 = vpop.f32.mrb[0].mxu0
        %v7395 = vadd.f32 %v7354, %v7394
        %v7396 = vpop.f32.mrb[0].mxu0
        %v7397 = vadd.f32 %v7356, %v7396
        %v7398 = vpop.f32.mrb[0].mxu0
        %v7399 = vpop.f32.mrb[0].mxu0
        %7400 = vdwg.mxu0
        %7401 = vmatprep.subr.bf16.mxu0 %v5137
        %7402 = vmatpush1.bf16.msra.mxu0 %v5136
        %7403 = vmatprep.subr.bf16.mxu0 %v5145
        %7404 = vmatpush1.bf16.msra.mxu0 %v5144
        %7405 = vmatprep.subr.bf16.mxu0 %v5153
        %7406 = vmatpush1.bf16.msra.mxu0 %v5152
        %7407 = vmatprep.subr.bf16.mxu0 %v5161
        %7408 = vmatpush1.bf16.msra.mxu0 %v5160
        %7409 = vmatprep.subr.bf16.mxu0 %v5169
        %7410 = vmatpush1.bf16.msra.mxu0 %v5168
        %7411 = vmatprep.subr.bf16.mxu0 %v5177
        %7412 = vmatpush1.bf16.msra.mxu0 %v5176
        %7413 = vmatprep.subr.bf16.mxu0 %v5185
        %7414 = vmatpush1.bf16.msra.mxu0 %v5184
        %7415 = vmatprep.subr.bf16.mxu0 %v5193
        %7416 = vmatpush1.bf16.msra.mxu0 %v5192
        %7417 = vmatprep.subr.bf16.mxu0 %v5201
        %7418 = vmatpush1.bf16.msra.mxu0 %v5200
        %7419 = vmatprep.subr.bf16.mxu0 %v5209
        %7420 = vmatpush1.bf16.msra.mxu0 %v5208
        %7421 = vmatprep.subr.bf16.mxu0 %v5217
        %7422 = vmatpush1.bf16.msra.mxu0 %v5216
        %7423 = vmatprep.subr.bf16.mxu0 %v5225
        %7424 = vmatpush1.bf16.msra.mxu0 %v5224
        %7425 = vmatprep.subr.bf16.mxu0 %v5233
        %7426 = vmatpush1.bf16.msra.mxu0 %v5232
        %7427 = vmatprep.subr.bf16.mxu0 %v5241
        %7428 = vmatpush1.bf16.msra.mxu0 %v5240
        %7429 = vmatprep.subr.bf16.mxu0 %v5249
        %7430 = vmatpush1.bf16.msra.mxu0 %v5248
        %7431 = vmatprep.subr.bf16.mxu0 %v5257
        %7432 = vmatpush1.bf16.msra.mxu0 %v5256
        %7433 = vmatprep.mubr.bf16.mxu0 %v1386
        %7434 = vmatmul.mubr.bf16.gmra.mrb[0].mxu0 %v1384
        %v7435 = vpop.f32.mrb[0].mxu0
        %v7436 = vadd.f32 %v7395, %v7435
        %v7437 = vpop.f32.mrb[0].mxu0
        %v7438 = vadd.f32 %v7397, %v7437
        %v7439 = vpop.f32.mrb[0].mxu0
        %v7440 = vpop.f32.mrb[0].mxu0
        %7441 = vdwg.mxu0
        %7442 = vmatprep.subr.bf16.mxu0 %v5265
        %7443 = vmatpush1.bf16.msra.mxu0 %v5264
        %7444 = vmatprep.subr.bf16.mxu0 %v5273
        %7445 = vmatpush1.bf16.msra.mxu0 %v5272
        %7446 = vmatprep.subr.bf16.mxu0 %v5281
        %7447 = vmatpush1.bf16.msra.mxu0 %v5280
        %7448 = vmatprep.subr.bf16.mxu0 %v5289
        %7449 = vmatpush1.bf16.msra.mxu0 %v5288
        %7450 = vmatprep.subr.bf16.mxu0 %v5297
        %7451 = vmatpush1.bf16.msra.mxu0 %v5296
        %7452 = vmatprep.subr.bf16.mxu0 %v5305
        %7453 = vmatpush1.bf16.msra.mxu0 %v5304
        %7454 = vmatprep.subr.bf16.mxu0 %v5313
        %7455 = vmatpush1.bf16.msra.mxu0 %v5312
        %7456 = vmatprep.subr.bf16.mxu0 %v5321
        %7457 = vmatpush1.bf16.msra.mxu0 %v5320
        %7458 = vmatprep.subr.bf16.mxu0 %v5329
        %7459 = vmatpush1.bf16.msra.mxu0 %v5328
        %7460 = vmatprep.subr.bf16.mxu0 %v5337
        %7461 = vmatpush1.bf16.msra.mxu0 %v5336
        %7462 = vmatprep.subr.bf16.mxu0 %v5345
        %7463 = vmatpush1.bf16.msra.mxu0 %v5344
        %7464 = vmatprep.subr.bf16.mxu0 %v5353
        %7465 = vmatpush1.bf16.msra.mxu0 %v5352
        %7466 = vmatprep.subr.bf16.mxu0 %v5361
        %7467 = vmatpush1.bf16.msra.mxu0 %v5360
        %7468 = vmatprep.subr.bf16.mxu0 %v5369
        %7469 = vmatpush1.bf16.msra.mxu0 %v5368
        %7470 = vmatprep.subr.bf16.mxu0 %v5377
        %7471 = vmatpush1.bf16.msra.mxu0 %v5376
        %7472 = vmatprep.subr.bf16.mxu0 %v5385
        %7473 = vmatpush1.bf16.msra.mxu0 %v5384
        %7474 = vmatprep.mubr.bf16.mxu0 %v1402
        %7475 = vmatmul.mubr.bf16.gmra.mrb[0].mxu0 %v1394
        %v7476 = vpop.f32.mrb[0].mxu0
        %v7477 = vadd.f32 %v7436, %v7476
        %v7478 = vpop.f32.mrb[0].mxu0
        %v7479 = vadd.f32 %v7438, %v7478
        %v7480 = vpop.f32.mrb[0].mxu0
        %v7481 = vpop.f32.mrb[0].mxu0
        %7482 = vdwg.mxu0
        %7483 = vmatprep.subr.bf16.mxu0 %v5393
        %7484 = vmatpush1.bf16.msra.mxu0 %v5392
        %7485 = vmatprep.subr.bf16.mxu0 %v5401
        %7486 = vmatpush1.bf16.msra.mxu0 %v5400
        %7487 = vmatprep.subr.bf16.mxu0 %v5409
        %7488 = vmatpush1.bf16.msra.mxu0 %v5408
        %7489 = vmatprep.subr.bf16.mxu0 %v5417
        %7490 = vmatpush1.bf16.msra.mxu0 %v5416
        %7491 = vmatprep.subr.bf16.mxu0 %v5425
        %7492 = vmatpush1.bf16.msra.mxu0 %v5424
        %7493 = vmatprep.subr.bf16.mxu0 %v5433
        %7494 = vmatpush1.bf16.msra.mxu0 %v5432
        %7495 = vmatprep.subr.bf16.mxu0 %v5441
        %7496 = vmatpush1.bf16.msra.mxu0 %v5440
        %7497 = vmatprep.subr.bf16.mxu0 %v5449
        %7498 = vmatpush1.bf16.msra.mxu0 %v5448
        %7499 = vmatprep.subr.bf16.mxu0 %v5457
        %7500 = vmatpush1.bf16.msra.mxu0 %v5456
        %7501 = vmatprep.subr.bf16.mxu0 %v5465
        %7502 = vmatpush1.bf16.msra.mxu0 %v5464
        %7503 = vmatprep.subr.bf16.mxu0 %v5473
        %7504 = vmatpush1.bf16.msra.mxu0 %v5472
        %7505 = vmatprep.subr.bf16.mxu0 %v5481
        %7506 = vmatpush1.bf16.msra.mxu0 %v5480
        %7507 = vmatprep.subr.bf16.mxu0 %v5489
        %7508 = vmatpush1.bf16.msra.mxu0 %v5488
        %7509 = vmatprep.subr.bf16.mxu0 %v5497
        %7510 = vmatpush1.bf16.msra.mxu0 %v5496
        %7511 = vmatprep.subr.bf16.mxu0 %v5505
        %7512 = vmatpush1.bf16.msra.mxu0 %v5504
        %7513 = vmatprep.subr.bf16.mxu0 %v5513
        %7514 = vmatpush1.bf16.msra.mxu0 %v5512
        %7515 = vmatprep.mubr.bf16.mxu0 %v1403
        %7516 = vmatmul.mubr.bf16.gmra.mrb[0].mxu0 %v1401
        %v7517 = vpop.f32.mrb[0].mxu0
        %v7518 = vadd.f32 %v7477, %v7517
        %v7519 = vpop.f32.mrb[0].mxu0
        %v7520 = vadd.f32 %v7479, %v7519
        %v7521 = vpop.f32.mrb[0].mxu0
        %v7522 = vpop.f32.mrb[0].mxu0
        %7523 = vdwg.mxu0
        %7524 = vmatprep.subr.bf16.mxu0 %v4499
        %7525 = vmatpush1.bf16.msra.mxu0 %v4498
        %7526 = vmatprep.subr.bf16.mxu0 %v4507
        %7527 = vmatpush1.bf16.msra.mxu0 %v4506
        %7528 = vmatprep.subr.bf16.mxu0 %v4515
        %7529 = vmatpush1.bf16.msra.mxu0 %v4514
        %7530 = vmatprep.subr.bf16.mxu0 %v4523
        %7531 = vmatpush1.bf16.msra.mxu0 %v4522
        %7532 = vmatprep.subr.bf16.mxu0 %v4531
        %7533 = vmatpush1.bf16.msra.mxu0 %v4530
        %7534 = vmatprep.subr.bf16.mxu0 %v4539
        %7535 = vmatpush1.bf16.msra.mxu0 %v4538
        %7536 = vmatprep.subr.bf16.mxu0 %v4547
        %7537 = vmatpush1.bf16.msra.mxu0 %v4546
        %7538 = vmatprep.subr.bf16.mxu0 %v4555
        %7539 = vmatpush1.bf16.msra.mxu0 %v4554
        %7540 = vmatprep.subr.bf16.mxu0 %v4563
        %7541 = vmatpush1.bf16.msra.mxu0 %v4562
        %7542 = vmatprep.subr.bf16.mxu0 %v4571
        %7543 = vmatpush1.bf16.msra.mxu0 %v4570
        %7544 = vmatprep.subr.bf16.mxu0 %v4579
        %7545 = vmatpush1.bf16.msra.mxu0 %v4578
        %7546 = vmatprep.subr.bf16.mxu0 %v4587
        %7547 = vmatpush1.bf16.msra.mxu0 %v4586
        %7548 = vmatprep.subr.bf16.mxu0 %v4595
        %7549 = vmatpush1.bf16.msra.mxu0 %v4594
        %7550 = vmatprep.subr.bf16.mxu0 %v4603
        %7551 = vmatpush1.bf16.msra.mxu0 %v4602
        %7552 = vmatprep.subr.bf16.mxu0 %v4611
        %7553 = vmatpush1.bf16.msra.mxu0 %v4610
        %7554 = vmatprep.subr.bf16.mxu0 %v4619
        %7555 = vmatpush1.bf16.msra.mxu0 %v4618
        %7556 = vmatprep.mubr.bf16.mxu0 %v1351
        %7557 = vmatmul.mubr.bf16.gmra.mrb[0].mxu0 %v1343
        %v7558 = vpop.f32.mrb[0].mxu0
        %v7559 = vadd.f32 %v1319, %v7558
        %v7560 = vpop.f32.mrb[0].mxu0
        %v7561 = vadd.f32 %v1323, %v7560
        %v7562 = vpop.f32.mrb[0].mxu0
        %v7563 = vpop.f32.mrb[0].mxu0
        %7564 = vdwg.mxu0
        %7565 = vmatprep.subr.bf16.mxu0 %v4627
        %7566 = vmatpush1.bf16.msra.mxu0 %v4626
        %7567 = vmatprep.subr.bf16.mxu0 %v4635
        %7568 = vmatpush1.bf16.msra.mxu0 %v4634
        %7569 = vmatprep.subr.bf16.mxu0 %v4643
        %7570 = vmatpush1.bf16.msra.mxu0 %v4642
        %7571 = vmatprep.subr.bf16.mxu0 %v4651
        %7572 = vmatpush1.bf16.msra.mxu0 %v4650
        %7573 = vmatprep.subr.bf16.mxu0 %v4659
        %7574 = vmatpush1.bf16.msra.mxu0 %v4658
        %7575 = vmatprep.subr.bf16.mxu0 %v4667
        %7576 = vmatpush1.bf16.msra.mxu0 %v4666
        %7577 = vmatprep.subr.bf16.mxu0 %v4675
        %7578 = vmatpush1.bf16.msra.mxu0 %v4674
        %7579 = vmatprep.subr.bf16.mxu0 %v4683
        %7580 = vmatpush1.bf16.msra.mxu0 %v4682
        %7581 = vmatprep.subr.bf16.mxu0 %v4691
        %7582 = vmatpush1.bf16.msra.mxu0 %v4690
        %7583 = vmatprep.subr.bf16.mxu0 %v4699
        %7584 = vmatpush1.bf16.msra.mxu0 %v4698
        %7585 = vmatprep.subr.bf16.mxu0 %v4707
        %7586 = vmatpush1.bf16.msra.mxu0 %v4706
        %7587 = vmatprep.subr.bf16.mxu0 %v4715
        %7588 = vmatpush1.bf16.msra.mxu0 %v4714
        %7589 = vmatprep.subr.bf16.mxu0 %v4723
        %7590 = vmatpush1.bf16.msra.mxu0 %v4722
        %7591 = vmatprep.subr.bf16.mxu0 %v4731
        %7592 = vmatpush1.bf16.msra.mxu0 %v4730
        %7593 = vmatprep.subr.bf16.mxu0 %v4739
        %7594 = vmatpush1.bf16.msra.mxu0 %v4738
        %7595 = vmatprep.subr.bf16.mxu0 %v4747
        %7596 = vmatpush1.bf16.msra.mxu0 %v4746
        %7597 = vmatprep.mubr.bf16.mxu0 %v1352
        %7598 = vmatmul.mubr.bf16.gmra.mrb[0].mxu0 %v1350
        %v7599 = vpop.f32.mrb[0].mxu0
        %v7600 = vadd.f32 %v7559, %v7599
        %v7601 = vpop.f32.mrb[0].mxu0
        %v7602 = vadd.f32 %v7561, %v7601
        %v7603 = vpop.f32.mrb[0].mxu0
        %v7604 = vpop.f32.mrb[0].mxu0
        %7605 = vdwg.mxu0
        %7606 = vmatprep.subr.bf16.mxu0 %v4755
        %7607 = vmatpush1.bf16.msra.mxu0 %v4754
        %7608 = vmatprep.subr.bf16.mxu0 %v4763
        %7609 = vmatpush1.bf16.msra.mxu0 %v4762
        %7610 = vmatprep.subr.bf16.mxu0 %v4771
        %7611 = vmatpush1.bf16.msra.mxu0 %v4770
        %7612 = vmatprep.subr.bf16.mxu0 %v4779
        %7613 = vmatpush1.bf16.msra.mxu0 %v4778
        %7614 = vmatprep.subr.bf16.mxu0 %v4787
        %7615 = vmatpush1.bf16.msra.mxu0 %v4786
        %7616 = vmatprep.subr.bf16.mxu0 %v4795
        %7617 = vmatpush1.bf16.msra.mxu0 %v4794
        %7618 = vmatprep.subr.bf16.mxu0 %v4803
        %7619 = vmatpush1.bf16.msra.mxu0 %v4802
        %7620 = vmatprep.subr.bf16.mxu0 %v4811
        %7621 = vmatpush1.bf16.msra.mxu0 %v4810
        %7622 = vmatprep.subr.bf16.mxu0 %v4819
        %7623 = vmatpush1.bf16.msra.mxu0 %v4818
        %7624 = vmatprep.subr.bf16.mxu0 %v4827
        %7625 = vmatpush1.bf16.msra.mxu0 %v4826
        %7626 = vmatprep.subr.bf16.mxu0 %v4835
        %7627 = vmatpush1.bf16.msra.mxu0 %v4834
        %7628 = vmatprep.subr.bf16.mxu0 %v4843
        %7629 = vmatpush1.bf16.msra.mxu0 %v4842
        %7630 = vmatprep.subr.bf16.mxu0 %v4851
        %7631 = vmatpush1.bf16.msra.mxu0 %v4850
        %7632 = vmatprep.subr.bf16.mxu0 %v4859
        %7633 = vmatpush1.bf16.msra.mxu0 %v4858
        %7634 = vmatprep.subr.bf16.mxu0 %v4867
        %7635 = vmatpush1.bf16.msra.mxu0 %v4866
        %7636 = vmatprep.subr.bf16.mxu0 %v4875
        %7637 = vmatpush1.bf16.msra.mxu0 %v4874
        %7638 = vmatprep.mubr.bf16.mxu0 %v1368
        %7639 = vmatmul.mubr.bf16.gmra.mrb[0].mxu0 %v1360
        %v7640 = vpop.f32.mrb[0].mxu0
        %v7641 = vadd.f32 %v7600, %v7640
        %v7642 = vpop.f32.mrb[0].mxu0
        %v7643 = vadd.f32 %v7602, %v7642
        %v7644 = vpop.f32.mrb[0].mxu0
        %v7645 = vpop.f32.mrb[0].mxu0
        %7646 = vdwg.mxu0
        %7647 = vmatprep.subr.bf16.mxu0 %v4883
        %7648 = vmatpush1.bf16.msra.mxu0 %v4882
        %7649 = vmatprep.subr.bf16.mxu0 %v4891
        %7650 = vmatpush1.bf16.msra.mxu0 %v4890
        %7651 = vmatprep.subr.bf16.mxu0 %v4899
        %7652 = vmatpush1.bf16.msra.mxu0 %v4898
        %7653 = vmatprep.subr.bf16.mxu0 %v4907
        %7654 = vmatpush1.bf16.msra.mxu0 %v4906
        %7655 = vmatprep.subr.bf16.mxu0 %v4915
        %7656 = vmatpush1.bf16.msra.mxu0 %v4914
        %7657 = vmatprep.subr.bf16.mxu0 %v4923
        %7658 = vmatpush1.bf16.msra.mxu0 %v4922
        %7659 = vmatprep.subr.bf16.mxu0 %v4931
        %7660 = vmatpush1.bf16.msra.mxu0 %v4930
        %7661 = vmatprep.subr.bf16.mxu0 %v4939
        %7662 = vmatpush1.bf16.msra.mxu0 %v4938
        %7663 = vmatprep.subr.bf16.mxu0 %v4947
        %7664 = vmatpush1.bf16.msra.mxu0 %v4946
        %7665 = vmatprep.subr.bf16.mxu0 %v4955
        %7666 = vmatpush1.bf16.msra.mxu0 %v4954
        %7667 = vmatprep.subr.bf16.mxu0 %v4963
        %7668 = vmatpush1.bf16.msra.mxu0 %v4962
        %7669 = vmatprep.subr.bf16.mxu0 %v4971
        %7670 = vmatpush1.bf16.msra.mxu0 %v4970
        %7671 = vmatprep.subr.bf16.mxu0 %v4979
        %7672 = vmatpush1.bf16.msra.mxu0 %v4978
        %7673 = vmatprep.subr.bf16.mxu0 %v4987
        %7674 = vmatpush1.bf16.msra.mxu0 %v4986
        %7675 = vmatprep.subr.bf16.mxu0 %v4995
        %7676 = vmatpush1.bf16.msra.mxu0 %v4994
        %7677 = vmatprep.subr.bf16.mxu0 %v5003
        %7678 = vmatpush1.bf16.msra.mxu0 %v5002
        %7679 = vmatprep.mubr.bf16.mxu0 %v1369
        %7680 = vmatmul.mubr.bf16.gmra.mrb[0].mxu0 %v1367
        %v7681 = vpop.f32.mrb[0].mxu0
        %v7682 = vadd.f32 %v7641, %v7681
        %v7683 = vpop.f32.mrb[0].mxu0
        %v7684 = vadd.f32 %v7643, %v7683
        %v7685 = vpop.f32.mrb[0].mxu0
        %v7686 = vpop.f32.mrb[0].mxu0
        %7687 = vdwg.mxu0
        %7688 = vmatprep.subr.bf16.mxu0 %v5011
        %7689 = vmatpush1.bf16.msra.mxu0 %v5010
        %7690 = vmatprep.subr.bf16.mxu0 %v5019
        %7691 = vmatpush1.bf16.msra.mxu0 %v5018
        %7692 = vmatprep.subr.bf16.mxu0 %v5027
        %7693 = vmatpush1.bf16.msra.mxu0 %v5026
        %7694 = vmatprep.subr.bf16.mxu0 %v5035
        %7695 = vmatpush1.bf16.msra.mxu0 %v5034
        %7696 = vmatprep.subr.bf16.mxu0 %v5043
        %7697 = vmatpush1.bf16.msra.mxu0 %v5042
        %7698 = vmatprep.subr.bf16.mxu0 %v5051
        %7699 = vmatpush1.bf16.msra.mxu0 %v5050
        %7700 = vmatprep.subr.bf16.mxu0 %v5059
        %7701 = vmatpush1.bf16.msra.mxu0 %v5058
        %7702 = vmatprep.subr.bf16.mxu0 %v5067
        %7703 = vmatpush1.bf16.msra.mxu0 %v5066
        %7704 = vmatprep.subr.bf16.mxu0 %v5075
        %7705 = vmatpush1.bf16.msra.mxu0 %v5074
        %7706 = vmatprep.subr.bf16.mxu0 %v5083
        %7707 = vmatpush1.bf16.msra.mxu0 %v5082
        %7708 = vmatprep.subr.bf16.mxu0 %v5091
        %7709 = vmatpush1.bf16.msra.mxu0 %v5090
        %7710 = vmatprep.subr.bf16.mxu0 %v5099
        %7711 = vmatpush1.bf16.msra.mxu0 %v5098
        %7712 = vmatprep.subr.bf16.mxu0 %v5107
        %7713 = vmatpush1.bf16.msra.mxu0 %v5106
        %7714 = vmatprep.subr.bf16.mxu0 %v5115
        %7715 = vmatpush1.bf16.msra.mxu0 %v5114
        %7716 = vmatprep.subr.bf16.mxu0 %v5123
        %7717 = vmatpush1.bf16.msra.mxu0 %v5122
        %7718 = vmatprep.subr.bf16.mxu0 %v5131
        %7719 = vmatpush1.bf16.msra.mxu0 %v5130
        %7720 = vmatprep.mubr.bf16.mxu0 %v1385
        %7721 = vmatmul.mubr.bf16.gmra.mrb[0].mxu0 %v1377
        %v7722 = vpop.f32.mrb[0].mxu0
        %v7723 = vadd.f32 %v7682, %v7722
        %v7724 = vpop.f32.mrb[0].mxu0
        %v7725 = vadd.f32 %v7684, %v7724
        %v7726 = vpop.f32.mrb[0].mxu0
        %v7727 = vpop.f32.mrb[0].mxu0
        %7728 = vdwg.mxu0
        %7729 = vmatprep.subr.bf16.mxu0 %v5139
        %7730 = vmatpush1.bf16.msra.mxu0 %v5138
        %7731 = vmatprep.subr.bf16.mxu0 %v5147
        %7732 = vmatpush1.bf16.msra.mxu0 %v5146
        %7733 = vmatprep.subr.bf16.mxu0 %v5155
        %7734 = vmatpush1.bf16.msra.mxu0 %v5154
        %7735 = vmatprep.subr.bf16.mxu0 %v5163
        %7736 = vmatpush1.bf16.msra.mxu0 %v5162
        %7737 = vmatprep.subr.bf16.mxu0 %v5171
        %7738 = vmatpush1.bf16.msra.mxu0 %v5170
        %7739 = vmatprep.subr.bf16.mxu0 %v5179
        %7740 = vmatpush1.bf16.msra.mxu0 %v5178
        %7741 = vmatprep.subr.bf16.mxu0 %v5187
        %7742 = vmatpush1.bf16.msra.mxu0 %v5186
        %7743 = vmatprep.subr.bf16.mxu0 %v5195
        %7744 = vmatpush1.bf16.msra.mxu0 %v5194
        %7745 = vmatprep.subr.bf16.mxu0 %v5203
        %7746 = vmatpush1.bf16.msra.mxu0 %v5202
        %7747 = vmatprep.subr.bf16.mxu0 %v5211
        %7748 = vmatpush1.bf16.msra.mxu0 %v5210
        %7749 = vmatprep.subr.bf16.mxu0 %v5219
        %7750 = vmatpush1.bf16.msra.mxu0 %v5218
        %7751 = vmatprep.subr.bf16.mxu0 %v5227
        %7752 = vmatpush1.bf16.msra.mxu0 %v5226
        %7753 = vmatprep.subr.bf16.mxu0 %v5235
        %7754 = vmatpush1.bf16.msra.mxu0 %v5234
        %7755 = vmatprep.subr.bf16.mxu0 %v5243
        %7756 = vmatpush1.bf16.msra.mxu0 %v5242
        %7757 = vmatprep.subr.bf16.mxu0 %v5251
        %7758 = vmatpush1.bf16.msra.mxu0 %v5250
        %7759 = vmatprep.subr.bf16.mxu0 %v5259
        %7760 = vmatpush1.bf16.msra.mxu0 %v5258
        %7761 = vmatprep.mubr.bf16.mxu0 %v1386
        %7762 = vmatmul.mubr.bf16.gmra.mrb[0].mxu0 %v1384
        %v7763 = vpop.f32.mrb[0].mxu0
        %v7764 = vadd.f32 %v7723, %v7763
        %v7765 = vpop.f32.mrb[0].mxu0
        %v7766 = vadd.f32 %v7725, %v7765
        %v7767 = vpop.f32.mrb[0].mxu0
        %v7768 = vpop.f32.mrb[0].mxu0
        %7769 = vdwg.mxu0
        %7770 = vmatprep.subr.bf16.mxu0 %v5267
        %7771 = vmatpush1.bf16.msra.mxu0 %v5266
        %7772 = vmatprep.subr.bf16.mxu0 %v5275
        %7773 = vmatpush1.bf16.msra.mxu0 %v5274
        %7774 = vmatprep.subr.bf16.mxu0 %v5283
        %7775 = vmatpush1.bf16.msra.mxu0 %v5282
        %7776 = vmatprep.subr.bf16.mxu0 %v5291
        %7777 = vmatpush1.bf16.msra.mxu0 %v5290
        %7778 = vmatprep.subr.bf16.mxu0 %v5299
        %7779 = vmatpush1.bf16.msra.mxu0 %v5298
        %7780 = vmatprep.subr.bf16.mxu0 %v5307
        %7781 = vmatpush1.bf16.msra.mxu0 %v5306
        %7782 = vmatprep.subr.bf16.mxu0 %v5315
        %7783 = vmatpush1.bf16.msra.mxu0 %v5314
        %7784 = vmatprep.subr.bf16.mxu0 %v5323
        %7785 = vmatpush1.bf16.msra.mxu0 %v5322
        %7786 = vmatprep.subr.bf16.mxu0 %v5331
        %7787 = vmatpush1.bf16.msra.mxu0 %v5330
        %7788 = vmatprep.subr.bf16.mxu0 %v5339
        %7789 = vmatpush1.bf16.msra.mxu0 %v5338
        %7790 = vmatprep.subr.bf16.mxu0 %v5347
        %7791 = vmatpush1.bf16.msra.mxu0 %v5346
        %7792 = vmatprep.subr.bf16.mxu0 %v5355
        %7793 = vmatpush1.bf16.msra.mxu0 %v5354
        %7794 = vmatprep.subr.bf16.mxu0 %v5363
        %7795 = vmatpush1.bf16.msra.mxu0 %v5362
        %7796 = vmatprep.subr.bf16.mxu0 %v5371
        %7797 = vmatpush1.bf16.msra.mxu0 %v5370
        %7798 = vmatprep.subr.bf16.mxu0 %v5379
        %7799 = vmatpush1.bf16.msra.mxu0 %v5378
        %7800 = vmatprep.subr.bf16.mxu0 %v5387
        %7801 = vmatpush1.bf16.msra.mxu0 %v5386
        %7802 = vmatprep.mubr.bf16.mxu0 %v1402
        %7803 = vmatmul.mubr.bf16.gmra.mrb[0].mxu0 %v1394
        %v7804 = vpop.f32.mrb[0].mxu0
        %v7805 = vadd.f32 %v7764, %v7804
        %v7806 = vpop.f32.mrb[0].mxu0
        %v7807 = vadd.f32 %v7766, %v7806
        %v7808 = vpop.f32.mrb[0].mxu0
        %v7809 = vpop.f32.mrb[0].mxu0
        %7810 = vdwg.mxu0
        %7811 = vmatprep.subr.bf16.mxu0 %v5395
        %7812 = vmatpush1.bf16.msra.mxu0 %v5394
        %7813 = vmatprep.subr.bf16.mxu0 %v5403
        %7814 = vmatpush1.bf16.msra.mxu0 %v5402
        %7815 = vmatprep.subr.bf16.mxu0 %v5411
        %7816 = vmatpush1.bf16.msra.mxu0 %v5410
        %7817 = vmatprep.subr.bf16.mxu0 %v5419
        %7818 = vmatpush1.bf16.msra.mxu0 %v5418
        %7819 = vmatprep.subr.bf16.mxu0 %v5427
        %7820 = vmatpush1.bf16.msra.mxu0 %v5426
        %7821 = vmatprep.subr.bf16.mxu0 %v5435
        %7822 = vmatpush1.bf16.msra.mxu0 %v5434
        %7823 = vmatprep.subr.bf16.mxu0 %v5443
        %7824 = vmatpush1.bf16.msra.mxu0 %v5442
        %7825 = vmatprep.subr.bf16.mxu0 %v5451
        %7826 = vmatpush1.bf16.msra.mxu0 %v5450
        %7827 = vmatprep.subr.bf16.mxu0 %v5459
        %7828 = vmatpush1.bf16.msra.mxu0 %v5458
        %7829 = vmatprep.subr.bf16.mxu0 %v5467
        %7830 = vmatpush1.bf16.msra.mxu0 %v5466
        %7831 = vmatprep.subr.bf16.mxu0 %v5475
        %7832 = vmatpush1.bf16.msra.mxu0 %v5474
        %7833 = vmatprep.subr.bf16.mxu0 %v5483
        %7834 = vmatpush1.bf16.msra.mxu0 %v5482
        %7835 = vmatprep.subr.bf16.mxu0 %v5491
        %7836 = vmatpush1.bf16.msra.mxu0 %v5490
        %7837 = vmatprep.subr.bf16.mxu0 %v5499
        %7838 = vmatpush1.bf16.msra.mxu0 %v5498
        %7839 = vmatprep.subr.bf16.mxu0 %v5507
        %7840 = vmatpush1.bf16.msra.mxu0 %v5506
        %7841 = vmatprep.subr.bf16.mxu0 %v5515
        %7842 = vmatpush1.bf16.msra.mxu0 %v5514
        %7843 = vmatprep.mubr.bf16.mxu0 %v1403
        %7844 = vmatmul.mubr.bf16.gmra.mrb[0].mxu0 %v1401
        %v7845 = vpop.f32.mrb[0].mxu0
        %v7846 = vadd.f32 %v7805, %v7845
        %v7847 = vpop.f32.mrb[0].mxu0
        %v7848 = vadd.f32 %v7807, %v7847
        %v7849 = vpop.f32.mrb[0].mxu0
        %v7850 = vpop.f32.mrb[0].mxu0
        %7851 = vdwg.mxu0
        %v7860 = vcombine.low %v6862, %v6864
        %v7861 = vcombine.low %v7190, %v7192
        %v7862 = vcombine.low %v7518, %v7520
        %v7863 = vcombine.low %v7846, %v7848
        %7868 = vst [vmem:[%s258] sm:$0xff] %v7860
        %7869 = vst [vmem:[%s258 + $0x8] sm:$0xff] %v7861
        %7870 = vst [vmem:[%s258 + $0x10] sm:$0xff] %v7862
        %7871 = vst [vmem:[%s258 + $0x18] sm:$0xff] %v7863
        %s7872 = sand.u32 %s121, 1
        %s7873 = scalar_lea.sflag [#allocation4], %s7872
        %s7874 = sand.u32 %s121, 1
        %s7875 = smul.addr %s7874, 32
        %s7876 = scalar_lea.vmem [#allocation8], %s7875
        // Predicated region
        $region45: #{tpu_custom_call.1} parent=31 // pred_check
          %p7877 = pneg %p131
        $region46: #{tpu_custom_call.1} parent=31 // pred_check_branch
          %7879 = sbr.rel (%p7877) target = $region48
        $region47: #{tpu_custom_call.1} parent=31 // pred_region
          %s7880 = smul.u32 8, %s25
          %s7882 = ssub.s32 512, 512
          %7883 = vsyncadd %s7873, %s7882
          %s7884 = smul.addr %s26, 32
          %s7885 = sadd.s32 %s7880, %s7884
          %s7886 = smul.addr %s7885, 64
          %s7887 = scalar_lea.hbm %s3, %s7886
          %s7889 = sshll.u32 %s7876, 4
          %s7890 = int_to_ptr.vmem [resolvable:$true] %s7889
          %7892 = dma.vmem_to_hbm [thread:$0]  %s7890, 512, %s7887, %s7873
        $region48: #{tpu_custom_call.1} parent=31 // pred_fallthru
          _
      $region32: #{tpu_custom_call.1} parent=5 // pred_fallthru
        _
      %p7893 = scmp.le.s32.totalorder 2, %s16
      // Predicated region
      $region49: #{tpu_custom_call.1} parent=5 // pred_check
        %p7894 = pneg %p7893
      $region50: #{tpu_custom_call.1} parent=5 // pred_check_branch
        %7896 = sbr.rel (%p7894) target = $region52
      $region51: #{tpu_custom_call.1} parent=5 // pred_region
        %s7897 = ssub.s32 %s16, 2
        // Predicated region
        $region53: #{tpu_custom_call.1} parent=51 // pred_check
          %p7898 = pneg %p137
        $region54: #{tpu_custom_call.1} parent=51 // pred_check_branch
          %7900 = sbr.rel (%p7898) target = $region56
        $region55: #{tpu_custom_call.1} parent=51 // pred_region
          %s7901 = sand.u32 %s122, 1
          %s7902 = scalar_lea.sflag [#allocation4], %s7901
          %s7903 = sand.u32 %s122, 1
          %s7904 = smul.addr %s7903, 32
          %s7905 = scalar_lea.vmem [#allocation8], %s7904
          %7906 = dma.done %s7902, 512
        $region56: #{tpu_custom_call.1} parent=51 // pred_fallthru
          _
      $region52: #{tpu_custom_call.1} parent=5 // pred_fallthru
        _
    $region6: #{tpu_custom_call.1} parent=1 // loop_footer
      %s20 = sadd.s32 1, %s16
    $region7: #{tpu_custom_call.1} parent=1 // loop_footer_branch
      %15 = sbr.rel target = $region3
    $region8: #{tpu_custom_call.1} parent=1 // loop_exit
      _
    %7907 = vsyncpa [#allocation3], 1
    %s7908 = scalar_lea.sflag [#allocation3], 1
    %7909 = vsyncpa %s7908, 1
    %7910 = vsyncpa [#allocation6], 1
    %s7911 = scalar_lea.sflag [#allocation6], 1
    %7912 = vsyncpa %s7911, 1
    %7913 = vsyncpa [#allocation4], 1
    %s7914 = scalar_lea.sflag [#allocation4], 1
    %7915 = vsyncpa %s7914, 1

</llo_original>
